<compile_context>
chip_gen: v6e
topology: v6e:2x2x1
jax: 0.10.0
libtpu: 0.0.40
codegen_flags: <defaults>
</compile_context>

<pallas_src>
import functools
import math

import jax
import jax.numpy as jnp
from jax.experimental import pallas as pl
from jax.experimental.pallas import tpu as pltpu

NEG_SLOPE = 0.05
_F32 = jnp.float32


def _lrelu(x):
    return jnp.where(x >= 0, x, NEG_SLOPE * x)


# ------------------------------ fused kernel ---------------------------------
def _rfdb3_kernel(x_ref, masks_ref,
                  s1_wa_ref, s1_ba_ref, s1_w2_ref, s1_b2_ref,
                  s2_wa_ref, s2_ba_ref, s2_wdw_ref, s2_bdw_ref,
                  s3_wa_ref, s3_ba_ref, s3_w2_ref, s3_b2_ref,
                  s4_wpw_ref, s4_wdw_ref, s4_bdw_ref,
                  w5_ref, b5_ref, w1t_ref, b1c_ref, w2c_ref, b2c_ref,
                  o_ref, cat_ref,
                  *, H, W, C, dc, red, groups, gc):
    HW = H * W
    masks = masks_ref[...]                      # (9, HW) per-tap validity masks
    tmask = masks[1:2, :]                       # row != 0
    lmask = masks[3:4, :]                       # col != 0
    rmask = masks[5:6, :]                       # col != W-1
    bmask = masks[7:8, :]                       # row != H-1

    def shift(v, off):
        # read v at flat offset +off; wrap-around garbage is cancelled by the
        # boundary masks (folded into wm / applied per column sum below).
        return pltpu.roll(v, (-off) % HW, axis=1)

    def inv_stage(inp, wa_ref, ba_ref, w2_ref, b2_ref, d_slot):
        """involution(3x3) + residual + lrelu; distill 1x1 fused (stacked LHS)."""
        stacked = (jnp.dot(wa_ref[...], inp, preferred_element_type=_F32)
                   + ba_ref[...])                                   # (dc+red, HW)
        cat_ref[d_slot * dc:(d_slot + 1) * dc, :] = _lrelu(stacked[:dc, :])
        hid = jnp.maximum(stacked[dc:dc + red, :], 0.0)             # conv1+BN+ReLU
        wmap = (jnp.dot(w2_ref[...], hid, preferred_element_type=_F32)
                + b2_ref[...])                                      # (9*g, HW)
        # fold image-boundary masks into the positional weight map: (groups, HW)
        # work per tap instead of (C, HW) on the shifted data.
        wm = wmap.reshape(groups, 9, HW) * masks.reshape(1, 9, HW)
        acc = inp.reshape(groups, gc, HW) * wm[:, 4:5, :]           # center tap
        for di in range(3):
            for dj in range(3):
                k = di * 3 + dj
                if k == 4:
                    continue
                sh = shift(inp, (di - 1) * W + (dj - 1))
                acc = acc + sh.reshape(groups, gc, HW) * wm[:, k:k + 1, :]
        return _lrelu(acc.reshape(C, HW) + inp)                     # residual

    def dw3x3(fea, wdw_ref, bdw_ref):
        """depthwise 3x3: 3 row bands (XLU rolls) + per-column-shift partial
        sums; masks applied once per band / per column sum (2+2 total)."""
        wdw = wdw_ref[...]                                          # (Cout, 9)
        bands = (shift(fea, -W) * tmask,                            # row above
                 fea,
                 shift(fea, W) * bmask)                             # row below
        cols = []
        for dj in range(3):
            c = None
            for di in range(3):
                term = bands[di] * wdw[:, di * 3 + dj:di * 3 + dj + 1]
                c = term if c is None else c + term
            cols.append(c)
        out = (cols[1]
               + shift(cols[0], -1) * lmask
               + shift(cols[2], 1) * rmask)
        return out + bdw_ref[...]

    # ---------------- stage 1: c1_d + c1_r (involution) on x -----------------
    x = x_ref[...]
    r1 = inv_stage(x, s1_wa_ref, s1_ba_ref, s1_w2_ref, s1_b2_ref, d_slot=0)

    # ---------------- stage 2: c2_d + c2_r (BSConvS) on r1 -------------------
    st2 = jnp.dot(s2_wa_ref[...], r1, preferred_element_type=_F32) + s2_ba_ref[...]
    cat_ref[dc:2 * dc, :] = _lrelu(st2[:dc, :])
    fea2 = st2[dc:dc + C, :]                                        # folded pw2@pw1
    r2 = _lrelu(dw3x3(fea2, s2_wdw_ref, s2_bdw_ref) + r1)

    # ---------------- stage 3: c3_d + c3_r (involution) on r2 ----------------
    r3 = inv_stage(r2, s3_wa_ref, s3_ba_ref, s3_w2_ref, s3_b2_ref, d_slot=2)

    # ---------------- stage 4: c4 (BSConvS, no residual) on r3 ---------------
    fea4 = jnp.dot(s4_wpw_ref[...], r3, preferred_element_type=_F32)
    cat_ref[3 * dc:4 * dc, :] = _lrelu(dw3x3(fea4, s4_wdw_ref, s4_bdw_ref))

    # -------- stage 5: c5 (one dot over the stacked distills) + CCA ----------
    t = (jnp.dot(w5_ref[...], cat_ref[...], preferred_element_type=_F32)
         + b5_ref[...])                                             # (C, HW)
    inv_hw = 1.0 / HW
    mean = jnp.sum(t, axis=1, keepdims=True) * inv_hw               # (C, 1)
    ctr = t - mean
    var = jnp.sum(ctr * ctr, axis=1, keepdims=True) * inv_hw        # two-pass var
    y = jnp.sqrt(var) + mean                                        # contrast + avg
    h = jnp.maximum(jnp.sum(w1t_ref[...] * y, axis=0, keepdims=True)
                    + b1c_ref[...], 0.0)                            # (1, cr)
    z = jnp.sum(w2c_ref[...] * h, axis=1, keepdims=True) + b2c_ref[...]  # (C, 1)
    gate = 1.0 / (1.0 + jnp.exp(-z))
    o_ref[...] = (t * gate).astype(o_ref.dtype)


# ------------------------------- parameters ----------------------------------
def init_params(key, C):
    assert C % 16 == 0 and C >= 16, "involution / CCA require channels % 16 == 0"
    dc = C // 2
    groups = C // 16
    red = C // 4                       # involution reduction_ratio = 4
    cr = max(1, C // 16)               # CCA: channel = dc*2 = C, reduction = 16
    it = iter(jax.random.split(key, 64))

    def nrm(shape, scale=0.25):
        return scale * jax.random.normal(next(it), shape, dtype=_F32)

    p = {}

    def inv_block(prefix):
        wd, bd = nrm((dc, C)), nrm((dc, 1))            # c{1,3}_d 1x1 (+bias)
        w1 = nrm((red, C))                             # ConvModule conv1 (no bias)
        gamma = 1.0 + nrm((red,), 0.1)
        beta = nrm((red,), 0.1)
        rmean = nrm((red,), 0.1)
        rvar = 1.0 + jnp.abs(nrm((red,), 0.1))
        scale = gamma / jnp.sqrt(rvar + 1e-5)          # eval-mode BN folded in
        p[prefix + "_wa"] = jnp.concatenate([wd, scale[:, None] * w1], axis=0)
        p[prefix + "_ba"] = jnp.concatenate(
            [bd, (beta - scale * rmean)[:, None]], axis=0)
        p[prefix + "_w2"] = nrm((9 * groups, red))     # conv2 (+bias)
        p[prefix + "_b2"] = nrm((9 * groups, 1))

    def bsconv_block(cin, cout):
        mid = min(cin, max(4, math.ceil(0.25 * cin)))
        pw = nrm((cout, mid)) @ nrm((mid, cin))        # bias-free pw2 @ pw1 folded
        return pw, nrm((cout, 9)), nrm((cout, 1))      # dw 3x3 weight (+bias)

    inv_block("s1")                                    # c1_d + c1_r
    wpw2, p["s2_wdw"], p["s2_bdw"] = bsconv_block(C, C)
    p["s2_wa"] = jnp.concatenate([nrm((dc, C)), wpw2], axis=0)      # c2_d stacked
    p["s2_ba"] = jnp.concatenate([nrm((dc, 1)), jnp.zeros((C, 1), _F32)], axis=0)
    inv_block("s3")                                    # c3_d + c3_r
    p["s4_wpw"], p["s4_wdw"], p["s4_bdw"] = bsconv_block(C, dc)     # c4

    p["c5_w"] = nrm((C, 4 * dc))
    p["c5_b"] = nrm((C, 1))
    p["cca_w1t"] = jnp.transpose(nrm((cr, C)))         # (C, cr)
    p["cca_b1"] = nrm((1, cr))
    p["cca_w2"] = nrm((C, cr))
    p["cca_b2"] = nrm((C, 1))
    return p


# ------------------------------- forward pass --------------------------------
def rfdb3_forward(x, p):
    B, C, H, W = x.shape
    HW = H * W
    dc, red, groups, gc = C // 2, C // 4, C // 16, 16
    xf = x.reshape(B, C, HW)            # channel-major, lanes = H*W (lane-dense)

    # per-tap boundary-validity masks for the flat 3x3 stencils (built once)
    col = jnp.arange(HW, dtype=jnp.int32) % W
    row = jnp.arange(HW, dtype=jnp.int32) // W
    taps = []
    for di in range(3):
        for dj in range(3):
            m = jnp.ones((HW,), dtype=bool)
            if di == 0:
                m = m & (row != 0)
            if di == 2:
                m = m & (row != H - 1)
            if dj == 0:
                m = m & (col != 0)
            if dj == 2:
                m = m & (col != W - 1)
            taps.append(m)
    masks = jnp.stack(taps).astype(_F32)                            # (9, HW)

    def wspec(arr):
        return pl.BlockSpec(arr.shape, lambda b: (0, 0))

    weights = [p["s1_wa"], p["s1_ba"], p["s1_w2"], p["s1_b2"],
               p["s2_wa"], p["s2_ba"], p["s2_wdw"], p["s2_bdw"],
               p["s3_wa"], p["s3_ba"], p["s3_w2"], p["s3_b2"],
               p["s4_wpw"], p["s4_wdw"], p["s4_bdw"],
               p["c5_w"], p["c5_b"],
               p["cca_w1t"], p["cca_b1"], p["cca_w2"], p["cca_b2"]]

    kern = functools.partial(_rfdb3_kernel, H=H, W=W, C=C, dc=dc, red=red,
                             groups=groups, gc=gc)
    out = pl.pallas_call(
        kern,
        out_shape=jax.ShapeDtypeStruct((B, C, HW), _F32),
        grid=(B,),
        in_specs=[pl.BlockSpec((None, C, HW), lambda b: (b, 0, 0)),
                  wspec(masks)] + [wspec(w) for w in weights],
        out_specs=pl.BlockSpec((None, C, HW), lambda b: (b, 0, 0)),
        scratch_shapes=[pltpu.VMEM((4 * dc, HW), _F32)],
        compiler_params=pltpu.CompilerParams(
            dimension_semantics=("parallel",),
            vmem_limit_bytes=32 * 1024 * 1024),
    )(xf, masks, *weights)
    return out.reshape(B, C, H, W)


if __name__ == "__main__":
    B, C, H, W = 2, 16, 16, 16   # involution/CCA in the module require C % 16 == 0
    key = jax.random.PRNGKey(0)
    kx, kp = jax.random.split(key)
    x = jax.random.normal(kx, (B, C, H, W), dtype=_F32)
    params = init_params(kp, C)

    out = jax.jit(rfdb3_forward)(x, params)
    out = jax.block_until_ready(out)
    assert out.shape == (B, C, H, W) and out.dtype == _F32
    assert bool(jnp.all(jnp.isfinite(out)))
    print("KERNEL_OK")
</pallas_src>

<mosaic_0001>
module attributes {stable_mosaic.version = 11 : i64} {
  func.func @_rfdb3_kernel(%arg0: i32, %arg1: memref<1x16x256xf32, #tpu.memory_space<vmem>>, %arg2: memref<9x256xf32, #tpu.memory_space<vmem>>, %arg3: memref<12x16xf32, #tpu.memory_space<vmem>>, %arg4: memref<12x1xf32, #tpu.memory_space<vmem>>, %arg5: memref<9x4xf32, #tpu.memory_space<vmem>>, %arg6: memref<9x1xf32, #tpu.memory_space<vmem>>, %arg7: memref<24x16xf32, #tpu.memory_space<vmem>>, %arg8: memref<24x1xf32, #tpu.memory_space<vmem>>, %arg9: memref<16x9xf32, #tpu.memory_space<vmem>>, %arg10: memref<16x1xf32, #tpu.memory_space<vmem>>, %arg11: memref<12x16xf32, #tpu.memory_space<vmem>>, %arg12: memref<12x1xf32, #tpu.memory_space<vmem>>, %arg13: memref<9x4xf32, #tpu.memory_space<vmem>>, %arg14: memref<9x1xf32, #tpu.memory_space<vmem>>, %arg15: memref<8x16xf32, #tpu.memory_space<vmem>>, %arg16: memref<8x9xf32, #tpu.memory_space<vmem>>, %arg17: memref<8x1xf32, #tpu.memory_space<vmem>>, %arg18: memref<16x32xf32, #tpu.memory_space<vmem>>, %arg19: memref<16x1xf32, #tpu.memory_space<vmem>>, %arg20: memref<16x1xf32, #tpu.memory_space<vmem>>, %arg21: memref<1x1xf32, #tpu.memory_space<vmem>>, %arg22: memref<16x1xf32, #tpu.memory_space<vmem>>, %arg23: memref<16x1xf32, #tpu.memory_space<vmem>>, %arg24: memref<1x16x256xf32, #tpu.memory_space<vmem>>, %arg25: memref<32x256xf32, #tpu.memory_space<vmem>>) attributes {dimension_semantics = [#tpu.dimension_semantics<parallel>], iteration_bounds = array<i64: 2>, scalar_prefetch = 0 : i64, scratch_operands = 1 : i64, tpu.core_type = #tpu.core_type<tc>, window_params = [{transform_indices = @transform_0, window_bounds = array<i64: 1, 16, 256>}, {pipeline_mode = #tpu.pipeline_mode<synchronous>, transform_indices = @transform_1, window_bounds = array<i64: 9, 256>}, {pipeline_mode = #tpu.pipeline_mode<synchronous>, transform_indices = @transform_2, window_bounds = array<i64: 12, 16>}, {pipeline_mode = #tpu.pipeline_mode<synchronous>, transform_indices = @transform_3, window_bounds = array<i64: 12, 1>}, {pipeline_mode = #tpu.pipeline_mode<synchronous>, transform_indices = @transform_4, window_bounds = array<i64: 9, 4>}, {pipeline_mode = #tpu.pipeline_mode<synchronous>, transform_indices = @transform_5, window_bounds = array<i64: 9, 1>}, {pipeline_mode = #tpu.pipeline_mode<synchronous>, transform_indices = @transform_6, window_bounds = array<i64: 24, 16>}, {pipeline_mode = #tpu.pipeline_mode<synchronous>, transform_indices = @transform_7, window_bounds = array<i64: 24, 1>}, {pipeline_mode = #tpu.pipeline_mode<synchronous>, transform_indices = @transform_8, window_bounds = array<i64: 16, 9>}, {pipeline_mode = #tpu.pipeline_mode<synchronous>, transform_indices = @transform_9, window_bounds = array<i64: 16, 1>}, {pipeline_mode = #tpu.pipeline_mode<synchronous>, transform_indices = @transform_10, window_bounds = array<i64: 12, 16>}, {pipeline_mode = #tpu.pipeline_mode<synchronous>, transform_indices = @transform_11, window_bounds = array<i64: 12, 1>}, {pipeline_mode = #tpu.pipeline_mode<synchronous>, transform_indices = @transform_12, window_bounds = array<i64: 9, 4>}, {pipeline_mode = #tpu.pipeline_mode<synchronous>, transform_indices = @transform_13, window_bounds = array<i64: 9, 1>}, {pipeline_mode = #tpu.pipeline_mode<synchronous>, transform_indices = @transform_14, window_bounds = array<i64: 8, 16>}, {pipeline_mode = #tpu.pipeline_mode<synchronous>, transform_indices = @transform_15, window_bounds = array<i64: 8, 9>}, {pipeline_mode = #tpu.pipeline_mode<synchronous>, transform_indices = @transform_16, window_bounds = array<i64: 8, 1>}, {pipeline_mode = #tpu.pipeline_mode<synchronous>, transform_indices = @transform_17, window_bounds = array<i64: 16, 32>}, {pipeline_mode = #tpu.pipeline_mode<synchronous>, transform_indices = @transform_18, window_bounds = array<i64: 16, 1>}, {pipeline_mode = #tpu.pipeline_mode<synchronous>, transform_indices = @transform_19, window_bounds = array<i64: 16, 1>}, {pipeline_mode = #tpu.pipeline_mode<synchronous>, transform_indices = @transform_20, window_bounds = array<i64: 1, 1>}, {pipeline_mode = #tpu.pipeline_mode<synchronous>, transform_indices = @transform_21, window_bounds = array<i64: 16, 1>}, {pipeline_mode = #tpu.pipeline_mode<synchronous>, transform_indices = @transform_22, window_bounds = array<i64: 16, 1>}, {transform_indices = @transform_23, window_bounds = array<i64: 1, 16, 256>}]} {
    %c0 = arith.constant 0 : index
    %c0_0 = arith.constant 0 : index
    %0 = vector.load %arg2[%c0, %c0_0] : memref<9x256xf32, #tpu.memory_space<vmem>>, vector<9x256xf32>
    %1 = vector.extract_strided_slice %0 {offsets = [1, 0], sizes = [1, 256], strides = [1, 1]} : vector<9x256xf32> to vector<1x256xf32>
    %2 = vector.extract_strided_slice %0 {offsets = [3, 0], sizes = [1, 256], strides = [1, 1]} : vector<9x256xf32> to vector<1x256xf32>
    %3 = vector.extract_strided_slice %0 {offsets = [5, 0], sizes = [1, 256], strides = [1, 1]} : vector<9x256xf32> to vector<1x256xf32>
    %4 = vector.extract_strided_slice %0 {offsets = [7, 0], sizes = [1, 256], strides = [1, 1]} : vector<9x256xf32> to vector<1x256xf32>
    %c0_1 = arith.constant 0 : index
    %c0_2 = arith.constant 0 : index
    %c0_3 = arith.constant 0 : index
    %5 = vector.load %arg1[%c0_1, %c0_2, %c0_3] : memref<1x16x256xf32, #tpu.memory_space<vmem>>, vector<1x16x256xf32>
    %6 = vector.shape_cast %5 : vector<1x16x256xf32> to vector<16x256xf32>
    %c0_4 = arith.constant 0 : index
    %c0_5 = arith.constant 0 : index
    %7 = vector.load %arg3[%c0_4, %c0_5] : memref<12x16xf32, #tpu.memory_space<vmem>>, vector<12x16xf32>
    %cst = arith.constant dense<0.000000e+00> : vector<12x256xf32>
    %8 = tpu.matmul %7, %6, %cst {dimension_numbers = #tpu.dot_dimension_numbers<[1], [0], [0], [1], [0, 0, 1, 1], [], []>} : vector<12x16xf32>, vector<16x256xf32>, vector<12x256xf32> -> vector<12x256xf32>
    %c0_6 = arith.constant 0 : index
    %c0_7 = arith.constant 0 : index
    %9 = vector.load %arg4[%c0_6, %c0_7] : memref<12x1xf32, #tpu.memory_space<vmem>>, vector<12x1xf32>
    %10 = vector.broadcast %9 : vector<12x1xf32> to vector<12x256xf32>
    %11 = arith.addf %8, %10 : vector<12x256xf32>
    %12 = vector.extract_strided_slice %11 {offsets = [0, 0], sizes = [8, 256], strides = [1, 1]} : vector<12x256xf32> to vector<8x256xf32>
    %cst_8 = arith.constant 0.000000e+00 : f32
    %13 = vector.broadcast %cst_8 : f32 to vector<8x256xf32>
    %14 = arith.cmpf oge, %12, %13 : vector<8x256xf32>
    %cst_9 = arith.constant 5.000000e-02 : f32
    %15 = vector.broadcast %cst_9 : f32 to vector<8x256xf32>
    %16 = arith.mulf %15, %12 : vector<8x256xf32>
    %17 = arith.select %14, %12, %16 : vector<8x256xi1>, vector<8x256xf32>
    %c0_10 = arith.constant 0 : index
    %c0_11 = arith.constant 0 : index
    %18 = vector.load %arg25[%c0_10, %c0_11] : memref<32x256xf32, #tpu.memory_space<vmem>>, vector<8x256xf32>
    tpu.vector_store %arg25[%c0_10, %c0_11], %17 {strides = array<i32>} : memref<32x256xf32, #tpu.memory_space<vmem>>, vector<8x256xf32>,
    %19 = vector.extract_strided_slice %11 {offsets = [8, 0], sizes = [4, 256], strides = [1, 1]} : vector<12x256xf32> to vector<4x256xf32>
    %cst_12 = arith.constant 0.000000e+00 : f32
    %20 = vector.broadcast %cst_12 : f32 to vector<4x256xf32>
    %21 = arith.maximumf %19, %20 : vector<4x256xf32>
    %c0_13 = arith.constant 0 : index
    %c0_14 = arith.constant 0 : index
    %22 = vector.load %arg5[%c0_13, %c0_14] : memref<9x4xf32, #tpu.memory_space<vmem>>, vector<9x4xf32>
    %cst_15 = arith.constant dense<0.000000e+00> : vector<9x256xf32>
    %23 = tpu.matmul %22, %21, %cst_15 {dimension_numbers = #tpu.dot_dimension_numbers<[1], [0], [0], [1], [0, 0, 1, 1], [], []>} : vector<9x4xf32>, vector<4x256xf32>, vector<9x256xf32> -> vector<9x256xf32>
    %c0_16 = arith.constant 0 : index
    %c0_17 = arith.constant 0 : index
    %24 = vector.load %arg6[%c0_16, %c0_17] : memref<9x1xf32, #tpu.memory_space<vmem>>, vector<9x1xf32>
    %25 = vector.broadcast %24 : vector<9x1xf32> to vector<9x256xf32>
    %26 = arith.addf %23, %25 : vector<9x256xf32>
    %27 = vector.shape_cast %26 : vector<9x256xf32> to vector<1x9x256xf32>
    %28 = vector.shape_cast %0 : vector<9x256xf32> to vector<1x9x256xf32>
    %29 = arith.mulf %27, %28 : vector<1x9x256xf32>
    %30 = vector.shape_cast %6 : vector<16x256xf32> to vector<1x16x256xf32>
    %31 = vector.extract_strided_slice %29 {offsets = [0, 4, 0], sizes = [1, 1, 256], strides = [1, 1, 1]} : vector<1x9x256xf32> to vector<1x1x256xf32>
    %32 = vector.broadcast %31 : vector<1x1x256xf32> to vector<1x16x256xf32>
    %33 = arith.mulf %30, %32 : vector<1x16x256xf32>
    %c17_i32 = arith.constant 17 : i32
    %34 = tpu.dynamic_rotate %6 by %c17_i32 dim 1 : vector<16x256xf32>, i32 -> vector<16x256xf32>
    %35 = vector.shape_cast %34 : vector<16x256xf32> to vector<1x16x256xf32>
    %36 = vector.extract_strided_slice %29 {offsets = [0, 0, 0], sizes = [1, 1, 256], strides = [1, 1, 1]} : vector<1x9x256xf32> to vector<1x1x256xf32>
    %37 = vector.broadcast %36 : vector<1x1x256xf32> to vector<1x16x256xf32>
    %38 = arith.mulf %35, %37 : vector<1x16x256xf32>
    %39 = arith.addf %33, %38 : vector<1x16x256xf32>
    %c16_i32 = arith.constant 16 : i32
    %40 = tpu.dynamic_rotate %6 by %c16_i32 dim 1 : vector<16x256xf32>, i32 -> vector<16x256xf32>
    %41 = vector.shape_cast %40 : vector<16x256xf32> to vector<1x16x256xf32>
    %42 = vector.extract_strided_slice %29 {offsets = [0, 1, 0], sizes = [1, 1, 256], strides = [1, 1, 1]} : vector<1x9x256xf32> to vector<1x1x256xf32>
    %43 = vector.broadcast %42 : vector<1x1x256xf32> to vector<1x16x256xf32>
    %44 = arith.mulf %41, %43 : vector<1x16x256xf32>
    %45 = arith.addf %39, %44 : vector<1x16x256xf32>
    %c15_i32 = arith.constant 15 : i32
    %46 = tpu.dynamic_rotate %6 by %c15_i32 dim 1 : vector<16x256xf32>, i32 -> vector<16x256xf32>
    %47 = vector.shape_cast %46 : vector<16x256xf32> to vector<1x16x256xf32>
    %48 = vector.extract_strided_slice %29 {offsets = [0, 2, 0], sizes = [1, 1, 256], strides = [1, 1, 1]} : vector<1x9x256xf32> to vector<1x1x256xf32>
    %49 = vector.broadcast %48 : vector<1x1x256xf32> to vector<1x16x256xf32>
    %50 = arith.mulf %47, %49 : vector<1x16x256xf32>
    %51 = arith.addf %45, %50 : vector<1x16x256xf32>
    %c1_i32 = arith.constant 1 : i32
    %52 = tpu.dynamic_rotate %6 by %c1_i32 dim 1 : vector<16x256xf32>, i32 -> vector<16x256xf32>
    %53 = vector.shape_cast %52 : vector<16x256xf32> to vector<1x16x256xf32>
    %54 = vector.extract_strided_slice %29 {offsets = [0, 3, 0], sizes = [1, 1, 256], strides = [1, 1, 1]} : vector<1x9x256xf32> to vector<1x1x256xf32>
    %55 = vector.broadcast %54 : vector<1x1x256xf32> to vector<1x16x256xf32>
    %56 = arith.mulf %53, %55 : vector<1x16x256xf32>
    %57 = arith.addf %51, %56 : vector<1x16x256xf32>
    %c255_i32 = arith.constant 255 : i32
    %58 = tpu.dynamic_rotate %6 by %c255_i32 dim 1 : vector<16x256xf32>, i32 -> vector<16x256xf32>
    %59 = vector.shape_cast %58 : vector<16x256xf32> to vector<1x16x256xf32>
    %60 = vector.extract_strided_slice %29 {offsets = [0, 5, 0], sizes = [1, 1, 256], strides = [1, 1, 1]} : vector<1x9x256xf32> to vector<1x1x256xf32>
    %61 = vector.broadcast %60 : vector<1x1x256xf32> to vector<1x16x256xf32>
    %62 = arith.mulf %59, %61 : vector<1x16x256xf32>
    %63 = arith.addf %57, %62 : vector<1x16x256xf32>
    %c241_i32 = arith.constant 241 : i32
    %64 = tpu.dynamic_rotate %6 by %c241_i32 dim 1 : vector<16x256xf32>, i32 -> vector<16x256xf32>
    %65 = vector.shape_cast %64 : vector<16x256xf32> to vector<1x16x256xf32>
    %66 = vector.extract_strided_slice %29 {offsets = [0, 6, 0], sizes = [1, 1, 256], strides = [1, 1, 1]} : vector<1x9x256xf32> to vector<1x1x256xf32>
    %67 = vector.broadcast %66 : vector<1x1x256xf32> to vector<1x16x256xf32>
    %68 = arith.mulf %65, %67 : vector<1x16x256xf32>
    %69 = arith.addf %63, %68 : vector<1x16x256xf32>
    %c240_i32 = arith.constant 240 : i32
    %70 = tpu.dynamic_rotate %6 by %c240_i32 dim 1 : vector<16x256xf32>, i32 -> vector<16x256xf32>
    %71 = vector.shape_cast %70 : vector<16x256xf32> to vector<1x16x256xf32>
    %72 = vector.extract_strided_slice %29 {offsets = [0, 7, 0], sizes = [1, 1, 256], strides = [1, 1, 1]} : vector<1x9x256xf32> to vector<1x1x256xf32>
    %73 = vector.broadcast %72 : vector<1x1x256xf32> to vector<1x16x256xf32>
    %74 = arith.mulf %71, %73 : vector<1x16x256xf32>
    %75 = arith.addf %69, %74 : vector<1x16x256xf32>
    %c239_i32 = arith.constant 239 : i32
    %76 = tpu.dynamic_rotate %6 by %c239_i32 dim 1 : vector<16x256xf32>, i32 -> vector<16x256xf32>
    %77 = vector.shape_cast %76 : vector<16x256xf32> to vector<1x16x256xf32>
    %78 = vector.extract_strided_slice %29 {offsets = [0, 8, 0], sizes = [1, 1, 256], strides = [1, 1, 1]} : vector<1x9x256xf32> to vector<1x1x256xf32>
    %79 = vector.broadcast %78 : vector<1x1x256xf32> to vector<1x16x256xf32>
    %80 = arith.mulf %77, %79 : vector<1x16x256xf32>
    %81 = arith.addf %75, %80 : vector<1x16x256xf32>
    %82 = vector.shape_cast %81 : vector<1x16x256xf32> to vector<16x256xf32>
    %83 = arith.addf %82, %6 : vector<16x256xf32>
    %cst_18 = arith.constant 0.000000e+00 : f32
    %84 = vector.broadcast %cst_18 : f32 to vector<16x256xf32>
    %85 = arith.cmpf oge, %83, %84 : vector<16x256xf32>
    %cst_19 = arith.constant 5.000000e-02 : f32
    %86 = vector.broadcast %cst_19 : f32 to vector<16x256xf32>
    %87 = arith.mulf %86, %83 : vector<16x256xf32>
    %88 = arith.select %85, %83, %87 : vector<16x256xi1>, vector<16x256xf32>
    %c0_20 = arith.constant 0 : index
    %c0_21 = arith.constant 0 : index
    %89 = vector.load %arg7[%c0_20, %c0_21] : memref<24x16xf32, #tpu.memory_space<vmem>>, vector<24x16xf32>
    %cst_22 = arith.constant dense<0.000000e+00> : vector<24x256xf32>
    %90 = tpu.matmul %89, %88, %cst_22 {dimension_numbers = #tpu.dot_dimension_numbers<[1], [0], [0], [1], [0, 0, 1, 1], [], []>} : vector<24x16xf32>, vector<16x256xf32>, vector<24x256xf32> -> vector<24x256xf32>
    %c0_23 = arith.constant 0 : index
    %c0_24 = arith.constant 0 : index
    %91 = vector.load %arg8[%c0_23, %c0_24] : memref<24x1xf32, #tpu.memory_space<vmem>>, vector<24x1xf32>
    %92 = vector.broadcast %91 : vector<24x1xf32> to vector<24x256xf32>
    %93 = arith.addf %90, %92 : vector<24x256xf32>
    %94 = vector.extract_strided_slice %93 {offsets = [0, 0], sizes = [8, 256], strides = [1, 1]} : vector<24x256xf32> to vector<8x256xf32>
    %cst_25 = arith.constant 0.000000e+00 : f32
    %95 = vector.broadcast %cst_25 : f32 to vector<8x256xf32>
    %96 = arith.cmpf oge, %94, %95 : vector<8x256xf32>
    %cst_26 = arith.constant 5.000000e-02 : f32
    %97 = vector.broadcast %cst_26 : f32 to vector<8x256xf32>
    %98 = arith.mulf %97, %94 : vector<8x256xf32>
    %99 = arith.select %96, %94, %98 : vector<8x256xi1>, vector<8x256xf32>
    %c8 = arith.constant 8 : index
    %c0_27 = arith.constant 0 : index
    %100 = vector.load %arg25[%c8, %c0_27] : memref<32x256xf32, #tpu.memory_space<vmem>>, vector<8x256xf32>
    tpu.vector_store %arg25[%c8, %c0_27], %99 {strides = array<i32>} : memref<32x256xf32, #tpu.memory_space<vmem>>, vector<8x256xf32>,
    %101 = vector.extract_strided_slice %93 {offsets = [8, 0], sizes = [16, 256], strides = [1, 1]} : vector<24x256xf32> to vector<16x256xf32>
    %c0_28 = arith.constant 0 : index
    %c0_29 = arith.constant 0 : index
    %102 = vector.load %arg9[%c0_28, %c0_29] : memref<16x9xf32, #tpu.memory_space<vmem>>, vector<16x9xf32>
    %c16_i32_30 = arith.constant 16 : i32
    %103 = tpu.dynamic_rotate %101 by %c16_i32_30 dim 1 : vector<16x256xf32>, i32 -> vector<16x256xf32>
    %104 = vector.broadcast %1 : vector<1x256xf32> to vector<16x256xf32>
    %105 = arith.mulf %103, %104 : vector<16x256xf32>
    %c240_i32_31 = arith.constant 240 : i32
    %106 = tpu.dynamic_rotate %101 by %c240_i32_31 dim 1 : vector<16x256xf32>, i32 -> vector<16x256xf32>
    %107 = vector.broadcast %4 : vector<1x256xf32> to vector<16x256xf32>
    %108 = arith.mulf %106, %107 : vector<16x256xf32>
    %109 = vector.extract_strided_slice %102 {offsets = [0, 0], sizes = [16, 1], strides = [1, 1]} : vector<16x9xf32> to vector<16x1xf32>
    %110 = vector.broadcast %109 : vector<16x1xf32> to vector<16x256xf32>
    %111 = arith.mulf %105, %110 : vector<16x256xf32>
    %112 = vector.extract_strided_slice %102 {offsets = [0, 3], sizes = [16, 1], strides = [1, 1]} : vector<16x9xf32> to vector<16x1xf32>
    %113 = vector.broadcast %112 : vector<16x1xf32> to vector<16x256xf32>
    %114 = arith.mulf %101, %113 : vector<16x256xf32>
    %115 = arith.addf %111, %114 : vector<16x256xf32>
    %116 = vector.extract_strided_slice %102 {offsets = [0, 6], sizes = [16, 1], strides = [1, 1]} : vector<16x9xf32> to vector<16x1xf32>
    %117 = vector.broadcast %116 : vector<16x1xf32> to vector<16x256xf32>
    %118 = arith.mulf %108, %117 : vector<16x256xf32>
    %119 = arith.addf %115, %118 : vector<16x256xf32>
    %120 = vector.extract_strided_slice %102 {offsets = [0, 1], sizes = [16, 1], strides = [1, 1]} : vector<16x9xf32> to vector<16x1xf32>
    %121 = vector.broadcast %120 : vector<16x1xf32> to vector<16x256xf32>
    %122 = arith.mulf %105, %121 : vector<16x256xf32>
    %123 = vector.extract_strided_slice %102 {offsets = [0, 4], sizes = [16, 1], strides = [1, 1]} : vector<16x9xf32> to vector<16x1xf32>
    %124 = vector.broadcast %123 : vector<16x1xf32> to vector<16x256xf32>
    %125 = arith.mulf %101, %124 : vector<16x256xf32>
    %126 = arith.addf %122, %125 : vector<16x256xf32>
    %127 = vector.extract_strided_slice %102 {offsets = [0, 7], sizes = [16, 1], strides = [1, 1]} : vector<16x9xf32> to vector<16x1xf32>
    %128 = vector.broadcast %127 : vector<16x1xf32> to vector<16x256xf32>
    %129 = arith.mulf %108, %128 : vector<16x256xf32>
    %130 = arith.addf %126, %129 : vector<16x256xf32>
    %131 = vector.extract_strided_slice %102 {offsets = [0, 2], sizes = [16, 1], strides = [1, 1]} : vector<16x9xf32> to vector<16x1xf32>
    %132 = vector.broadcast %131 : vector<16x1xf32> to vector<16x256xf32>
    %133 = arith.mulf %105, %132 : vector<16x256xf32>
    %134 = vector.extract_strided_slice %102 {offsets = [0, 5], sizes = [16, 1], strides = [1, 1]} : vector<16x9xf32> to vector<16x1xf32>
    %135 = vector.broadcast %134 : vector<16x1xf32> to vector<16x256xf32>
    %136 = arith.mulf %101, %135 : vector<16x256xf32>
    %137 = arith.addf %133, %136 : vector<16x256xf32>
    %138 = vector.extract_strided_slice %102 {offsets = [0, 8], sizes = [16, 1], strides = [1, 1]} : vector<16x9xf32> to vector<16x1xf32>
    %139 = vector.broadcast %138 : vector<16x1xf32> to vector<16x256xf32>
    %140 = arith.mulf %108, %139 : vector<16x256xf32>
    %141 = arith.addf %137, %140 : vector<16x256xf32>
    %c1_i32_32 = arith.constant 1 : i32
    %142 = tpu.dynamic_rotate %119 by %c1_i32_32 dim 1 : vector<16x256xf32>, i32 -> vector<16x256xf32>
    %143 = vector.broadcast %2 : vector<1x256xf32> to vector<16x256xf32>
    %144 = arith.mulf %142, %143 : vector<16x256xf32>
    %145 = arith.addf %130, %144 : vector<16x256xf32>
    %c255_i32_33 = arith.constant 255 : i32
    %146 = tpu.dynamic_rotate %141 by %c255_i32_33 dim 1 : vector<16x256xf32>, i32 -> vector<16x256xf32>
    %147 = vector.broadcast %3 : vector<1x256xf32> to vector<16x256xf32>
    %148 = arith.mulf %146, %147 : vector<16x256xf32>
    %149 = arith.addf %145, %148 : vector<16x256xf32>
    %c0_34 = arith.constant 0 : index
    %c0_35 = arith.constant 0 : index
    %150 = vector.load %arg10[%c0_34, %c0_35] : memref<16x1xf32, #tpu.memory_space<vmem>>, vector<16x1xf32>
    %151 = vector.broadcast %150 : vector<16x1xf32> to vector<16x256xf32>
    %152 = arith.addf %149, %151 : vector<16x256xf32>
    %153 = arith.addf %152, %88 : vector<16x256xf32>
    %cst_36 = arith.constant 0.000000e+00 : f32
    %154 = vector.broadcast %cst_36 : f32 to vector<16x256xf32>
    %155 = arith.cmpf oge, %153, %154 : vector<16x256xf32>
    %cst_37 = arith.constant 5.000000e-02 : f32
    %156 = vector.broadcast %cst_37 : f32 to vector<16x256xf32>
    %157 = arith.mulf %156, %153 : vector<16x256xf32>
    %158 = arith.select %155, %153, %157 : vector<16x256xi1>, vector<16x256xf32>
    %c0_38 = arith.constant 0 : index
    %c0_39 = arith.constant 0 : index
    %159 = vector.load %arg11[%c0_38, %c0_39] : memref<12x16xf32, #tpu.memory_space<vmem>>, vector<12x16xf32>
    %cst_40 = arith.constant dense<0.000000e+00> : vector<12x256xf32>
    %160 = tpu.matmul %159, %158, %cst_40 {dimension_numbers = #tpu.dot_dimension_numbers<[1], [0], [0], [1], [0, 0, 1, 1], [], []>} : vector<12x16xf32>, vector<16x256xf32>, vector<12x256xf32> -> vector<12x256xf32>
    %c0_41 = arith.constant 0 : index
    %c0_42 = arith.constant 0 : index
    %161 = vector.load %arg12[%c0_41, %c0_42] : memref<12x1xf32, #tpu.memory_space<vmem>>, vector<12x1xf32>
    %162 = vector.broadcast %161 : vector<12x1xf32> to vector<12x256xf32>
    %163 = arith.addf %160, %162 : vector<12x256xf32>
    %164 = vector.extract_strided_slice %163 {offsets = [0, 0], sizes = [8, 256], strides = [1, 1]} : vector<12x256xf32> to vector<8x256xf32>
    %cst_43 = arith.constant 0.000000e+00 : f32
    %165 = vector.broadcast %cst_43 : f32 to vector<8x256xf32>
    %166 = arith.cmpf oge, %164, %165 : vector<8x256xf32>
    %cst_44 = arith.constant 5.000000e-02 : f32
    %167 = vector.broadcast %cst_44 : f32 to vector<8x256xf32>
    %168 = arith.mulf %167, %164 : vector<8x256xf32>
    %169 = arith.select %166, %164, %168 : vector<8x256xi1>, vector<8x256xf32>
    %c16 = arith.constant 16 : index
    %c0_45 = arith.constant 0 : index
    %170 = vector.load %arg25[%c16, %c0_45] : memref<32x256xf32, #tpu.memory_space<vmem>>, vector<8x256xf32>
    tpu.vector_store %arg25[%c16, %c0_45], %169 {strides = array<i32>} : memref<32x256xf32, #tpu.memory_space<vmem>>, vector<8x256xf32>,
    %171 = vector.extract_strided_slice %163 {offsets = [8, 0], sizes = [4, 256], strides = [1, 1]} : vector<12x256xf32> to vector<4x256xf32>
    %cst_46 = arith.constant 0.000000e+00 : f32
    %172 = vector.broadcast %cst_46 : f32 to vector<4x256xf32>
    %173 = arith.maximumf %171, %172 : vector<4x256xf32>
    %c0_47 = arith.constant 0 : index
    %c0_48 = arith.constant 0 : index
    %174 = vector.load %arg13[%c0_47, %c0_48] : memref<9x4xf32, #tpu.memory_space<vmem>>, vector<9x4xf32>
    %cst_49 = arith.constant dense<0.000000e+00> : vector<9x256xf32>
    %175 = tpu.matmul %174, %173, %cst_49 {dimension_numbers = #tpu.dot_dimension_numbers<[1], [0], [0], [1], [0, 0, 1, 1], [], []>} : vector<9x4xf32>, vector<4x256xf32>, vector<9x256xf32> -> vector<9x256xf32>
    %c0_50 = arith.constant 0 : index
    %c0_51 = arith.constant 0 : index
    %176 = vector.load %arg14[%c0_50, %c0_51] : memref<9x1xf32, #tpu.memory_space<vmem>>, vector<9x1xf32>
    %177 = vector.broadcast %176 : vector<9x1xf32> to vector<9x256xf32>
    %178 = arith.addf %175, %177 : vector<9x256xf32>
    %179 = vector.shape_cast %178 : vector<9x256xf32> to vector<1x9x256xf32>
    %180 = vector.shape_cast %0 : vector<9x256xf32> to vector<1x9x256xf32>
    %181 = arith.mulf %179, %180 : vector<1x9x256xf32>
    %182 = vector.shape_cast %158 : vector<16x256xf32> to vector<1x16x256xf32>
    %183 = vector.extract_strided_slice %181 {offsets = [0, 4, 0], sizes = [1, 1, 256], strides = [1, 1, 1]} : vector<1x9x256xf32> to vector<1x1x256xf32>
    %184 = vector.broadcast %183 : vector<1x1x256xf32> to vector<1x16x256xf32>
    %185 = arith.mulf %182, %184 : vector<1x16x256xf32>
    %c17_i32_52 = arith.constant 17 : i32
    %186 = tpu.dynamic_rotate %158 by %c17_i32_52 dim 1 : vector<16x256xf32>, i32 -> vector<16x256xf32>
    %187 = vector.shape_cast %186 : vector<16x256xf32> to vector<1x16x256xf32>
    %188 = vector.extract_strided_slice %181 {offsets = [0, 0, 0], sizes = [1, 1, 256], strides = [1, 1, 1]} : vector<1x9x256xf32> to vector<1x1x256xf32>
    %189 = vector.broadcast %188 : vector<1x1x256xf32> to vector<1x16x256xf32>
    %190 = arith.mulf %187, %189 : vector<1x16x256xf32>
    %191 = arith.addf %185, %190 : vector<1x16x256xf32>
    %c16_i32_53 = arith.constant 16 : i32
    %192 = tpu.dynamic_rotate %158 by %c16_i32_53 dim 1 : vector<16x256xf32>, i32 -> vector<16x256xf32>
    %193 = vector.shape_cast %192 : vector<16x256xf32> to vector<1x16x256xf32>
    %194 = vector.extract_strided_slice %181 {offsets = [0, 1, 0], sizes = [1, 1, 256], strides = [1, 1, 1]} : vector<1x9x256xf32> to vector<1x1x256xf32>
    %195 = vector.broadcast %194 : vector<1x1x256xf32> to vector<1x16x256xf32>
    %196 = arith.mulf %193, %195 : vector<1x16x256xf32>
    %197 = arith.addf %191, %196 : vector<1x16x256xf32>
    %c15_i32_54 = arith.constant 15 : i32
    %198 = tpu.dynamic_rotate %158 by %c15_i32_54 dim 1 : vector<16x256xf32>, i32 -> vector<16x256xf32>
    %199 = vector.shape_cast %198 : vector<16x256xf32> to vector<1x16x256xf32>
    %200 = vector.extract_strided_slice %181 {offsets = [0, 2, 0], sizes = [1, 1, 256], strides = [1, 1, 1]} : vector<1x9x256xf32> to vector<1x1x256xf32>
    %201 = vector.broadcast %200 : vector<1x1x256xf32> to vector<1x16x256xf32>
    %202 = arith.mulf %199, %201 : vector<1x16x256xf32>
    %203 = arith.addf %197, %202 : vector<1x16x256xf32>
    %c1_i32_55 = arith.constant 1 : i32
    %204 = tpu.dynamic_rotate %158 by %c1_i32_55 dim 1 : vector<16x256xf32>, i32 -> vector<16x256xf32>
    %205 = vector.shape_cast %204 : vector<16x256xf32> to vector<1x16x256xf32>
    %206 = vector.extract_strided_slice %181 {offsets = [0, 3, 0], sizes = [1, 1, 256], strides = [1, 1, 1]} : vector<1x9x256xf32> to vector<1x1x256xf32>
    %207 = vector.broadcast %206 : vector<1x1x256xf32> to vector<1x16x256xf32>
    %208 = arith.mulf %205, %207 : vector<1x16x256xf32>
    %209 = arith.addf %203, %208 : vector<1x16x256xf32>
    %c255_i32_56 = arith.constant 255 : i32
    %210 = tpu.dynamic_rotate %158 by %c255_i32_56 dim 1 : vector<16x256xf32>, i32 -> vector<16x256xf32>
    %211 = vector.shape_cast %210 : vector<16x256xf32> to vector<1x16x256xf32>
    %212 = vector.extract_strided_slice %181 {offsets = [0, 5, 0], sizes = [1, 1, 256], strides = [1, 1, 1]} : vector<1x9x256xf32> to vector<1x1x256xf32>
    %213 = vector.broadcast %212 : vector<1x1x256xf32> to vector<1x16x256xf32>
    %214 = arith.mulf %211, %213 : vector<1x16x256xf32>
    %215 = arith.addf %209, %214 : vector<1x16x256xf32>
    %c241_i32_57 = arith.constant 241 : i32
    %216 = tpu.dynamic_rotate %158 by %c241_i32_57 dim 1 : vector<16x256xf32>, i32 -> vector<16x256xf32>
    %217 = vector.shape_cast %216 : vector<16x256xf32> to vector<1x16x256xf32>
    %218 = vector.extract_strided_slice %181 {offsets = [0, 6, 0], sizes = [1, 1, 256], strides = [1, 1, 1]} : vector<1x9x256xf32> to vector<1x1x256xf32>
    %219 = vector.broadcast %218 : vector<1x1x256xf32> to vector<1x16x256xf32>
    %220 = arith.mulf %217, %219 : vector<1x16x256xf32>
    %221 = arith.addf %215, %220 : vector<1x16x256xf32>
    %c240_i32_58 = arith.constant 240 : i32
    %222 = tpu.dynamic_rotate %158 by %c240_i32_58 dim 1 : vector<16x256xf32>, i32 -> vector<16x256xf32>
    %223 = vector.shape_cast %222 : vector<16x256xf32> to vector<1x16x256xf32>
    %224 = vector.extract_strided_slice %181 {offsets = [0, 7, 0], sizes = [1, 1, 256], strides = [1, 1, 1]} : vector<1x9x256xf32> to vector<1x1x256xf32>
    %225 = vector.broadcast %224 : vector<1x1x256xf32> to vector<1x16x256xf32>
    %226 = arith.mulf %223, %225 : vector<1x16x256xf32>
    %227 = arith.addf %221, %226 : vector<1x16x256xf32>
    %c239_i32_59 = arith.constant 239 : i32
    %228 = tpu.dynamic_rotate %158 by %c239_i32_59 dim 1 : vector<16x256xf32>, i32 -> vector<16x256xf32>
    %229 = vector.shape_cast %228 : vector<16x256xf32> to vector<1x16x256xf32>
    %230 = vector.extract_strided_slice %181 {offsets = [0, 8, 0], sizes = [1, 1, 256], strides = [1, 1, 1]} : vector<1x9x256xf32> to vector<1x1x256xf32>
    %231 = vector.broadcast %230 : vector<1x1x256xf32> to vector<1x16x256xf32>
    %232 = arith.mulf %229, %231 : vector<1x16x256xf32>
    %233 = arith.addf %227, %232 : vector<1x16x256xf32>
    %234 = vector.shape_cast %233 : vector<1x16x256xf32> to vector<16x256xf32>
    %235 = arith.addf %234, %158 : vector<16x256xf32>
    %cst_60 = arith.constant 0.000000e+00 : f32
    %236 = vector.broadcast %cst_60 : f32 to vector<16x256xf32>
    %237 = arith.cmpf oge, %235, %236 : vector<16x256xf32>
    %cst_61 = arith.constant 5.000000e-02 : f32
    %238 = vector.broadcast %cst_61 : f32 to vector<16x256xf32>
    %239 = arith.mulf %238, %235 : vector<16x256xf32>
    %240 = arith.select %237, %235, %239 : vector<16x256xi1>, vector<16x256xf32>
    %c0_62 = arith.constant 0 : index
    %c0_63 = arith.constant 0 : index
    %241 = vector.load %arg15[%c0_62, %c0_63] : memref<8x16xf32, #tpu.memory_space<vmem>>, vector<8x16xf32>
    %cst_64 = arith.constant dense<0.000000e+00> : vector<8x256xf32>
    %242 = tpu.matmul %241, %240, %cst_64 {dimension_numbers = #tpu.dot_dimension_numbers<[1], [0], [0], [1], [0, 0, 1, 1], [], []>} : vector<8x16xf32>, vector<16x256xf32>, vector<8x256xf32> -> vector<8x256xf32>
    %c0_65 = arith.constant 0 : index
    %c0_66 = arith.constant 0 : index
    %243 = vector.load %arg16[%c0_65, %c0_66] : memref<8x9xf32, #tpu.memory_space<vmem>>, vector<8x9xf32>
    %c16_i32_67 = arith.constant 16 : i32
    %244 = tpu.dynamic_rotate %242 by %c16_i32_67 dim 1 : vector<8x256xf32>, i32 -> vector<8x256xf32>
    %245 = vector.broadcast %1 : vector<1x256xf32> to vector<8x256xf32>
    %246 = arith.mulf %244, %245 : vector<8x256xf32>
    %c240_i32_68 = arith.constant 240 : i32
    %247 = tpu.dynamic_rotate %242 by %c240_i32_68 dim 1 : vector<8x256xf32>, i32 -> vector<8x256xf32>
    %248 = vector.broadcast %4 : vector<1x256xf32> to vector<8x256xf32>
    %249 = arith.mulf %247, %248 : vector<8x256xf32>
    %250 = vector.extract_strided_slice %243 {offsets = [0, 0], sizes = [8, 1], strides = [1, 1]} : vector<8x9xf32> to vector<8x1xf32>
    %251 = vector.broadcast %250 : vector<8x1xf32> to vector<8x256xf32>
    %252 = arith.mulf %246, %251 : vector<8x256xf32>
    %253 = vector.extract_strided_slice %243 {offsets = [0, 3], sizes = [8, 1], strides = [1, 1]} : vector<8x9xf32> to vector<8x1xf32>
    %254 = vector.broadcast %253 : vector<8x1xf32> to vector<8x256xf32>
    %255 = arith.mulf %242, %254 : vector<8x256xf32>
    %256 = arith.addf %252, %255 : vector<8x256xf32>
    %257 = vector.extract_strided_slice %243 {offsets = [0, 6], sizes = [8, 1], strides = [1, 1]} : vector<8x9xf32> to vector<8x1xf32>
    %258 = vector.broadcast %257 : vector<8x1xf32> to vector<8x256xf32>
    %259 = arith.mulf %249, %258 : vector<8x256xf32>
    %260 = arith.addf %256, %259 : vector<8x256xf32>
    %261 = vector.extract_strided_slice %243 {offsets = [0, 1], sizes = [8, 1], strides = [1, 1]} : vector<8x9xf32> to vector<8x1xf32>
    %262 = vector.broadcast %261 : vector<8x1xf32> to vector<8x256xf32>
    %263 = arith.mulf %246, %262 : vector<8x256xf32>
    %264 = vector.extract_strided_slice %243 {offsets = [0, 4], sizes = [8, 1], strides = [1, 1]} : vector<8x9xf32> to vector<8x1xf32>
    %265 = vector.broadcast %264 : vector<8x1xf32> to vector<8x256xf32>
    %266 = arith.mulf %242, %265 : vector<8x256xf32>
    %267 = arith.addf %263, %266 : vector<8x256xf32>
    %268 = vector.extract_strided_slice %243 {offsets = [0, 7], sizes = [8, 1], strides = [1, 1]} : vector<8x9xf32> to vector<8x1xf32>
    %269 = vector.broadcast %268 : vector<8x1xf32> to vector<8x256xf32>
    %270 = arith.mulf %249, %269 : vector<8x256xf32>
    %271 = arith.addf %267, %270 : vector<8x256xf32>
    %272 = vector.extract_strided_slice %243 {offsets = [0, 2], sizes = [8, 1], strides = [1, 1]} : vector<8x9xf32> to vector<8x1xf32>
    %273 = vector.broadcast %272 : vector<8x1xf32> to vector<8x256xf32>
    %274 = arith.mulf %246, %273 : vector<8x256xf32>
    %275 = vector.extract_strided_slice %243 {offsets = [0, 5], sizes = [8, 1], strides = [1, 1]} : vector<8x9xf32> to vector<8x1xf32>
    %276 = vector.broadcast %275 : vector<8x1xf32> to vector<8x256xf32>
    %277 = arith.mulf %242, %276 : vector<8x256xf32>
    %278 = arith.addf %274, %277 : vector<8x256xf32>
    %279 = vector.extract_strided_slice %243 {offsets = [0, 8], sizes = [8, 1], strides = [1, 1]} : vector<8x9xf32> to vector<8x1xf32>
    %280 = vector.broadcast %279 : vector<8x1xf32> to vector<8x256xf32>
    %281 = arith.mulf %249, %280 : vector<8x256xf32>
    %282 = arith.addf %278, %281 : vector<8x256xf32>
    %c1_i32_69 = arith.constant 1 : i32
    %283 = tpu.dynamic_rotate %260 by %c1_i32_69 dim 1 : vector<8x256xf32>, i32 -> vector<8x256xf32>
    %284 = vector.broadcast %2 : vector<1x256xf32> to vector<8x256xf32>
    %285 = arith.mulf %283, %284 : vector<8x256xf32>
    %286 = arith.addf %271, %285 : vector<8x256xf32>
    %c255_i32_70 = arith.constant 255 : i32
    %287 = tpu.dynamic_rotate %282 by %c255_i32_70 dim 1 : vector<8x256xf32>, i32 -> vector<8x256xf32>
    %288 = vector.broadcast %3 : vector<1x256xf32> to vector<8x256xf32>
    %289 = arith.mulf %287, %288 : vector<8x256xf32>
    %290 = arith.addf %286, %289 : vector<8x256xf32>
    %c0_71 = arith.constant 0 : index
    %c0_72 = arith.constant 0 : index
    %291 = vector.load %arg17[%c0_71, %c0_72] : memref<8x1xf32, #tpu.memory_space<vmem>>, vector<8x1xf32>
    %292 = vector.broadcast %291 : vector<8x1xf32> to vector<8x256xf32>
    %293 = arith.addf %290, %292 : vector<8x256xf32>
    %cst_73 = arith.constant 0.000000e+00 : f32
    %294 = vector.broadcast %cst_73 : f32 to vector<8x256xf32>
    %295 = arith.cmpf oge, %293, %294 : vector<8x256xf32>
    %cst_74 = arith.constant 5.000000e-02 : f32
    %296 = vector.broadcast %cst_74 : f32 to vector<8x256xf32>
    %297 = arith.mulf %296, %293 : vector<8x256xf32>
    %298 = arith.select %295, %293, %297 : vector<8x256xi1>, vector<8x256xf32>
    %c24 = arith.constant 24 : index
    %c0_75 = arith.constant 0 : index
    %299 = vector.load %arg25[%c24, %c0_75] : memref<32x256xf32, #tpu.memory_space<vmem>>, vector<8x256xf32>
    tpu.vector_store %arg25[%c24, %c0_75], %298 {strides = array<i32>} : memref<32x256xf32, #tpu.memory_space<vmem>>, vector<8x256xf32>,
    %c0_76 = arith.constant 0 : index
    %c0_77 = arith.constant 0 : index
    %300 = vector.load %arg18[%c0_76, %c0_77] : memref<16x32xf32, #tpu.memory_space<vmem>>, vector<16x32xf32>
    %c0_78 = arith.constant 0 : index
    %c0_79 = arith.constant 0 : index
    %301 = vector.load %arg25[%c0_78, %c0_79] : memref<32x256xf32, #tpu.memory_space<vmem>>, vector<32x256xf32>
    %cst_80 = arith.constant dense<0.000000e+00> : vector<16x256xf32>
    %302 = tpu.matmul %300, %301, %cst_80 {dimension_numbers = #tpu.dot_dimension_numbers<[1], [0], [0], [1], [0, 0, 1, 1], [], []>} : vector<16x32xf32>, vector<32x256xf32>, vector<16x256xf32> -> vector<16x256xf32>
    %c0_81 = arith.constant 0 : index
    %c0_82 = arith.constant 0 : index
    %303 = vector.load %arg19[%c0_81, %c0_82] : memref<16x1xf32, #tpu.memory_space<vmem>>, vector<16x1xf32>
    %304 = vector.broadcast %303 : vector<16x1xf32> to vector<16x256xf32>
    %305 = arith.addf %302, %304 : vector<16x256xf32>
    %cst_83 = arith.constant dense<0.000000e+00> : vector<16xf32>
    %306 = vector.multi_reduction <add>, %305, %cst_83 [1] : vector<16x256xf32> to vector<16xf32>
    %307 = vector.shape_cast %306 : vector<16xf32> to vector<16x1xf32>
    %cst_84 = arith.constant 3.906250e-03 : f32
    %308 = vector.broadcast %cst_84 : f32 to vector<16x1xf32>
    %309 = arith.mulf %307, %308 : vector<16x1xf32>
    %310 = vector.broadcast %309 : vector<16x1xf32> to vector<16x256xf32>
    %311 = arith.subf %305, %310 : vector<16x256xf32>
    %312 = arith.mulf %311, %311 : vector<16x256xf32>
    %cst_85 = arith.constant dense<0.000000e+00> : vector<16xf32>
    %313 = vector.multi_reduction <add>, %312, %cst_85 [1] : vector<16x256xf32> to vector<16xf32>
    %314 = vector.shape_cast %313 : vector<16xf32> to vector<16x1xf32>
    %cst_86 = arith.constant 3.906250e-03 : f32
    %315 = vector.broadcast %cst_86 : f32 to vector<16x1xf32>
    %316 = arith.mulf %314, %315 : vector<16x1xf32>
    %317 = math.sqrt %316 : vector<16x1xf32>
    %318 = arith.addf %317, %309 : vector<16x1xf32>
    %c0_87 = arith.constant 0 : index
    %c0_88 = arith.constant 0 : index
    %319 = vector.load %arg20[%c0_87, %c0_88] : memref<16x1xf32, #tpu.memory_space<vmem>>, vector<16x1xf32>
    %320 = arith.mulf %319, %318 : vector<16x1xf32>
    %cst_89 = arith.constant dense<0.000000e+00> : vector<1xf32>
    %321 = vector.multi_reduction <add>, %320, %cst_89 [0] : vector<16x1xf32> to vector<1xf32>
    %322 = vector.shape_cast %321 : vector<1xf32> to vector<1x1xf32>
    %c0_90 = arith.constant 0 : index
    %c0_91 = arith.constant 0 : index
    %323 = vector.load %arg21[%c0_90, %c0_91] : memref<1x1xf32, #tpu.memory_space<vmem>>, vector<1x1xf32>
    %324 = arith.addf %322, %323 : vector<1x1xf32>
    %cst_92 = arith.constant 0.000000e+00 : f32
    %325 = vector.broadcast %cst_92 : f32 to vector<1x1xf32>
    %326 = arith.maximumf %324, %325 : vector<1x1xf32>
    %c0_93 = arith.constant 0 : index
    %c0_94 = arith.constant 0 : index
    %327 = vector.load %arg22[%c0_93, %c0_94] : memref<16x1xf32, #tpu.memory_space<vmem>>, vector<16x1xf32>
    %328 = vector.broadcast %326 : vector<1x1xf32> to vector<16x1xf32>
    %329 = arith.mulf %327, %328 : vector<16x1xf32>
    %cst_95 = arith.constant dense<0.000000e+00> : vector<16xf32>
    %330 = vector.multi_reduction <add>, %329, %cst_95 [1] : vector<16x1xf32> to vector<16xf32>
    %331 = vector.shape_cast %330 : vector<16xf32> to vector<16x1xf32>
    %c0_96 = arith.constant 0 : index
    %c0_97 = arith.constant 0 : index
    %332 = vector.load %arg23[%c0_96, %c0_97] : memref<16x1xf32, #tpu.memory_space<vmem>>, vector<16x1xf32>
    %333 = arith.addf %331, %332 : vector<16x1xf32>
    %cst_98 = arith.constant 0.000000e+00 : f32
    %334 = vector.broadcast %cst_98 : f32 to vector<16x1xf32>
    %335 = arith.subf %334, %333 : vector<16x1xf32>
    %336 = math.exp %335 : vector<16x1xf32>
    %cst_99 = arith.constant 1.000000e+00 : f32
    %337 = vector.broadcast %cst_99 : f32 to vector<16x1xf32>
    %338 = arith.addf %337, %336 : vector<16x1xf32>
    %cst_100 = arith.constant 1.000000e+00 : f32
    %339 = vector.broadcast %cst_100 : f32 to vector<16x1xf32>
    %340 = arith.divf %339, %338 : vector<16x1xf32>
    %341 = vector.broadcast %340 : vector<16x1xf32> to vector<16x256xf32>
    %342 = arith.mulf %305, %341 : vector<16x256xf32>
    %c0_101 = arith.constant 0 : index
    %c0_102 = arith.constant 0 : index
    %c0_103 = arith.constant 0 : index
    %343 = vector.load %arg24[%c0_101, %c0_102, %c0_103] : memref<1x16x256xf32, #tpu.memory_space<vmem>>, vector<1x16x256xf32>
    %344 = vector.shape_cast %343 : vector<1x16x256xf32> to vector<16x256xf32>
    %345 = vector.shape_cast %342 : vector<16x256xf32> to vector<1x16x256xf32>
    tpu.vector_store %arg24[%c0_101, %c0_102, %c0_103], %345 {strides = array<i32>} : memref<1x16x256xf32, #tpu.memory_space<vmem>>, vector<1x16x256xf32>,
    return
  }
  func.func @transform_0(%arg0: i32) -> (i32, i32, i32) {
    %c0_i32 = arith.constant 0 : i32
    %c0_i32_0 = arith.constant 0 : i32
    %c0_i32_1 = arith.constant 0 : i32
    return %arg0, %c0_i32, %c0_i32_0 : i32, i32, i32
  }
  func.func @transform_1(%arg0: i32) -> (i32, i32) {
    %c0_i32 = arith.constant 0 : i32
    %c0_i32_0 = arith.constant 0 : i32
    %c0_i32_1 = arith.constant 0 : i32
    return %c0_i32, %c0_i32_0 : i32, i32
  }
  func.func @transform_2(%arg0: i32) -> (i32, i32) {
    %c0_i32 = arith.constant 0 : i32
    %c0_i32_0 = arith.constant 0 : i32
    %c0_i32_1 = arith.constant 0 : i32
    return %c0_i32, %c0_i32_0 : i32, i32
  }
  func.func @transform_3(%arg0: i32) -> (i32, i32) {
    %c0_i32 = arith.constant 0 : i32
    %c0_i32_0 = arith.constant 0 : i32
    %c0_i32_1 = arith.constant 0 : i32
    return %c0_i32, %c0_i32_0 : i32, i32
  }
  func.func @transform_4(%arg0: i32) -> (i32, i32) {
    %c0_i32 = arith.constant 0 : i32
    %c0_i32_0 = arith.constant 0 : i32
    %c0_i32_1 = arith.constant 0 : i32
    return %c0_i32, %c0_i32_0 : i32, i32
  }
  func.func @transform_5(%arg0: i32) -> (i32, i32) {
    %c0_i32 = arith.constant 0 : i32
    %c0_i32_0 = arith.constant 0 : i32
    %c0_i32_1 = arith.constant 0 : i32
    return %c0_i32, %c0_i32_0 : i32, i32
  }
  func.func @transform_6(%arg0: i32) -> (i32, i32) {
    %c0_i32 = arith.constant 0 : i32
    %c0_i32_0 = arith.constant 0 : i32
    %c0_i32_1 = arith.constant 0 : i32
    return %c0_i32, %c0_i32_0 : i32, i32
  }
  func.func @transform_7(%arg0: i32) -> (i32, i32) {
    %c0_i32 = arith.constant 0 : i32
    %c0_i32_0 = arith.constant 0 : i32
    %c0_i32_1 = arith.constant 0 : i32
    return %c0_i32, %c0_i32_0 : i32, i32
  }
  func.func @transform_8(%arg0: i32) -> (i32, i32) {
    %c0_i32 = arith.constant 0 : i32
    %c0_i32_0 = arith.constant 0 : i32
    %c0_i32_1 = arith.constant 0 : i32
    return %c0_i32, %c0_i32_0 : i32, i32
  }
  func.func @transform_9(%arg0: i32) -> (i32, i32) {
    %c0_i32 = arith.constant 0 : i32
    %c0_i32_0 = arith.constant 0 : i32
    %c0_i32_1 = arith.constant 0 : i32
    return %c0_i32, %c0_i32_0 : i32, i32
  }
  func.func @transform_10(%arg0: i32) -> (i32, i32) {
    %c0_i32 = arith.constant 0 : i32
    %c0_i32_0 = arith.constant 0 : i32
    %c0_i32_1 = arith.constant 0 : i32
    return %c0_i32, %c0_i32_0 : i32, i32
  }
  func.func @transform_11(%arg0: i32) -> (i32, i32) {
    %c0_i32 = arith.constant 0 : i32
    %c0_i32_0 = arith.constant 0 : i32
    %c0_i32_1 = arith.constant 0 : i32
    return %c0_i32, %c0_i32_0 : i32, i32
  }
  func.func @transform_12(%arg0: i32) -> (i32, i32) {
    %c0_i32 = arith.constant 0 : i32
    %c0_i32_0 = arith.constant 0 : i32
    %c0_i32_1 = arith.constant 0 : i32
    return %c0_i32, %c0_i32_0 : i32, i32
  }
  func.func @transform_13(%arg0: i32) -> (i32, i32) {
    %c0_i32 = arith.constant 0 : i32
    %c0_i32_0 = arith.constant 0 : i32
    %c0_i32_1 = arith.constant 0 : i32
    return %c0_i32, %c0_i32_0 : i32, i32
  }
  func.func @transform_14(%arg0: i32) -> (i32, i32) {
    %c0_i32 = arith.constant 0 : i32
    %c0_i32_0 = arith.constant 0 : i32
    %c0_i32_1 = arith.constant 0 : i32
    return %c0_i32, %c0_i32_0 : i32, i32
  }
  func.func @transform_15(%arg0: i32) -> (i32, i32) {
    %c0_i32 = arith.constant 0 : i32
    %c0_i32_0 = arith.constant 0 : i32
    %c0_i32_1 = arith.constant 0 : i32
    return %c0_i32, %c0_i32_0 : i32, i32
  }
  func.func @transform_16(%arg0: i32) -> (i32, i32) {
    %c0_i32 = arith.constant 0 : i32
    %c0_i32_0 = arith.constant 0 : i32
    %c0_i32_1 = arith.constant 0 : i32
    return %c0_i32, %c0_i32_0 : i32, i32
  }
  func.func @transform_17(%arg0: i32) -> (i32, i32) {
    %c0_i32 = arith.constant 0 : i32
    %c0_i32_0 = arith.constant 0 : i32
    %c0_i32_1 = arith.constant 0 : i32
    return %c0_i32, %c0_i32_0 : i32, i32
  }
  func.func @transform_18(%arg0: i32) -> (i32, i32) {
    %c0_i32 = arith.constant 0 : i32
    %c0_i32_0 = arith.constant 0 : i32
    %c0_i32_1 = arith.constant 0 : i32
    return %c0_i32, %c0_i32_0 : i32, i32
  }
  func.func @transform_19(%arg0: i32) -> (i32, i32) {
    %c0_i32 = arith.constant 0 : i32
    %c0_i32_0 = arith.constant 0 : i32
    %c0_i32_1 = arith.constant 0 : i32
    return %c0_i32, %c0_i32_0 : i32, i32
  }
  func.func @transform_20(%arg0: i32) -> (i32, i32) {
    %c0_i32 = arith.constant 0 : i32
    %c0_i32_0 = arith.constant 0 : i32
    %c0_i32_1 = arith.constant 0 : i32
    return %c0_i32, %c0_i32_0 : i32, i32
  }
  func.func @transform_21(%arg0: i32) -> (i32, i32) {
    %c0_i32 = arith.constant 0 : i32
    %c0_i32_0 = arith.constant 0 : i32
    %c0_i32_1 = arith.constant 0 : i32
    return %c0_i32, %c0_i32_0 : i32, i32
  }
  func.func @transform_22(%arg0: i32) -> (i32, i32) {
    %c0_i32 = arith.constant 0 : i32
    %c0_i32_0 = arith.constant 0 : i32
    %c0_i32_1 = arith.constant 0 : i32
    return %c0_i32, %c0_i32_0 : i32, i32
  }
  func.func @transform_23(%arg0: i32) -> (i32, i32, i32) {
    %c0_i32 = arith.constant 0 : i32
    %c0_i32_0 = arith.constant 0 : i32
    %c0_i32_1 = arith.constant 0 : i32
    return %arg0, %c0_i32, %c0_i32_0 : i32, i32, i32
  }
}

</mosaic_0001>

<llo_original>
// kernel: rfdb3_forward.1
$region0: #{rfdb3_forward.1}
  #allocation0 [shape = 'u32[]', space=smem, size = 0x4, offset = 0x4, fixed_abs, tag = 'smem constant byte address 0x4 - core index']
  #allocation1 [shape = 'u32[144,128]{1,0:T(1,128)}', space=vmem, size = 0x12000, scoped, tag = 'internal scratch']
  #allocation2 [shape = 'f32[32,256]{1,0:T(8,128)}', space=vmem, size = 0x8000, scoped, tag = 'scratch operand']
  #allocation3 [shape = 'f32[1,1]{1,0:T(1,128)S(1)}', space=vmem, size = 0x200, scoped, tag = 'scoped memory for rfdb3_forward.1']
  %s0 = inlined_call_operand.vmem [shape: f32[2,16,256], index: 0, kind: input, shape index: {}]
  %s1 = inlined_call_operand.vmem [shape: f32[9,256], index: 1, kind: input, shape index: {}]
  %s2 = inlined_call_operand.vmem [shape: f32[12,16], index: 2, kind: input, shape index: {}]
  %s3 = inlined_call_operand.vmem [shape: f32[12,1], index: 3, kind: input, shape index: {}]
  %s4 = inlined_call_operand.vmem [shape: f32[9,4], index: 4, kind: input, shape index: {}]
  %s5 = inlined_call_operand.vmem [shape: f32[9,1], index: 5, kind: input, shape index: {}]
  %s6 = inlined_call_operand.vmem [shape: f32[24,16], index: 6, kind: input, shape index: {}]
  %s7 = inlined_call_operand.vmem [shape: f32[24,1], index: 7, kind: input, shape index: {}]
  %s8 = inlined_call_operand.vmem [shape: f32[16,9], index: 8, kind: input, shape index: {}]
  %s9 = inlined_call_operand.vmem [shape: f32[16,1], index: 9, kind: input, shape index: {}]
  %s10 = inlined_call_operand.vmem [shape: f32[12,16], index: 10, kind: input, shape index: {}]
  %s11 = inlined_call_operand.vmem [shape: f32[12,1], index: 11, kind: input, shape index: {}]
  %s12 = inlined_call_operand.vmem [shape: f32[9,4], index: 12, kind: input, shape index: {}]
  %s13 = inlined_call_operand.vmem [shape: f32[9,1], index: 13, kind: input, shape index: {}]
  %s14 = inlined_call_operand.vmem [shape: f32[8,16], index: 14, kind: input, shape index: {}]
  %s15 = inlined_call_operand.vmem [shape: f32[8,9], index: 15, kind: input, shape index: {}]
  %s16 = inlined_call_operand.vmem [shape: f32[8,1], index: 16, kind: input, shape index: {}]
  %s17 = inlined_call_operand.vmem [shape: f32[16,32], index: 17, kind: input, shape index: {}]
  %s18 = inlined_call_operand.vmem [shape: f32[16,1], index: 18, kind: input, shape index: {}]
  %s19 = inlined_call_operand.vmem [shape: f32[16,1], index: 19, kind: input, shape index: {}]
  %s20 = inlined_call_operand.<no memory space> [shape: f32[1,1], index: 20, kind: input, shape index: {}]
  %s21 = inlined_call_operand.vmem [shape: f32[16,1], index: 21, kind: input, shape index: {}]
  %s22 = inlined_call_operand.vmem [shape: f32[16,1], index: 22, kind: input, shape index: {}]
  %s23 = inlined_call_operand.vmem [shape: f32[2,16,256], index: 23, kind: output, shape index: {}]
  %s24 = sld [smem:[#allocation0]]
  $region125: #{rfdb3_forward.1} parent=0
    _
  %s26 = ssub.s32 1, %s24
  %s27 = scalar_select 0, %s26, %s24
  %v28 = vstv %s20
  %29 = vst [vmem:[#allocation3] sm:$0x1] %v28
  loop: start=0, step=1, limit=4
  $region2: #{rfdb3_forward.1} parent=0 // loop_pre_header
    _
  $region3: #{rfdb3_forward.1} parent=0 // loop_header
    %s31 = sphi 0, %s35
    %p32 = scmp.ge.s32.totalorder %s31, 4
    %s41 = sphi 0, %s43
    %s44 = sphi 0, %s41
    %s45 = sphi 0, %s44
    %s61 = sphi 0, %s45
    %s65 = sphi 0, %s65
    %s67 = sphi 0, %s65
    %s68 = sphi 0, %s67
    %s82 = sphi 0, %s68
    %s86 = sphi 0, %s86
    %s88 = sphi 0, %s86
    %s89 = sphi 0, %s88
    %s103 = sphi 0, %s89
    %s107 = sphi 0, %s107
    %s109 = sphi 0, %s107
    %s110 = sphi 0, %s109
    %s124 = sphi 0, %s110
    %s128 = sphi 0, %s128
    %s130 = sphi 0, %s128
    %s131 = sphi 0, %s130
    %s145 = sphi 0, %s131
    %s149 = sphi 0, %s149
    %s151 = sphi 0, %s149
    %s152 = sphi 0, %s151
    %s166 = sphi 0, %s152
    %s170 = sphi 0, %s170
    %s172 = sphi 0, %s170
    %s173 = sphi 0, %s172
    %s187 = sphi 0, %s173
    %s191 = sphi 0, %s191
    %s193 = sphi 0, %s191
    %s194 = sphi 0, %s193
    %s208 = sphi 0, %s194
    %s212 = sphi 0, %s212
    %s214 = sphi 0, %s212
    %s215 = sphi 0, %s214
    %s229 = sphi 0, %s215
    %s233 = sphi 0, %s233
    %s235 = sphi 0, %s233
    %s236 = sphi 0, %s235
    %s250 = sphi 0, %s236
    %s254 = sphi 0, %s254
    %s256 = sphi 0, %s254
    %s257 = sphi 0, %s256
    %s271 = sphi 0, %s257
    %s275 = sphi 0, %s275
    %s277 = sphi 0, %s275
    %s278 = sphi 0, %s277
    %s292 = sphi 0, %s278
    %s296 = sphi 0, %s296
    %s298 = sphi 0, %s296
    %s299 = sphi 0, %s298
    %s313 = sphi 0, %s299
    %s317 = sphi 0, %s317
    %s319 = sphi 0, %s317
    %s320 = sphi 0, %s319
    %s334 = sphi 0, %s320
    %s338 = sphi 0, %s338
    %s340 = sphi 0, %s338
    %s341 = sphi 0, %s340
    %s355 = sphi 0, %s341
    %s359 = sphi 0, %s359
    %s361 = sphi 0, %s359
    %s362 = sphi 0, %s361
    %s376 = sphi 0, %s362
    %s380 = sphi 0, %s380
    %s382 = sphi 0, %s380
    %s383 = sphi 0, %s382
    %s397 = sphi 0, %s383
    %s401 = sphi 0, %s401
    %s403 = sphi 0, %s401
    %s404 = sphi 0, %s403
    %s418 = sphi 0, %s404
    %s422 = sphi 0, %s422
    %s424 = sphi 0, %s422
    %s425 = sphi 0, %s424
    %s439 = sphi 0, %s425
    %s443 = sphi 0, %s443
    %s445 = sphi 0, %s443
    %s446 = sphi 0, %s445
    %s460 = sphi 0, %s446
    %s464 = sphi 0, %s464
    %s466 = sphi 0, %s464
    %s467 = sphi 0, %s466
    %s481 = sphi 0, %s467
    %s485 = sphi 0, %s485
    %s487 = sphi 0, %s485
    %s488 = sphi 0, %s487
    %s502 = sphi 0, %s488
    %s506 = sphi 0, %s506
    %s508 = sphi 0, %s506
    %s509 = sphi 0, %s508
    %s523 = sphi 0, %s509
    %s529 = sphi 0, %s531
    %s532 = sphi 0, %s529
    %s533 = sphi 0, %s532
    %s549 = sphi 0, %s533
  $region4: #{rfdb3_forward.1} parent=0 // loop_header_branch
    %34 = sbr.rel (%p32) target = $region8
  $region5: #{rfdb3_forward.1} parent=0 // loop_body
    %s36 = ssub.s32 %s31, 1
    %s37 = ssub.s32 %s31, 2
    %s38 = sadd.s32 %s31, 1
    %s39 = ssub.s32 %s31, %s38
    %p40 = scmp.eq.s32.totalorder %s39, 0
    %s42 = sadd.s32 %s41, 1
    %s43 = scalar_select %p40, %s41, %s42
    %p46 = pneg %p40
    %p47 = scmp.eq.s32.totalorder %s31, 1
    %p48 = por %p46, %p47
    %p49 = scmp.ne.s32.totalorder %s41, %s44
    %p50 = scmp.eq.s32.totalorder %s31, 0
    %p51 = por %p49, %p50
    %p52 = scmp.ne.s32.totalorder %s41, %s44
    %p53 = scmp.eq.s32.totalorder %s36, 1
    %p54 = por %p52, %p53
    %p55 = scmp.ne.s32.totalorder %s44, %s45
    %p56 = scmp.eq.s32.totalorder %s36, 0
    %p57 = por %p55, %p56
    %p58 = scmp.ne.s32.totalorder %s44, %s45
    %p59 = scmp.eq.s32.totalorder %s37, 1
    %p60 = por %p58, %p59
    %p62 = scmp.ne.s32.totalorder %s45, %s61
    %p63 = scmp.eq.s32.totalorder %s37, 0
    %p64 = por %p62, %p63
    %s66 = sadd.s32 %s65, 1
    %p69 = scmp.eq.s32.totalorder %s31, 1
    %p70 = scmp.ne.s32.totalorder %s65, %s67
    %p71 = scmp.eq.s32.totalorder %s31, 0
    %p72 = por %p70, %p71
    %p73 = scmp.ne.s32.totalorder %s65, %s67
    %p74 = scmp.eq.s32.totalorder %s36, 1
    %p75 = por %p73, %p74
    %p76 = scmp.ne.s32.totalorder %s67, %s68
    %p77 = scmp.eq.s32.totalorder %s36, 0
    %p78 = por %p76, %p77
    %p79 = scmp.ne.s32.totalorder %s67, %s68
    %p80 = scmp.eq.s32.totalorder %s37, 1
    %p81 = por %p79, %p80
    %p83 = scmp.ne.s32.totalorder %s68, %s82
    %p84 = scmp.eq.s32.totalorder %s37, 0
    %p85 = por %p83, %p84
    %s87 = sadd.s32 %s86, 1
    %p90 = scmp.eq.s32.totalorder %s31, 1
    %p91 = scmp.ne.s32.totalorder %s86, %s88
    %p92 = scmp.eq.s32.totalorder %s31, 0
    %p93 = por %p91, %p92
    %p94 = scmp.ne.s32.totalorder %s86, %s88
    %p95 = scmp.eq.s32.totalorder %s36, 1
    %p96 = por %p94, %p95
    %p97 = scmp.ne.s32.totalorder %s88, %s89
    %p98 = scmp.eq.s32.totalorder %s36, 0
    %p99 = por %p97, %p98
    %p100 = scmp.ne.s32.totalorder %s88, %s89
    %p101 = scmp.eq.s32.totalorder %s37, 1
    %p102 = por %p100, %p101
    %p104 = scmp.ne.s32.totalorder %s89, %s103
    %p105 = scmp.eq.s32.totalorder %s37, 0
    %p106 = por %p104, %p105
    %s108 = sadd.s32 %s107, 1
    %p111 = scmp.eq.s32.totalorder %s31, 1
    %p112 = scmp.ne.s32.totalorder %s107, %s109
    %p113 = scmp.eq.s32.totalorder %s31, 0
    %p114 = por %p112, %p113
    %p115 = scmp.ne.s32.totalorder %s107, %s109
    %p116 = scmp.eq.s32.totalorder %s36, 1
    %p117 = por %p115, %p116
    %p118 = scmp.ne.s32.totalorder %s109, %s110
    %p119 = scmp.eq.s32.totalorder %s36, 0
    %p120 = por %p118, %p119
    %p121 = scmp.ne.s32.totalorder %s109, %s110
    %p122 = scmp.eq.s32.totalorder %s37, 1
    %p123 = por %p121, %p122
    %p125 = scmp.ne.s32.totalorder %s110, %s124
    %p126 = scmp.eq.s32.totalorder %s37, 0
    %p127 = por %p125, %p126
    %s129 = sadd.s32 %s128, 1
    %p132 = scmp.eq.s32.totalorder %s31, 1
    %p133 = scmp.ne.s32.totalorder %s128, %s130
    %p134 = scmp.eq.s32.totalorder %s31, 0
    %p135 = por %p133, %p134
    %p136 = scmp.ne.s32.totalorder %s128, %s130
    %p137 = scmp.eq.s32.totalorder %s36, 1
    %p138 = por %p136, %p137
    %p139 = scmp.ne.s32.totalorder %s130, %s131
    %p140 = scmp.eq.s32.totalorder %s36, 0
    %p141 = por %p139, %p140
    %p142 = scmp.ne.s32.totalorder %s130, %s131
    %p143 = scmp.eq.s32.totalorder %s37, 1
    %p144 = por %p142, %p143
    %p146 = scmp.ne.s32.totalorder %s131, %s145
    %p147 = scmp.eq.s32.totalorder %s37, 0
    %p148 = por %p146, %p147
    %s150 = sadd.s32 %s149, 1
    %p153 = scmp.eq.s32.totalorder %s31, 1
    %p154 = scmp.ne.s32.totalorder %s149, %s151
    %p155 = scmp.eq.s32.totalorder %s31, 0
    %p156 = por %p154, %p155
    %p157 = scmp.ne.s32.totalorder %s149, %s151
    %p158 = scmp.eq.s32.totalorder %s36, 1
    %p159 = por %p157, %p158
    %p160 = scmp.ne.s32.totalorder %s151, %s152
    %p161 = scmp.eq.s32.totalorder %s36, 0
    %p162 = por %p160, %p161
    %p163 = scmp.ne.s32.totalorder %s151, %s152
    %p164 = scmp.eq.s32.totalorder %s37, 1
    %p165 = por %p163, %p164
    %p167 = scmp.ne.s32.totalorder %s152, %s166
    %p168 = scmp.eq.s32.totalorder %s37, 0
    %p169 = por %p167, %p168
    %s171 = sadd.s32 %s170, 1
    %p174 = scmp.eq.s32.totalorder %s31, 1
    %p175 = scmp.ne.s32.totalorder %s170, %s172
    %p176 = scmp.eq.s32.totalorder %s31, 0
    %p177 = por %p175, %p176
    %p178 = scmp.ne.s32.totalorder %s170, %s172
    %p179 = scmp.eq.s32.totalorder %s36, 1
    %p180 = por %p178, %p179
    %p181 = scmp.ne.s32.totalorder %s172, %s173
    %p182 = scmp.eq.s32.totalorder %s36, 0
    %p183 = por %p181, %p182
    %p184 = scmp.ne.s32.totalorder %s172, %s173
    %p185 = scmp.eq.s32.totalorder %s37, 1
    %p186 = por %p184, %p185
    %p188 = scmp.ne.s32.totalorder %s173, %s187
    %p189 = scmp.eq.s32.totalorder %s37, 0
    %p190 = por %p188, %p189
    %s192 = sadd.s32 %s191, 1
    %p195 = scmp.eq.s32.totalorder %s31, 1
    %p196 = scmp.ne.s32.totalorder %s191, %s193
    %p197 = scmp.eq.s32.totalorder %s31, 0
    %p198 = por %p196, %p197
    %p199 = scmp.ne.s32.totalorder %s191, %s193
    %p200 = scmp.eq.s32.totalorder %s36, 1
    %p201 = por %p199, %p200
    %p202 = scmp.ne.s32.totalorder %s193, %s194
    %p203 = scmp.eq.s32.totalorder %s36, 0
    %p204 = por %p202, %p203
    %p205 = scmp.ne.s32.totalorder %s193, %s194
    %p206 = scmp.eq.s32.totalorder %s37, 1
    %p207 = por %p205, %p206
    %p209 = scmp.ne.s32.totalorder %s194, %s208
    %p210 = scmp.eq.s32.totalorder %s37, 0
    %p211 = por %p209, %p210
    %s213 = sadd.s32 %s212, 1
    %p216 = scmp.eq.s32.totalorder %s31, 1
    %p217 = scmp.ne.s32.totalorder %s212, %s214
    %p218 = scmp.eq.s32.totalorder %s31, 0
    %p219 = por %p217, %p218
    %p220 = scmp.ne.s32.totalorder %s212, %s214
    %p221 = scmp.eq.s32.totalorder %s36, 1
    %p222 = por %p220, %p221
    %p223 = scmp.ne.s32.totalorder %s214, %s215
    %p224 = scmp.eq.s32.totalorder %s36, 0
    %p225 = por %p223, %p224
    %p226 = scmp.ne.s32.totalorder %s214, %s215
    %p227 = scmp.eq.s32.totalorder %s37, 1
    %p228 = por %p226, %p227
    %p230 = scmp.ne.s32.totalorder %s215, %s229
    %p231 = scmp.eq.s32.totalorder %s37, 0
    %p232 = por %p230, %p231
    %s234 = sadd.s32 %s233, 1
    %p237 = scmp.eq.s32.totalorder %s31, 1
    %p238 = scmp.ne.s32.totalorder %s233, %s235
    %p239 = scmp.eq.s32.totalorder %s31, 0
    %p240 = por %p238, %p239
    %p241 = scmp.ne.s32.totalorder %s233, %s235
    %p242 = scmp.eq.s32.totalorder %s36, 1
    %p243 = por %p241, %p242
    %p244 = scmp.ne.s32.totalorder %s235, %s236
    %p245 = scmp.eq.s32.totalorder %s36, 0
    %p246 = por %p244, %p245
    %p247 = scmp.ne.s32.totalorder %s235, %s236
    %p248 = scmp.eq.s32.totalorder %s37, 1
    %p249 = por %p247, %p248
    %p251 = scmp.ne.s32.totalorder %s236, %s250
    %p252 = scmp.eq.s32.totalorder %s37, 0
    %p253 = por %p251, %p252
    %s255 = sadd.s32 %s254, 1
    %p258 = scmp.eq.s32.totalorder %s31, 1
    %p259 = scmp.ne.s32.totalorder %s254, %s256
    %p260 = scmp.eq.s32.totalorder %s31, 0
    %p261 = por %p259, %p260
    %p262 = scmp.ne.s32.totalorder %s254, %s256
    %p263 = scmp.eq.s32.totalorder %s36, 1
    %p264 = por %p262, %p263
    %p265 = scmp.ne.s32.totalorder %s256, %s257
    %p266 = scmp.eq.s32.totalorder %s36, 0
    %p267 = por %p265, %p266
    %p268 = scmp.ne.s32.totalorder %s256, %s257
    %p269 = scmp.eq.s32.totalorder %s37, 1
    %p270 = por %p268, %p269
    %p272 = scmp.ne.s32.totalorder %s257, %s271
    %p273 = scmp.eq.s32.totalorder %s37, 0
    %p274 = por %p272, %p273
    %s276 = sadd.s32 %s275, 1
    %p279 = scmp.eq.s32.totalorder %s31, 1
    %p280 = scmp.ne.s32.totalorder %s275, %s277
    %p281 = scmp.eq.s32.totalorder %s31, 0
    %p282 = por %p280, %p281
    %p283 = scmp.ne.s32.totalorder %s275, %s277
    %p284 = scmp.eq.s32.totalorder %s36, 1
    %p285 = por %p283, %p284
    %p286 = scmp.ne.s32.totalorder %s277, %s278
    %p287 = scmp.eq.s32.totalorder %s36, 0
    %p288 = por %p286, %p287
    %p289 = scmp.ne.s32.totalorder %s277, %s278
    %p290 = scmp.eq.s32.totalorder %s37, 1
    %p291 = por %p289, %p290
    %p293 = scmp.ne.s32.totalorder %s278, %s292
    %p294 = scmp.eq.s32.totalorder %s37, 0
    %p295 = por %p293, %p294
    %s297 = sadd.s32 %s296, 1
    %p300 = scmp.eq.s32.totalorder %s31, 1
    %p301 = scmp.ne.s32.totalorder %s296, %s298
    %p302 = scmp.eq.s32.totalorder %s31, 0
    %p303 = por %p301, %p302
    %p304 = scmp.ne.s32.totalorder %s296, %s298
    %p305 = scmp.eq.s32.totalorder %s36, 1
    %p306 = por %p304, %p305
    %p307 = scmp.ne.s32.totalorder %s298, %s299
    %p308 = scmp.eq.s32.totalorder %s36, 0
    %p309 = por %p307, %p308
    %p310 = scmp.ne.s32.totalorder %s298, %s299
    %p311 = scmp.eq.s32.totalorder %s37, 1
    %p312 = por %p310, %p311
    %p314 = scmp.ne.s32.totalorder %s299, %s313
    %p315 = scmp.eq.s32.totalorder %s37, 0
    %p316 = por %p314, %p315
    %s318 = sadd.s32 %s317, 1
    %p321 = scmp.eq.s32.totalorder %s31, 1
    %p322 = scmp.ne.s32.totalorder %s317, %s319
    %p323 = scmp.eq.s32.totalorder %s31, 0
    %p324 = por %p322, %p323
    %p325 = scmp.ne.s32.totalorder %s317, %s319
    %p326 = scmp.eq.s32.totalorder %s36, 1
    %p327 = por %p325, %p326
    %p328 = scmp.ne.s32.totalorder %s319, %s320
    %p329 = scmp.eq.s32.totalorder %s36, 0
    %p330 = por %p328, %p329
    %p331 = scmp.ne.s32.totalorder %s319, %s320
    %p332 = scmp.eq.s32.totalorder %s37, 1
    %p333 = por %p331, %p332
    %p335 = scmp.ne.s32.totalorder %s320, %s334
    %p336 = scmp.eq.s32.totalorder %s37, 0
    %p337 = por %p335, %p336
    %s339 = sadd.s32 %s338, 1
    %p342 = scmp.eq.s32.totalorder %s31, 1
    %p343 = scmp.ne.s32.totalorder %s338, %s340
    %p344 = scmp.eq.s32.totalorder %s31, 0
    %p345 = por %p343, %p344
    %p346 = scmp.ne.s32.totalorder %s338, %s340
    %p347 = scmp.eq.s32.totalorder %s36, 1
    %p348 = por %p346, %p347
    %p349 = scmp.ne.s32.totalorder %s340, %s341
    %p350 = scmp.eq.s32.totalorder %s36, 0
    %p351 = por %p349, %p350
    %p352 = scmp.ne.s32.totalorder %s340, %s341
    %p353 = scmp.eq.s32.totalorder %s37, 1
    %p354 = por %p352, %p353
    %p356 = scmp.ne.s32.totalorder %s341, %s355
    %p357 = scmp.eq.s32.totalorder %s37, 0
    %p358 = por %p356, %p357
    %s360 = sadd.s32 %s359, 1
    %p363 = scmp.eq.s32.totalorder %s31, 1
    %p364 = scmp.ne.s32.totalorder %s359, %s361
    %p365 = scmp.eq.s32.totalorder %s31, 0
    %p366 = por %p364, %p365
    %p367 = scmp.ne.s32.totalorder %s359, %s361
    %p368 = scmp.eq.s32.totalorder %s36, 1
    %p369 = por %p367, %p368
    %p370 = scmp.ne.s32.totalorder %s361, %s362
    %p371 = scmp.eq.s32.totalorder %s36, 0
    %p372 = por %p370, %p371
    %p373 = scmp.ne.s32.totalorder %s361, %s362
    %p374 = scmp.eq.s32.totalorder %s37, 1
    %p375 = por %p373, %p374
    %p377 = scmp.ne.s32.totalorder %s362, %s376
    %p378 = scmp.eq.s32.totalorder %s37, 0
    %p379 = por %p377, %p378
    %s381 = sadd.s32 %s380, 1
    %p384 = scmp.eq.s32.totalorder %s31, 1
    %p385 = scmp.ne.s32.totalorder %s380, %s382
    %p386 = scmp.eq.s32.totalorder %s31, 0
    %p387 = por %p385, %p386
    %p388 = scmp.ne.s32.totalorder %s380, %s382
    %p389 = scmp.eq.s32.totalorder %s36, 1
    %p390 = por %p388, %p389
    %p391 = scmp.ne.s32.totalorder %s382, %s383
    %p392 = scmp.eq.s32.totalorder %s36, 0
    %p393 = por %p391, %p392
    %p394 = scmp.ne.s32.totalorder %s382, %s383
    %p395 = scmp.eq.s32.totalorder %s37, 1
    %p396 = por %p394, %p395
    %p398 = scmp.ne.s32.totalorder %s383, %s397
    %p399 = scmp.eq.s32.totalorder %s37, 0
    %p400 = por %p398, %p399
    %s402 = sadd.s32 %s401, 1
    %p405 = scmp.eq.s32.totalorder %s31, 1
    %p406 = scmp.ne.s32.totalorder %s401, %s403
    %p407 = scmp.eq.s32.totalorder %s31, 0
    %p408 = por %p406, %p407
    %p409 = scmp.ne.s32.totalorder %s401, %s403
    %p410 = scmp.eq.s32.totalorder %s36, 1
    %p411 = por %p409, %p410
    %p412 = scmp.ne.s32.totalorder %s403, %s404
    %p413 = scmp.eq.s32.totalorder %s36, 0
    %p414 = por %p412, %p413
    %p415 = scmp.ne.s32.totalorder %s403, %s404
    %p416 = scmp.eq.s32.totalorder %s37, 1
    %p417 = por %p415, %p416
    %p419 = scmp.ne.s32.totalorder %s404, %s418
    %p420 = scmp.eq.s32.totalorder %s37, 0
    %p421 = por %p419, %p420
    %s423 = sadd.s32 %s422, 1
    %p426 = scmp.eq.s32.totalorder %s31, 1
    %p427 = scmp.ne.s32.totalorder %s422, %s424
    %p428 = scmp.eq.s32.totalorder %s31, 0
    %p429 = por %p427, %p428
    %p430 = scmp.ne.s32.totalorder %s422, %s424
    %p431 = scmp.eq.s32.totalorder %s36, 1
    %p432 = por %p430, %p431
    %p433 = scmp.ne.s32.totalorder %s424, %s425
    %p434 = scmp.eq.s32.totalorder %s36, 0
    %p435 = por %p433, %p434
    %p436 = scmp.ne.s32.totalorder %s424, %s425
    %p437 = scmp.eq.s32.totalorder %s37, 1
    %p438 = por %p436, %p437
    %p440 = scmp.ne.s32.totalorder %s425, %s439
    %p441 = scmp.eq.s32.totalorder %s37, 0
    %p442 = por %p440, %p441
    %s444 = sadd.s32 %s443, 1
    %p447 = scmp.eq.s32.totalorder %s31, 1
    %p448 = scmp.ne.s32.totalorder %s443, %s445
    %p449 = scmp.eq.s32.totalorder %s31, 0
    %p450 = por %p448, %p449
    %p451 = scmp.ne.s32.totalorder %s443, %s445
    %p452 = scmp.eq.s32.totalorder %s36, 1
    %p453 = por %p451, %p452
    %p454 = scmp.ne.s32.totalorder %s445, %s446
    %p455 = scmp.eq.s32.totalorder %s36, 0
    %p456 = por %p454, %p455
    %p457 = scmp.ne.s32.totalorder %s445, %s446
    %p458 = scmp.eq.s32.totalorder %s37, 1
    %p459 = por %p457, %p458
    %p461 = scmp.ne.s32.totalorder %s446, %s460
    %p462 = scmp.eq.s32.totalorder %s37, 0
    %p463 = por %p461, %p462
    %s465 = sadd.s32 %s464, 1
    %p468 = scmp.eq.s32.totalorder %s31, 1
    %p469 = scmp.ne.s32.totalorder %s464, %s466
    %p470 = scmp.eq.s32.totalorder %s31, 0
    %p471 = por %p469, %p470
    %p472 = scmp.ne.s32.totalorder %s464, %s466
    %p473 = scmp.eq.s32.totalorder %s36, 1
    %p474 = por %p472, %p473
    %p475 = scmp.ne.s32.totalorder %s466, %s467
    %p476 = scmp.eq.s32.totalorder %s36, 0
    %p477 = por %p475, %p476
    %p478 = scmp.ne.s32.totalorder %s466, %s467
    %p479 = scmp.eq.s32.totalorder %s37, 1
    %p480 = por %p478, %p479
    %p482 = scmp.ne.s32.totalorder %s467, %s481
    %p483 = scmp.eq.s32.totalorder %s37, 0
    %p484 = por %p482, %p483
    %s486 = sadd.s32 %s485, 1
    %p489 = scmp.eq.s32.totalorder %s31, 1
    %p490 = scmp.ne.s32.totalorder %s485, %s487
    %p491 = scmp.eq.s32.totalorder %s31, 0
    %p492 = por %p490, %p491
    %p493 = scmp.ne.s32.totalorder %s485, %s487
    %p494 = scmp.eq.s32.totalorder %s36, 1
    %p495 = por %p493, %p494
    %p496 = scmp.ne.s32.totalorder %s487, %s488
    %p497 = scmp.eq.s32.totalorder %s36, 0
    %p498 = por %p496, %p497
    %p499 = scmp.ne.s32.totalorder %s487, %s488
    %p500 = scmp.eq.s32.totalorder %s37, 1
    %p501 = por %p499, %p500
    %p503 = scmp.ne.s32.totalorder %s488, %s502
    %p504 = scmp.eq.s32.totalorder %s37, 0
    %p505 = por %p503, %p504
    %s507 = sadd.s32 %s506, 1
    %p510 = scmp.eq.s32.totalorder %s31, 1
    %p511 = scmp.ne.s32.totalorder %s506, %s508
    %p512 = scmp.eq.s32.totalorder %s31, 0
    %p513 = por %p511, %p512
    %p514 = scmp.ne.s32.totalorder %s506, %s508
    %p515 = scmp.eq.s32.totalorder %s36, 1
    %p516 = por %p514, %p515
    %p517 = scmp.ne.s32.totalorder %s508, %s509
    %p518 = scmp.eq.s32.totalorder %s36, 0
    %p519 = por %p517, %p518
    %p520 = scmp.ne.s32.totalorder %s508, %s509
    %p521 = scmp.eq.s32.totalorder %s37, 1
    %p522 = por %p520, %p521
    %p524 = scmp.ne.s32.totalorder %s509, %s523
    %p525 = scmp.eq.s32.totalorder %s37, 0
    %p526 = por %p524, %p525
    %s527 = ssub.s32 %s31, %s38
    %p528 = scmp.eq.s32.totalorder %s527, 0
    %s530 = sadd.s32 %s529, 1
    %s531 = scalar_select %p528, %s529, %s530
    %p534 = pneg %p528
    %p535 = scmp.eq.s32.totalorder %s31, 1
    %p536 = por %p534, %p535
    %p537 = scmp.ne.s32.totalorder %s529, %s532
    %p538 = scmp.eq.s32.totalorder %s31, 0
    %p539 = por %p537, %p538
    %p540 = scmp.ne.s32.totalorder %s529, %s532
    %p541 = scmp.eq.s32.totalorder %s36, 1
    %p542 = por %p540, %p541
    %p543 = scmp.ne.s32.totalorder %s532, %s533
    %p544 = scmp.eq.s32.totalorder %s36, 0
    %p545 = por %p543, %p544
    %p546 = scmp.ne.s32.totalorder %s532, %s533
    %p547 = scmp.eq.s32.totalorder %s37, 1
    %p548 = por %p546, %p547
    %p550 = scmp.ne.s32.totalorder %s533, %s549
    %p551 = scmp.eq.s32.totalorder %s37, 0
    %p552 = por %p550, %p551
    %p553 = scmp.le.s32.totalorder 1, %s31
    %p554 = scmp.lt.s32.totalorder %s31, 3
    %p555 = pnand %p553, %p554
    %p556 = pneg %p555
    // Predicated region
    $region9: #{rfdb3_forward.1} parent=5 // pred_check
      _
    $region10: #{rfdb3_forward.1} parent=5 // pred_check_branch
      %558 = sbr.rel (%p555) target = $region12
    $region11: #{rfdb3_forward.1} parent=5 // pred_region
      %s559 = ssub.s32 %s31, 1
      // Predicated region
      $region13: #{rfdb3_forward.1} parent=11 // pred_check
        %p560 = pneg %p78
      $region14: #{rfdb3_forward.1} parent=11 // pred_check_branch
        %562 = sbr.rel (%p560) target = $region16
      $region15: #{rfdb3_forward.1} parent=11 // pred_region
        _
      $region16: #{rfdb3_forward.1} parent=11 // pred_fallthru
        _
      // Predicated region
      $region17: #{rfdb3_forward.1} parent=11 // pred_check
        %p563 = pneg %p99
      $region18: #{rfdb3_forward.1} parent=11 // pred_check_branch
        %565 = sbr.rel (%p563) target = $region20
      $region19: #{rfdb3_forward.1} parent=11 // pred_region
        _
      $region20: #{rfdb3_forward.1} parent=11 // pred_fallthru
        _
      // Predicated region
      $region21: #{rfdb3_forward.1} parent=11 // pred_check
        %p566 = pneg %p120
      $region22: #{rfdb3_forward.1} parent=11 // pred_check_branch
        %568 = sbr.rel (%p566) target = $region24
      $region23: #{rfdb3_forward.1} parent=11 // pred_region
        _
      $region24: #{rfdb3_forward.1} parent=11 // pred_fallthru
        _
      // Predicated region
      $region25: #{rfdb3_forward.1} parent=11 // pred_check
        %p569 = pneg %p141
      $region26: #{rfdb3_forward.1} parent=11 // pred_check_branch
        %571 = sbr.rel (%p569) target = $region28
      $region27: #{rfdb3_forward.1} parent=11 // pred_region
        _
      $region28: #{rfdb3_forward.1} parent=11 // pred_fallthru
        _
      // Predicated region
      $region29: #{rfdb3_forward.1} parent=11 // pred_check
        %p572 = pneg %p162
      $region30: #{rfdb3_forward.1} parent=11 // pred_check_branch
        %574 = sbr.rel (%p572) target = $region32
      $region31: #{rfdb3_forward.1} parent=11 // pred_region
        _
      $region32: #{rfdb3_forward.1} parent=11 // pred_fallthru
        _
      // Predicated region
      $region33: #{rfdb3_forward.1} parent=11 // pred_check
        %p575 = pneg %p183
      $region34: #{rfdb3_forward.1} parent=11 // pred_check_branch
        %577 = sbr.rel (%p575) target = $region36
      $region35: #{rfdb3_forward.1} parent=11 // pred_region
        _
      $region36: #{rfdb3_forward.1} parent=11 // pred_fallthru
        _
      // Predicated region
      $region37: #{rfdb3_forward.1} parent=11 // pred_check
        %p578 = pneg %p204
      $region38: #{rfdb3_forward.1} parent=11 // pred_check_branch
        %580 = sbr.rel (%p578) target = $region40
      $region39: #{rfdb3_forward.1} parent=11 // pred_region
        _
      $region40: #{rfdb3_forward.1} parent=11 // pred_fallthru
        _
      // Predicated region
      $region41: #{rfdb3_forward.1} parent=11 // pred_check
        %p581 = pneg %p225
      $region42: #{rfdb3_forward.1} parent=11 // pred_check_branch
        %583 = sbr.rel (%p581) target = $region44
      $region43: #{rfdb3_forward.1} parent=11 // pred_region
        _
      $region44: #{rfdb3_forward.1} parent=11 // pred_fallthru
        _
      // Predicated region
      $region45: #{rfdb3_forward.1} parent=11 // pred_check
        %p584 = pneg %p246
      $region46: #{rfdb3_forward.1} parent=11 // pred_check_branch
        %586 = sbr.rel (%p584) target = $region48
      $region47: #{rfdb3_forward.1} parent=11 // pred_region
        _
      $region48: #{rfdb3_forward.1} parent=11 // pred_fallthru
        _
      // Predicated region
      $region49: #{rfdb3_forward.1} parent=11 // pred_check
        %p587 = pneg %p267
      $region50: #{rfdb3_forward.1} parent=11 // pred_check_branch
        %589 = sbr.rel (%p587) target = $region52
      $region51: #{rfdb3_forward.1} parent=11 // pred_region
        _
      $region52: #{rfdb3_forward.1} parent=11 // pred_fallthru
        _
      // Predicated region
      $region53: #{rfdb3_forward.1} parent=11 // pred_check
        %p590 = pneg %p288
      $region54: #{rfdb3_forward.1} parent=11 // pred_check_branch
        %592 = sbr.rel (%p590) target = $region56
      $region55: #{rfdb3_forward.1} parent=11 // pred_region
        _
      $region56: #{rfdb3_forward.1} parent=11 // pred_fallthru
        _
      // Predicated region
      $region57: #{rfdb3_forward.1} parent=11 // pred_check
        %p593 = pneg %p309
      $region58: #{rfdb3_forward.1} parent=11 // pred_check_branch
        %595 = sbr.rel (%p593) target = $region60
      $region59: #{rfdb3_forward.1} parent=11 // pred_region
        _
      $region60: #{rfdb3_forward.1} parent=11 // pred_fallthru
        _
      // Predicated region
      $region61: #{rfdb3_forward.1} parent=11 // pred_check
        %p596 = pneg %p330
      $region62: #{rfdb3_forward.1} parent=11 // pred_check_branch
        %598 = sbr.rel (%p596) target = $region64
      $region63: #{rfdb3_forward.1} parent=11 // pred_region
        _
      $region64: #{rfdb3_forward.1} parent=11 // pred_fallthru
        _
      // Predicated region
      $region65: #{rfdb3_forward.1} parent=11 // pred_check
        %p599 = pneg %p351
      $region66: #{rfdb3_forward.1} parent=11 // pred_check_branch
        %601 = sbr.rel (%p599) target = $region68
      $region67: #{rfdb3_forward.1} parent=11 // pred_region
        _
      $region68: #{rfdb3_forward.1} parent=11 // pred_fallthru
        _
      // Predicated region
      $region69: #{rfdb3_forward.1} parent=11 // pred_check
        %p602 = pneg %p372
      $region70: #{rfdb3_forward.1} parent=11 // pred_check_branch
        %604 = sbr.rel (%p602) target = $region72
      $region71: #{rfdb3_forward.1} parent=11 // pred_region
        _
      $region72: #{rfdb3_forward.1} parent=11 // pred_fallthru
        _
      // Predicated region
      $region73: #{rfdb3_forward.1} parent=11 // pred_check
        %p605 = pneg %p393
      $region74: #{rfdb3_forward.1} parent=11 // pred_check_branch
        %607 = sbr.rel (%p605) target = $region76
      $region75: #{rfdb3_forward.1} parent=11 // pred_region
        _
      $region76: #{rfdb3_forward.1} parent=11 // pred_fallthru
        _
      // Predicated region
      $region77: #{rfdb3_forward.1} parent=11 // pred_check
        %p608 = pneg %p414
      $region78: #{rfdb3_forward.1} parent=11 // pred_check_branch
        %610 = sbr.rel (%p608) target = $region80
      $region79: #{rfdb3_forward.1} parent=11 // pred_region
        _
      $region80: #{rfdb3_forward.1} parent=11 // pred_fallthru
        _
      // Predicated region
      $region81: #{rfdb3_forward.1} parent=11 // pred_check
        %p611 = pneg %p435
      $region82: #{rfdb3_forward.1} parent=11 // pred_check_branch
        %613 = sbr.rel (%p611) target = $region84
      $region83: #{rfdb3_forward.1} parent=11 // pred_region
        _
      $region84: #{rfdb3_forward.1} parent=11 // pred_fallthru
        _
      // Predicated region
      $region85: #{rfdb3_forward.1} parent=11 // pred_check
        %p614 = pneg %p456
      $region86: #{rfdb3_forward.1} parent=11 // pred_check_branch
        %616 = sbr.rel (%p614) target = $region88
      $region87: #{rfdb3_forward.1} parent=11 // pred_region
        _
      $region88: #{rfdb3_forward.1} parent=11 // pred_fallthru
        _
      // Predicated region
      $region89: #{rfdb3_forward.1} parent=11 // pred_check
        %p617 = pneg %p477
      $region90: #{rfdb3_forward.1} parent=11 // pred_check_branch
        %619 = sbr.rel (%p617) target = $region92
      $region91: #{rfdb3_forward.1} parent=11 // pred_region
        _
      $region92: #{rfdb3_forward.1} parent=11 // pred_fallthru
        _
      // Predicated region
      $region93: #{rfdb3_forward.1} parent=11 // pred_check
        %p620 = pneg %p498
      $region94: #{rfdb3_forward.1} parent=11 // pred_check_branch
        %622 = sbr.rel (%p620) target = $region96
      $region95: #{rfdb3_forward.1} parent=11 // pred_region
        _
      $region96: #{rfdb3_forward.1} parent=11 // pred_fallthru
        _
      // Predicated region
      $region97: #{rfdb3_forward.1} parent=11 // pred_check
        %p623 = pneg %p519
      $region98: #{rfdb3_forward.1} parent=11 // pred_check_branch
        %625 = sbr.rel (%p623) target = $region100
      $region99: #{rfdb3_forward.1} parent=11 // pred_region
        _
      $region100: #{rfdb3_forward.1} parent=11 // pred_fallthru
        _
    $region12: #{rfdb3_forward.1} parent=5 // pred_fallthru
      _
    %p626 = scmp.lt.s32.totalorder %s31, 2
    // Predicated region
    $region101: #{rfdb3_forward.1} parent=5 // pred_check
      %p627 = pneg %p626
    $region102: #{rfdb3_forward.1} parent=5 // pred_check_branch
      %629 = sbr.rel (%p627) target = $region104
    $region103: #{rfdb3_forward.1} parent=5 // pred_region
      // Predicated region
      $region105: #{rfdb3_forward.1} parent=103 // pred_check
        %p630 = pneg %p51
      $region106: #{rfdb3_forward.1} parent=103 // pred_check_branch
        %632 = sbr.rel (%p630) target = $region108
      $region107: #{rfdb3_forward.1} parent=103 // pred_region
        %p633 = scmp.lt.s32.totalorder %s31, 1
        %s634 = scalar_select %p633, %s31, 1
        %s635 = smul.addr %s634, 4
        %s636 = smul.addr %s635, 8
        %s637 = scalar_lea.vmem %s0, %s636
      $region108: #{rfdb3_forward.1} parent=103 // pred_fallthru
        _
    $region104: #{rfdb3_forward.1} parent=5 // pred_fallthru
      _
    %p638 = scmp.le.s32.totalorder 1, %s31
    %p639 = scmp.lt.s32.totalorder %s31, 3
    %p640 = pnand %p638, %p639
    %p641 = pneg %p640
    // Predicated region
    $region109: #{rfdb3_forward.1} parent=5 // pred_check
      _
    $region110: #{rfdb3_forward.1} parent=5 // pred_check_branch
      %643 = sbr.rel (%p640) target = $region112
    $region111: #{rfdb3_forward.1} parent=5 // pred_region
      %s644 = ssub.s32 %s31, 1
      %p645 = scmp.lt.s32.totalorder %s36, 1
      %s646 = scalar_select %p645, %s36, 1
      %s647 = smul.addr %s646, 4
      %s648 = smul.addr %s647, 8
      %s649 = scalar_lea.vmem %s0, %s648
      %p650 = pneg %p57
      %p651 = pneg %p54
      %p652 = pneg %p78
      %p653 = pneg %p75
      %p654 = pneg %p99
      %p655 = pneg %p96
      %p656 = pneg %p120
      %p657 = pneg %p117
      %p658 = pneg %p141
      %p659 = pneg %p138
      %p660 = pneg %p162
      %p661 = pneg %p159
      %p662 = pneg %p183
      %p663 = pneg %p180
      %p664 = pneg %p204
      %p665 = pneg %p201
      %p666 = pneg %p225
      %p667 = pneg %p222
      %p668 = pneg %p246
      %p669 = pneg %p243
      %p670 = pneg %p267
      %p671 = pneg %p264
      %p672 = pneg %p288
      %p673 = pneg %p285
      %p674 = pneg %p309
      %p675 = pneg %p306
      %p676 = pneg %p330
      %p677 = pneg %p327
      %p678 = pneg %p351
      %p679 = pneg %p348
      %p680 = pneg %p372
      %p681 = pneg %p369
      %p682 = pneg %p393
      %p683 = pneg %p390
      %p684 = pneg %p414
      %p685 = pneg %p411
      %p686 = pneg %p435
      %p687 = pneg %p432
      %p688 = pneg %p456
      %p689 = pneg %p453
      %p690 = pneg %p477
      %p691 = pneg %p474
      %p692 = pneg %p498
      %p693 = pneg %p495
      %p694 = pneg %p519
      %p695 = pneg %p516
      %p696 = pneg %p545
      %p697 = pneg %p542
      %p698 = scmp.lt.s32.totalorder %s36, 1
      %s699 = scalar_select %p698, %s36, 1
      %s700 = smul.addr %s699, 4
      %s701 = smul.addr %s700, 8
      %s702 = scalar_lea.vmem %s23, %s701
      %p703 = scmp.lt.s32.totalorder %s36, 1
      %s704 = scalar_select %p703, %s36, 1
      %s705 = smul.addr %s704, 4
      %s706 = smul.addr %s705, 8
      %s707 = scalar_lea.vmem %s0, %s706
      %p708 = scmp.lt.s32.totalorder %s36, 1
      %s709 = scalar_select %p708, %s36, 1
      %s710 = smul.addr %s709, 4
      %s711 = smul.addr %s710, 8
      %s712 = scalar_lea.vmem %s23, %s711
      %v713 = vld [vmem:[%s1] sm:$0xff]
      %v714 = vld [vmem:[%s1 + $0x8] sm:$0xff]
      %v715 = vld [vmem:[%s1 + $0x10] sm:$0x1]
      %v716 = vld [vmem:[%s1 + $0x18] sm:$0x1]
      %v717 = vld [vmem:[%s707] sm:$0xff]
      %v718 = vld [vmem:[%s707 + $0x8] sm:$0xff]
      %v719 = vld [vmem:[%s707 + $0x10] sm:$0xff]
      %v720 = vld [vmem:[%s707 + $0x18] sm:$0xff]
      %v721 = vld [vmem:[%s2] sm:$0xff]
      %v722 = vld [vmem:[%s2 + $0x8] sm:$0xf]
      %v723 = vld [vmem:[%s3] sm:$0xff]
      %v724 = vld [vmem:[%s3 + $0x8] sm:$0xf]
      %726 = vset.pattern.permute.xlu0 0
      %727 = vperm.xlu0 %726, %v723
      %v728 = vpop.permute.xlu0 %727
      %731 = vset.pattern.permute.xlu0 0
      %732 = vperm.xlu0 %731, %v724
      %v733 = vpop.permute.xlu0 %732
      %vm735 = vcmask 130048
      %v737 = vsel %vm735, %v721, 0
      %v740 = vsel %vm735, %v722, 0
      %742 = vmatprep.subr.mxu0 0.0
      %743 = vmatpush1.msra.mxu0 0.0
      %744 = vmatprep.subr.mxu0 0.0
      %745 = vmatpush1.msra.mxu0 0.0
      %746 = vmatprep.subr.mxu0 0.0
      %747 = vmatpush1.msra.mxu0 0.0
      %748 = vmatprep.subr.mxu0 0.0
      %749 = vmatpush1.msra.mxu0 0.0
      %750 = vmatprep.subr.mxu0 0.0
      %751 = vmatpush1.msra.mxu0 0.0
      %752 = vmatprep.subr.mxu0 0.0
      %753 = vmatpush1.msra.mxu0 0.0
      %754 = vmatprep.subr.mxu0 0.0
      %755 = vmatpush1.msra.mxu0 0.0
      %756 = vmatprep.subr.mxu0 0.0
      %757 = vmatpush1.msra.mxu0 0.0
      %758 = vmatprep.subr.mxu0 0.0
      %759 = vmatpush1.msra.mxu0 0.0
      %760 = vmatprep.subr.mxu0 0.0
      %761 = vmatpush1.msra.mxu0 0.0
      %762 = vmatprep.subr.mxu0 0.0
      %763 = vmatpush1.msra.mxu0 0.0
      %764 = vmatprep.subr.mxu0 0.0
      %765 = vmatpush1.msra.mxu0 0.0
      %766 = vmatprep.subr.mxu0 0.0
      %767 = vmatpush1.msra.mxu0 0.0
      %768 = vmatprep.subr.mxu0 0.0
      %769 = vmatpush1.msra.mxu0 0.0
      %770 = vmatprep.subr.mxu0 %v720
      %771 = vmatpush1.msra.mxu0 %v719
      %772 = vmatprep.subr.mxu0 %v718
      %773 = vmatpush1.msra.mxu0 %v717
      %774 = vmatprep.subr.mxu0 0.0
      %775 = vmatpush2.msra.mxu0 0.0
      %776 = vmatprep.subr.mxu0 0.0
      %777 = vmatpush2.msra.mxu0 0.0
      %778 = vmatprep.subr.mxu0 0.0
      %779 = vmatpush2.msra.mxu0 0.0
      %780 = vmatprep.subr.mxu0 0.0
      %781 = vmatpush2.msra.mxu0 0.0
      %782 = vmatprep.subr.mxu0 0.0
      %783 = vmatpush2.msra.mxu0 0.0
      %784 = vmatprep.subr.mxu0 0.0
      %785 = vmatpush2.msra.mxu0 0.0
      %786 = vmatprep.subr.mxu0 0.0
      %787 = vmatpush2.msra.mxu0 0.0
      %788 = vmatprep.subr.mxu0 0.0
      %789 = vmatpush2.msra.mxu0 0.0
      %790 = vmatprep.subr.mxu0 0.0
      %791 = vmatpush2.msra.mxu0 0.0
      %792 = vmatprep.subr.mxu0 0.0
      %793 = vmatpush2.msra.mxu0 0.0
      %794 = vmatprep.subr.mxu0 0.0
      %795 = vmatpush2.msra.mxu0 0.0
      %796 = vmatprep.subr.mxu0 0.0
      %797 = vmatpush2.msra.mxu0 0.0
      %798 = vmatprep.subr.mxu0 0.0
      %799 = vmatpush2.msra.mxu0 0.0
      %800 = vmatprep.subr.mxu0 0.0
      %801 = vmatpush2.msra.mxu0 0.0
      %802 = vmatprep.subr.mxu0 0.0
      %803 = vmatpush2.msra.mxu0 0.0
      %804 = vmatprep.subr.mxu0 0.0
      %805 = vmatpush2.msra.mxu0 0.0
      %806 = vmatprep.mubr.f32.mxu0 0.0
      %807 = vmatmul.mubr.f32.gmra.mxu0 %v737
      %v808 = vpop.f32.mrf.mxu0
      %v809 = vadd.f32 %v728, %v808
      %v810 = vpop.f32.mrf.mxu0
      %v811 = vadd.f32 %v728, %v810
      %812 = vmatprep.mubr.f32.mxu0 0.0
      %813 = vmatmul.mubr.f32.gmra.mxu0 %v740
      %v814 = vpop.f32.mrf.mxu0
      %v815 = vadd.f32 %v733, %v814
      %v816 = vpop.f32.mrf.mxu0
      %v817 = vadd.f32 %v733, %v816
      %818 = vdwg.mxu0
      %vm819 = vcmp.ge.f32.partialorder %v809, 0.0
      %vm820 = vcmp.ge.f32.partialorder %v811, 0.0
      %v821 = vmul.f32 %v809, 0.05
      %v822 = vmul.f32 %v811, 0.05
      %v823 = vsel %vm819, %v809, %v821
      %v824 = vsel %vm820, %v811, %v822
      %825 = vst [vmem:[#allocation2] sm:$0xff] %v823
      %826 = vst [vmem:[#allocation2 + $0x8] sm:$0xff] %v824
      %v827 = vmax.f32 %v815, 0.0
      %v828 = vmax.f32 %v817, 0.0
      %v829 = vld [vmem:[%s4] sm:$0xff]
      %v830 = vld [vmem:[%s4 + $0x8] sm:$0x1]
      %v831 = vld [vmem:[%s5] sm:$0xff]
      %v832 = vld [vmem:[%s5 + $0x8] sm:$0x1]
      %834 = vset.pattern.permute.xlu0 0
      %835 = vperm.xlu0 %834, %v831
      %v836 = vpop.permute.xlu0 %835
      %839 = vset.pattern.permute.xlu0 0
      %840 = vperm.xlu0 %839, %v832
      %v841 = vpop.permute.xlu0 %840
      %vm843 = vcmask 31744
      %v845 = vsel %vm843, %v829, 0
      %v848 = vsel %vm843, %v830, 0
      %vm850 = vcmask 1043456
      %v852 = vsel %vm850, %v827, 0
      %v855 = vsel %vm850, %v828, 0
      %857 = vmatprep.subr.mxu0 0.0
      %858 = vmatpush1.msra.mxu0 0.0
      %859 = vmatprep.subr.mxu0 0.0
      %860 = vmatpush1.msra.mxu0 0.0
      %861 = vmatprep.subr.mxu0 0.0
      %862 = vmatpush1.msra.mxu0 0.0
      %863 = vmatprep.subr.mxu0 0.0
      %864 = vmatpush1.msra.mxu0 0.0
      %865 = vmatprep.subr.mxu0 0.0
      %866 = vmatpush1.msra.mxu0 0.0
      %867 = vmatprep.subr.mxu0 0.0
      %868 = vmatpush1.msra.mxu0 0.0
      %869 = vmatprep.subr.mxu0 0.0
      %870 = vmatpush1.msra.mxu0 0.0
      %871 = vmatprep.subr.mxu0 0.0
      %872 = vmatpush1.msra.mxu0 0.0
      %873 = vmatprep.subr.mxu0 0.0
      %874 = vmatpush1.msra.mxu0 0.0
      %875 = vmatprep.subr.mxu0 0.0
      %876 = vmatpush1.msra.mxu0 0.0
      %877 = vmatprep.subr.mxu0 0.0
      %878 = vmatpush1.msra.mxu0 0.0
      %879 = vmatprep.subr.mxu0 0.0
      %880 = vmatpush1.msra.mxu0 0.0
      %881 = vmatprep.subr.mxu0 0.0
      %882 = vmatpush1.msra.mxu0 0.0
      %883 = vmatprep.subr.mxu0 0.0
      %884 = vmatpush1.msra.mxu0 0.0
      %885 = vmatprep.subr.mxu0 0.0
      %886 = vmatpush1.msra.mxu0 0.0
      %887 = vmatprep.subr.mxu0 %v855
      %888 = vmatpush1.msra.mxu0 %v852
      %889 = vmatprep.subr.mxu0 0.0
      %890 = vmatpush2.msra.mxu0 0.0
      %891 = vmatprep.subr.mxu0 0.0
      %892 = vmatpush2.msra.mxu0 0.0
      %893 = vmatprep.subr.mxu0 0.0
      %894 = vmatpush2.msra.mxu0 0.0
      %895 = vmatprep.subr.mxu0 0.0
      %896 = vmatpush2.msra.mxu0 0.0
      %897 = vmatprep.subr.mxu0 0.0
      %898 = vmatpush2.msra.mxu0 0.0
      %899 = vmatprep.subr.mxu0 0.0
      %900 = vmatpush2.msra.mxu0 0.0
      %901 = vmatprep.subr.mxu0 0.0
      %902 = vmatpush2.msra.mxu0 0.0
      %903 = vmatprep.subr.mxu0 0.0
      %904 = vmatpush2.msra.mxu0 0.0
      %905 = vmatprep.subr.mxu0 0.0
      %906 = vmatpush2.msra.mxu0 0.0
      %907 = vmatprep.subr.mxu0 0.0
      %908 = vmatpush2.msra.mxu0 0.0
      %909 = vmatprep.subr.mxu0 0.0
      %910 = vmatpush2.msra.mxu0 0.0
      %911 = vmatprep.subr.mxu0 0.0
      %912 = vmatpush2.msra.mxu0 0.0
      %913 = vmatprep.subr.mxu0 0.0
      %914 = vmatpush2.msra.mxu0 0.0
      %915 = vmatprep.subr.mxu0 0.0
      %916 = vmatpush2.msra.mxu0 0.0
      %917 = vmatprep.subr.mxu0 0.0
      %918 = vmatpush2.msra.mxu0 0.0
      %919 = vmatprep.subr.mxu0 0.0
      %920 = vmatpush2.msra.mxu0 0.0
      %921 = vmatprep.mubr.f32.mxu0 0.0
      %922 = vmatmul.mubr.f32.gmra.mxu0 %v845
      %v923 = vpop.f32.mrf.mxu0
      %v924 = vadd.f32 %v836, %v923
      %v925 = vpop.f32.mrf.mxu0
      %v926 = vadd.f32 %v836, %v925
      %927 = vmatprep.mubr.f32.mxu0 0.0
      %928 = vmatmul.mubr.f32.gmra.mxu0 %v848
      %v929 = vpop.f32.mrf.mxu0
      %v930 = vadd.f32 %v841, %v929
      %v931 = vpop.f32.mrf.mxu0
      %v932 = vadd.f32 %v841, %v931
      %933 = vdwg.mxu0
      %v934 = vmul.f32 %v924, %v713
      %v935 = vmul.f32 %v926, %v714
      %v936 = vmul.f32 %v930, %v715
      %v937 = vmul.f32 %v932, %v716
      %v938 = vlaneseq
      %v939 = vshrl.u32 %v938, 7
      %v940 = vsub.s32 4, %v939
      %v941 = vrot.slane %v934, %v940
      %v942 = vlaneseq
      %v943 = vshrl.u32 %v942, 7
      %v944 = vsub.s32 4, %v943
      %v945 = vrot.slane %v935, %v944
      %v946 = vmul.f32 %v717, %v941
      %v947 = vmul.f32 %v718, %v945
      %v948 = vmul.f32 %v719, %v941
      %v949 = vmul.f32 %v720, %v945
      %950 = vrot.lane.b32.xlu0 %v717, 17
      %v951 = vpop.permute.xlu0 %950
      %952 = vrot.lane.b32.xlu0 %v719, 17
      %v953 = vpop.permute.xlu0 %952
      %954 = vrot.lane.b32.xlu0 %v718, 17
      %v955 = vpop.permute.xlu0 %954
      %956 = vrot.lane.b32.xlu0 %v720, 17
      %v957 = vpop.permute.xlu0 %956
      %v958 = vlaneseq
      %v959 = vand.u32 %v958, 127
      %vm960 = vcmp.lt.s32.totalorder %v959, 17
      %v961 = vsel %vm960, %v951, %v955
      %v962 = vsel %vm960, %v953, %v957
      %v963 = vsel %vm960, %v955, %v951
      %v964 = vsel %vm960, %v957, %v953
      %v965 = vlaneseq
      %v966 = vshrl.u32 %v965, 7
      %v967 = vsub.s32 0, %v966
      %v968 = vrot.slane %v934, %v967
      %v969 = vlaneseq
      %v970 = vshrl.u32 %v969, 7
      %v971 = vsub.s32 0, %v970
      %v972 = vrot.slane %v935, %v971
      %v973 = vmul.f32 %v963, %v968
      %v974 = vmul.f32 %v961, %v972
      %v975 = vmul.f32 %v964, %v968
      %v976 = vmul.f32 %v962, %v972
      %v977 = vadd.f32 %v946, %v973
      %v978 = vadd.f32 %v947, %v974
      %v979 = vadd.f32 %v948, %v975
      %v980 = vadd.f32 %v949, %v976
      %981 = vrot.lane.b32.xlu0 %v717, 16
      %v982 = vpop.permute.xlu0 %981
      %983 = vrot.lane.b32.xlu0 %v719, 16
      %v984 = vpop.permute.xlu0 %983
      %985 = vrot.lane.b32.xlu0 %v718, 16
      %v986 = vpop.permute.xlu0 %985
      %987 = vrot.lane.b32.xlu0 %v720, 16
      %v988 = vpop.permute.xlu0 %987
      %vm989 = vcmp.lt.s32.totalorder %v959, 16
      %v990 = vsel %vm989, %v982, %v986
      %v991 = vsel %vm989, %v984, %v988
      %v992 = vsel %vm989, %v986, %v982
      %v993 = vsel %vm989, %v988, %v984
      %v994 = vlaneseq
      %v995 = vshrl.u32 %v994, 7
      %v996 = vsub.s32 1, %v995
      %v997 = vrot.slane %v934, %v996
      %v998 = vlaneseq
      %v999 = vshrl.u32 %v998, 7
      %v1000 = vsub.s32 1, %v999
      %v1001 = vrot.slane %v935, %v1000
      %v1002 = vmul.f32 %v992, %v997
      %v1003 = vmul.f32 %v990, %v1001
      %v1004 = vmul.f32 %v993, %v997
      %v1005 = vmul.f32 %v991, %v1001
      %v1006 = vadd.f32 %v977, %v1002
      %v1007 = vadd.f32 %v978, %v1003
      %v1008 = vadd.f32 %v979, %v1004
      %v1009 = vadd.f32 %v980, %v1005
      %1010 = vrot.lane.b32.xlu0 %v717, 15
      %v1011 = vpop.permute.xlu0 %1010
      %1012 = vrot.lane.b32.xlu0 %v719, 15
      %v1013 = vpop.permute.xlu0 %1012
      %1014 = vrot.lane.b32.xlu0 %v718, 15
      %v1015 = vpop.permute.xlu0 %1014
      %1016 = vrot.lane.b32.xlu0 %v720, 15
      %v1017 = vpop.permute.xlu0 %1016
      %vm1018 = vcmp.lt.s32.totalorder %v959, 15
      %v1019 = vsel %vm1018, %v1011, %v1015
      %v1020 = vsel %vm1018, %v1013, %v1017
      %v1021 = vsel %vm1018, %v1015, %v1011
      %v1022 = vsel %vm1018, %v1017, %v1013
      %v1023 = vlaneseq
      %v1024 = vshrl.u32 %v1023, 7
      %v1025 = vsub.s32 2, %v1024
      %v1026 = vrot.slane %v934, %v1025
      %v1027 = vlaneseq
      %v1028 = vshrl.u32 %v1027, 7
      %v1029 = vsub.s32 2, %v1028
      %v1030 = vrot.slane %v935, %v1029
      %v1031 = vmul.f32 %v1021, %v1026
      %v1032 = vmul.f32 %v1019, %v1030
      %v1033 = vmul.f32 %v1022, %v1026
      %v1034 = vmul.f32 %v1020, %v1030
      %v1035 = vadd.f32 %v1006, %v1031
      %v1036 = vadd.f32 %v1007, %v1032
      %v1037 = vadd.f32 %v1008, %v1033
      %v1038 = vadd.f32 %v1009, %v1034
      %1039 = vrot.lane.b32.xlu0 %v717, 1
      %v1040 = vpop.permute.xlu0 %1039
      %1041 = vrot.lane.b32.xlu0 %v719, 1
      %v1042 = vpop.permute.xlu0 %1041
      %1043 = vrot.lane.b32.xlu0 %v718, 1
      %v1044 = vpop.permute.xlu0 %1043
      %1045 = vrot.lane.b32.xlu0 %v720, 1
      %v1046 = vpop.permute.xlu0 %1045
      %vm1047 = vcmp.lt.s32.totalorder %v959, 1
      %v1048 = vsel %vm1047, %v1040, %v1044
      %v1049 = vsel %vm1047, %v1042, %v1046
      %v1050 = vsel %vm1047, %v1044, %v1040
      %v1051 = vsel %vm1047, %v1046, %v1042
      %v1052 = vlaneseq
      %v1053 = vshrl.u32 %v1052, 7
      %v1054 = vsub.s32 3, %v1053
      %v1055 = vrot.slane %v934, %v1054
      %v1056 = vlaneseq
      %v1057 = vshrl.u32 %v1056, 7
      %v1058 = vsub.s32 3, %v1057
      %v1059 = vrot.slane %v935, %v1058
      %v1060 = vmul.f32 %v1050, %v1055
      %v1061 = vmul.f32 %v1048, %v1059
      %v1062 = vmul.f32 %v1051, %v1055
      %v1063 = vmul.f32 %v1049, %v1059
      %v1064 = vadd.f32 %v1035, %v1060
      %v1065 = vadd.f32 %v1036, %v1061
      %v1066 = vadd.f32 %v1037, %v1062
      %v1067 = vadd.f32 %v1038, %v1063
      %1068 = vrot.lane.b32.xlu0 %v717, 127
      %v1069 = vpop.permute.xlu0 %1068
      %1070 = vrot.lane.b32.xlu0 %v719, 127
      %v1071 = vpop.permute.xlu0 %1070
      %1072 = vrot.lane.b32.xlu0 %v718, 127
      %v1073 = vpop.permute.xlu0 %1072
      %1074 = vrot.lane.b32.xlu0 %v720, 127
      %v1075 = vpop.permute.xlu0 %1074
      %vm1076 = vcmp.lt.s32.totalorder %v959, 127
      %v1077 = vsel %vm1076, %v1069, %v1073
      %v1078 = vsel %vm1076, %v1071, %v1075
      %v1079 = vsel %vm1076, %v1073, %v1069
      %v1080 = vsel %vm1076, %v1075, %v1071
      %v1081 = vlaneseq
      %v1082 = vshrl.u32 %v1081, 7
      %v1083 = vsub.s32 5, %v1082
      %v1084 = vrot.slane %v934, %v1083
      %v1085 = vlaneseq
      %v1086 = vshrl.u32 %v1085, 7
      %v1087 = vsub.s32 5, %v1086
      %v1088 = vrot.slane %v935, %v1087
      %v1089 = vmul.f32 %v1077, %v1084
      %v1090 = vmul.f32 %v1079, %v1088
      %v1091 = vmul.f32 %v1078, %v1084
      %v1092 = vmul.f32 %v1080, %v1088
      %v1093 = vadd.f32 %v1064, %v1089
      %v1094 = vadd.f32 %v1065, %v1090
      %v1095 = vadd.f32 %v1066, %v1091
      %v1096 = vadd.f32 %v1067, %v1092
      %1097 = vrot.lane.b32.xlu0 %v717, 113
      %v1098 = vpop.permute.xlu0 %1097
      %1099 = vrot.lane.b32.xlu0 %v719, 113
      %v1100 = vpop.permute.xlu0 %1099
      %1101 = vrot.lane.b32.xlu0 %v718, 113
      %v1102 = vpop.permute.xlu0 %1101
      %1103 = vrot.lane.b32.xlu0 %v720, 113
      %v1104 = vpop.permute.xlu0 %1103
      %vm1105 = vcmp.lt.s32.totalorder %v959, 113
      %v1106 = vsel %vm1105, %v1098, %v1102
      %v1107 = vsel %vm1105, %v1100, %v1104
      %v1108 = vsel %vm1105, %v1102, %v1098
      %v1109 = vsel %vm1105, %v1104, %v1100
      %v1110 = vlaneseq
      %v1111 = vshrl.u32 %v1110, 7
      %v1112 = vsub.s32 6, %v1111
      %v1113 = vrot.slane %v934, %v1112
      %v1114 = vlaneseq
      %v1115 = vshrl.u32 %v1114, 7
      %v1116 = vsub.s32 6, %v1115
      %v1117 = vrot.slane %v935, %v1116
      %v1118 = vmul.f32 %v1106, %v1113
      %v1119 = vmul.f32 %v1108, %v1117
      %v1120 = vmul.f32 %v1107, %v1113
      %v1121 = vmul.f32 %v1109, %v1117
      %v1122 = vadd.f32 %v1093, %v1118
      %v1123 = vadd.f32 %v1094, %v1119
      %v1124 = vadd.f32 %v1095, %v1120
      %v1125 = vadd.f32 %v1096, %v1121
      %1126 = vrot.lane.b32.xlu0 %v717, 112
      %v1127 = vpop.permute.xlu0 %1126
      %1128 = vrot.lane.b32.xlu0 %v719, 112
      %v1129 = vpop.permute.xlu0 %1128
      %1130 = vrot.lane.b32.xlu0 %v718, 112
      %v1131 = vpop.permute.xlu0 %1130
      %1132 = vrot.lane.b32.xlu0 %v720, 112
      %v1133 = vpop.permute.xlu0 %1132
      %vm1134 = vcmp.lt.s32.totalorder %v959, 112
      %v1135 = vsel %vm1134, %v1127, %v1131
      %v1136 = vsel %vm1134, %v1129, %v1133
      %v1137 = vsel %vm1134, %v1131, %v1127
      %v1138 = vsel %vm1134, %v1133, %v1129
      %v1139 = vlaneseq
      %v1140 = vshrl.u32 %v1139, 7
      %v1141 = vsub.s32 7, %v1140
      %v1142 = vrot.slane %v934, %v1141
      %v1143 = vlaneseq
      %v1144 = vshrl.u32 %v1143, 7
      %v1145 = vsub.s32 7, %v1144
      %v1146 = vrot.slane %v935, %v1145
      %v1147 = vmul.f32 %v1135, %v1142
      %v1148 = vmul.f32 %v1137, %v1146
      %v1149 = vmul.f32 %v1136, %v1142
      %v1150 = vmul.f32 %v1138, %v1146
      %v1151 = vadd.f32 %v1122, %v1147
      %v1152 = vadd.f32 %v1123, %v1148
      %v1153 = vadd.f32 %v1124, %v1149
      %v1154 = vadd.f32 %v1125, %v1150
      %1155 = vrot.lane.b32.xlu0 %v717, 111
      %v1156 = vpop.permute.xlu0 %1155
      %1157 = vrot.lane.b32.xlu0 %v719, 111
      %v1158 = vpop.permute.xlu0 %1157
      %1159 = vrot.lane.b32.xlu0 %v718, 111
      %v1160 = vpop.permute.xlu0 %1159
      %1161 = vrot.lane.b32.xlu0 %v720, 111
      %v1162 = vpop.permute.xlu0 %1161
      %vm1163 = vcmp.lt.s32.totalorder %v959, 111
      %v1164 = vsel %vm1163, %v1156, %v1160
      %v1165 = vsel %vm1163, %v1158, %v1162
      %v1166 = vsel %vm1163, %v1160, %v1156
      %v1167 = vsel %vm1163, %v1162, %v1158
      %v1168 = vlaneseq
      %v1169 = vshrl.u32 %v1168, 7
      %v1170 = vsub.s32 0, %v1169
      %v1171 = vrot.slane %v936, %v1170
      %v1172 = vlaneseq
      %v1173 = vshrl.u32 %v1172, 7
      %v1174 = vsub.s32 0, %v1173
      %v1175 = vrot.slane %v937, %v1174
      %v1176 = vmul.f32 %v1164, %v1171
      %v1177 = vmul.f32 %v1166, %v1175
      %v1178 = vmul.f32 %v1165, %v1171
      %v1179 = vmul.f32 %v1167, %v1175
      %v1180 = vadd.f32 %v1151, %v1176
      %v1181 = vadd.f32 %v1152, %v1177
      %v1182 = vadd.f32 %v1153, %v1178
      %v1183 = vadd.f32 %v1154, %v1179
      %v1184 = vadd.f32 %v1180, %v717
      %v1185 = vadd.f32 %v1181, %v718
      %v1186 = vadd.f32 %v1182, %v719
      %v1187 = vadd.f32 %v1183, %v720
      %vm1188 = vcmp.ge.f32.partialorder %v1184, 0.0
      %vm1189 = vcmp.ge.f32.partialorder %v1185, 0.0
      %vm1190 = vcmp.ge.f32.partialorder %v1186, 0.0
      %vm1191 = vcmp.ge.f32.partialorder %v1187, 0.0
      %v1192 = vmul.f32 %v1184, 0.05
      %v1193 = vmul.f32 %v1185, 0.05
      %v1194 = vmul.f32 %v1186, 0.05
      %v1195 = vmul.f32 %v1187, 0.05
      %v1196 = vsel %vm1188, %v1184, %v1192
      %v1197 = vsel %vm1189, %v1185, %v1193
      %v1198 = vsel %vm1190, %v1186, %v1194
      %v1199 = vsel %vm1191, %v1187, %v1195
      %v1200 = vld [vmem:[%s6] sm:$0xff]
      %v1201 = vld [vmem:[%s6 + $0x8] sm:$0xff]
      %v1202 = vld [vmem:[%s6 + $0x10] sm:$0xff]
      %v1203 = vld [vmem:[%s7] sm:$0xff]
      %v1204 = vld [vmem:[%s7 + $0x8] sm:$0xff]
      %v1205 = vld [vmem:[%s7 + $0x10] sm:$0xff]
      %1207 = vset.pattern.permute.xlu0 0
      %1208 = vperm.xlu0 %1207, %v1203
      %v1209 = vpop.permute.xlu0 %1208
      %1212 = vset.pattern.permute.xlu0 0
      %1213 = vperm.xlu0 %1212, %v1204
      %v1214 = vpop.permute.xlu0 %1213
      %1217 = vset.pattern.permute.xlu0 0
      %1218 = vperm.xlu0 %1217, %v1205
      %v1219 = vpop.permute.xlu0 %1218
      %v1222 = vsel %vm735, %v1200, 0
      %v1225 = vsel %vm735, %v1201, 0
      %v1228 = vsel %vm735, %v1202, 0
      %1230 = vmatprep.subr.mxu0 0.0
      %1231 = vmatpush1.msra.mxu0 0.0
      %1232 = vmatprep.subr.mxu0 0.0
      %1233 = vmatpush1.msra.mxu0 0.0
      %1234 = vmatprep.subr.mxu0 0.0
      %1235 = vmatpush1.msra.mxu0 0.0
      %1236 = vmatprep.subr.mxu0 0.0
      %1237 = vmatpush1.msra.mxu0 0.0
      %1238 = vmatprep.subr.mxu0 0.0
      %1239 = vmatpush1.msra.mxu0 0.0
      %1240 = vmatprep.subr.mxu0 0.0
      %1241 = vmatpush1.msra.mxu0 0.0
      %1242 = vmatprep.subr.mxu0 0.0
      %1243 = vmatpush1.msra.mxu0 0.0
      %1244 = vmatprep.subr.mxu0 0.0
      %1245 = vmatpush1.msra.mxu0 0.0
      %1246 = vmatprep.subr.mxu0 0.0
      %1247 = vmatpush1.msra.mxu0 0.0
      %1248 = vmatprep.subr.mxu0 0.0
      %1249 = vmatpush1.msra.mxu0 0.0
      %1250 = vmatprep.subr.mxu0 0.0
      %1251 = vmatpush1.msra.mxu0 0.0
      %1252 = vmatprep.subr.mxu0 0.0
      %1253 = vmatpush1.msra.mxu0 0.0
      %1254 = vmatprep.subr.mxu0 0.0
      %1255 = vmatpush1.msra.mxu0 0.0
      %1256 = vmatprep.subr.mxu0 0.0
      %1257 = vmatpush1.msra.mxu0 0.0
      %1258 = vmatprep.subr.mxu0 %v1199
      %1259 = vmatpush1.msra.mxu0 %v1198
      %1260 = vmatprep.subr.mxu0 %v1197
      %1261 = vmatpush1.msra.mxu0 %v1196
      %1262 = vmatprep.subr.mxu0 0.0
      %1263 = vmatpush2.msra.mxu0 0.0
      %1264 = vmatprep.subr.mxu0 0.0
      %1265 = vmatpush2.msra.mxu0 0.0
      %1266 = vmatprep.subr.mxu0 0.0
      %1267 = vmatpush2.msra.mxu0 0.0
      %1268 = vmatprep.subr.mxu0 0.0
      %1269 = vmatpush2.msra.mxu0 0.0
      %1270 = vmatprep.subr.mxu0 0.0
      %1271 = vmatpush2.msra.mxu0 0.0
      %1272 = vmatprep.subr.mxu0 0.0
      %1273 = vmatpush2.msra.mxu0 0.0
      %1274 = vmatprep.subr.mxu0 0.0
      %1275 = vmatpush2.msra.mxu0 0.0
      %1276 = vmatprep.subr.mxu0 0.0
      %1277 = vmatpush2.msra.mxu0 0.0
      %1278 = vmatprep.subr.mxu0 0.0
      %1279 = vmatpush2.msra.mxu0 0.0
      %1280 = vmatprep.subr.mxu0 0.0
      %1281 = vmatpush2.msra.mxu0 0.0
      %1282 = vmatprep.subr.mxu0 0.0
      %1283 = vmatpush2.msra.mxu0 0.0
      %1284 = vmatprep.subr.mxu0 0.0
      %1285 = vmatpush2.msra.mxu0 0.0
      %1286 = vmatprep.subr.mxu0 0.0
      %1287 = vmatpush2.msra.mxu0 0.0
      %1288 = vmatprep.subr.mxu0 0.0
      %1289 = vmatpush2.msra.mxu0 0.0
      %1290 = vmatprep.subr.mxu0 0.0
      %1291 = vmatpush2.msra.mxu0 0.0
      %1292 = vmatprep.subr.mxu0 0.0
      %1293 = vmatpush2.msra.mxu0 0.0
      %1294 = vmatprep.mubr.f32.mxu0 0.0
      %1295 = vmatmul.mubr.f32.gmra.mxu0 %v1222
      %v1296 = vpop.f32.mrf.mxu0
      %v1297 = vadd.f32 %v1209, %v1296
      %v1298 = vpop.f32.mrf.mxu0
      %v1299 = vadd.f32 %v1209, %v1298
      %1300 = vmatprep.mubr.f32.mxu0 0.0
      %1301 = vmatmul.mubr.f32.gmra.mxu0 %v1225
      %v1302 = vpop.f32.mrf.mxu0
      %v1303 = vadd.f32 %v1214, %v1302
      %v1304 = vpop.f32.mrf.mxu0
      %v1305 = vadd.f32 %v1214, %v1304
      %1306 = vmatprep.mubr.f32.mxu0 0.0
      %1307 = vmatmul.mubr.f32.gmra.mxu0 %v1228
      %v1308 = vpop.f32.mrf.mxu0
      %v1309 = vadd.f32 %v1219, %v1308
      %v1310 = vpop.f32.mrf.mxu0
      %v1311 = vadd.f32 %v1219, %v1310
      %1312 = vdwg.mxu0
      %vm1313 = vcmp.ge.f32.partialorder %v1297, 0.0
      %vm1314 = vcmp.ge.f32.partialorder %v1299, 0.0
      %v1315 = vmul.f32 %v1297, 0.05
      %v1316 = vmul.f32 %v1299, 0.05
      %v1317 = vsel %vm1313, %v1297, %v1315
      %v1318 = vsel %vm1314, %v1299, %v1316
      %1319 = vst [vmem:[#allocation2 + $0x10] sm:$0xff] %v1317
      %1320 = vst [vmem:[#allocation2 + $0x18] sm:$0xff] %v1318
      %v1321 = vld [vmem:[%s8] sm:$0xff]
      %v1322 = vld [vmem:[%s8 + $0x8] sm:$0xff]
      %1323 = vrot.lane.b32.xlu0 %v1303, 16
      %v1324 = vpop.permute.xlu0 %1323
      %1325 = vrot.lane.b32.xlu0 %v1309, 16
      %v1326 = vpop.permute.xlu0 %1325
      %1327 = vrot.lane.b32.xlu0 %v1305, 16
      %v1328 = vpop.permute.xlu0 %1327
      %1329 = vrot.lane.b32.xlu0 %v1311, 16
      %v1330 = vpop.permute.xlu0 %1329
      %v1331 = vsel %vm989, %v1324, %v1328
      %v1332 = vsel %vm989, %v1326, %v1330
      %v1333 = vsel %vm989, %v1328, %v1324
      %v1334 = vsel %vm989, %v1330, %v1326
      %v1335 = vlaneseq
      %v1336 = vshrl.u32 %v1335, 7
      %v1337 = vsub.s32 1, %v1336
      %v1338 = vrot.slane %v713, %v1337
      %v1339 = vlaneseq
      %v1340 = vshrl.u32 %v1339, 7
      %v1341 = vsub.s32 1, %v1340
      %v1342 = vrot.slane %v714, %v1341
      %v1343 = vmul.f32 %v1333, %v1338
      %v1344 = vmul.f32 %v1331, %v1342
      %v1345 = vmul.f32 %v1334, %v1338
      %v1346 = vmul.f32 %v1332, %v1342
      %1347 = vrot.lane.b32.xlu0 %v1303, 112
      %v1348 = vpop.permute.xlu0 %1347
      %1349 = vrot.lane.b32.xlu0 %v1309, 112
      %v1350 = vpop.permute.xlu0 %1349
      %1351 = vrot.lane.b32.xlu0 %v1305, 112
      %v1352 = vpop.permute.xlu0 %1351
      %1353 = vrot.lane.b32.xlu0 %v1311, 112
      %v1354 = vpop.permute.xlu0 %1353
      %v1355 = vsel %vm1134, %v1348, %v1352
      %v1356 = vsel %vm1134, %v1350, %v1354
      %v1357 = vsel %vm1134, %v1352, %v1348
      %v1358 = vsel %vm1134, %v1354, %v1350
      %v1359 = vlaneseq
      %v1360 = vshrl.u32 %v1359, 7
      %v1361 = vsub.s32 7, %v1360
      %v1362 = vrot.slane %v713, %v1361
      %v1363 = vlaneseq
      %v1364 = vshrl.u32 %v1363, 7
      %v1365 = vsub.s32 7, %v1364
      %v1366 = vrot.slane %v714, %v1365
      %v1367 = vmul.f32 %v1355, %v1362
      %v1368 = vmul.f32 %v1357, %v1366
      %v1369 = vmul.f32 %v1356, %v1362
      %v1370 = vmul.f32 %v1358, %v1366
      %1372 = vset.pattern.permute.xlu0 0
      %1373 = vperm.xlu0 %1372, %v1321
      %v1374 = vpop.permute.xlu0 %1373
      %1377 = vset.pattern.permute.xlu0 0
      %1378 = vperm.xlu0 %1377, %v1322
      %v1379 = vpop.permute.xlu0 %1378
      %v1381 = vmul.f32 %v1343, %v1374
      %v1382 = vmul.f32 %v1344, %v1374
      %v1383 = vmul.f32 %v1345, %v1379
      %v1384 = vmul.f32 %v1346, %v1379
      %1385 = vset.pattern.permute.xlu0 3
      %1386 = vperm.xlu0 %1385, %v1321
      %v1387 = vpop.permute.xlu0 %1386
      %1389 = vset.pattern.permute.xlu0 3
      %1390 = vperm.xlu0 %1389, %v1322
      %v1391 = vpop.permute.xlu0 %1390
      %v1393 = vmul.f32 %v1303, %v1387
      %v1394 = vmul.f32 %v1305, %v1387
      %v1395 = vmul.f32 %v1309, %v1391
      %v1396 = vmul.f32 %v1311, %v1391
      %v1397 = vadd.f32 %v1381, %v1393
      %v1398 = vadd.f32 %v1382, %v1394
      %v1399 = vadd.f32 %v1383, %v1395
      %v1400 = vadd.f32 %v1384, %v1396
      %1401 = vset.pattern.permute.xlu0 6
      %1402 = vperm.xlu0 %1401, %v1321
      %v1403 = vpop.permute.xlu0 %1402
      %1405 = vset.pattern.permute.xlu0 6
      %1406 = vperm.xlu0 %1405, %v1322
      %v1407 = vpop.permute.xlu0 %1406
      %v1409 = vmul.f32 %v1367, %v1403
      %v1410 = vmul.f32 %v1368, %v1403
      %v1411 = vmul.f32 %v1369, %v1407
      %v1412 = vmul.f32 %v1370, %v1407
      %v1413 = vadd.f32 %v1397, %v1409
      %v1414 = vadd.f32 %v1398, %v1410
      %v1415 = vadd.f32 %v1399, %v1411
      %v1416 = vadd.f32 %v1400, %v1412
      %1417 = vset.pattern.permute.xlu0 1
      %1418 = vperm.xlu0 %1417, %v1321
      %v1419 = vpop.permute.xlu0 %1418
      %1421 = vset.pattern.permute.xlu0 1
      %1422 = vperm.xlu0 %1421, %v1322
      %v1423 = vpop.permute.xlu0 %1422
      %v1425 = vmul.f32 %v1343, %v1419
      %v1426 = vmul.f32 %v1344, %v1419
      %v1427 = vmul.f32 %v1345, %v1423
      %v1428 = vmul.f32 %v1346, %v1423
      %1429 = vset.pattern.permute.xlu0 4
      %1430 = vperm.xlu0 %1429, %v1321
      %v1431 = vpop.permute.xlu0 %1430
      %1433 = vset.pattern.permute.xlu0 4
      %1434 = vperm.xlu0 %1433, %v1322
      %v1435 = vpop.permute.xlu0 %1434
      %v1437 = vmul.f32 %v1303, %v1431
      %v1438 = vmul.f32 %v1305, %v1431
      %v1439 = vmul.f32 %v1309, %v1435
      %v1440 = vmul.f32 %v1311, %v1435
      %v1441 = vadd.f32 %v1425, %v1437
      %v1442 = vadd.f32 %v1426, %v1438
      %v1443 = vadd.f32 %v1427, %v1439
      %v1444 = vadd.f32 %v1428, %v1440
      %1445 = vset.pattern.permute.xlu0 7
      %1446 = vperm.xlu0 %1445, %v1321
      %v1447 = vpop.permute.xlu0 %1446
      %1449 = vset.pattern.permute.xlu0 7
      %1450 = vperm.xlu0 %1449, %v1322
      %v1451 = vpop.permute.xlu0 %1450
      %v1453 = vmul.f32 %v1367, %v1447
      %v1454 = vmul.f32 %v1368, %v1447
      %v1455 = vmul.f32 %v1369, %v1451
      %v1456 = vmul.f32 %v1370, %v1451
      %v1457 = vadd.f32 %v1441, %v1453
      %v1458 = vadd.f32 %v1442, %v1454
      %v1459 = vadd.f32 %v1443, %v1455
      %v1460 = vadd.f32 %v1444, %v1456
      %1461 = vset.pattern.permute.xlu0 2
      %1462 = vperm.xlu0 %1461, %v1321
      %v1463 = vpop.permute.xlu0 %1462
      %1465 = vset.pattern.permute.xlu0 2
      %1466 = vperm.xlu0 %1465, %v1322
      %v1467 = vpop.permute.xlu0 %1466
      %v1469 = vmul.f32 %v1343, %v1463
      %v1470 = vmul.f32 %v1344, %v1463
      %v1471 = vmul.f32 %v1345, %v1467
      %v1472 = vmul.f32 %v1346, %v1467
      %1473 = vset.pattern.permute.xlu0 5
      %1474 = vperm.xlu0 %1473, %v1321
      %v1475 = vpop.permute.xlu0 %1474
      %1477 = vset.pattern.permute.xlu0 5
      %1478 = vperm.xlu0 %1477, %v1322
      %v1479 = vpop.permute.xlu0 %1478
      %v1481 = vmul.f32 %v1303, %v1475
      %v1482 = vmul.f32 %v1305, %v1475
      %v1483 = vmul.f32 %v1309, %v1479
      %v1484 = vmul.f32 %v1311, %v1479
      %v1485 = vadd.f32 %v1469, %v1481
      %v1486 = vadd.f32 %v1470, %v1482
      %v1487 = vadd.f32 %v1471, %v1483
      %v1488 = vadd.f32 %v1472, %v1484
      %1489 = vset.pattern.permute.xlu0 8
      %1490 = vperm.xlu0 %1489, %v1321
      %v1491 = vpop.permute.xlu0 %1490
      %1493 = vset.pattern.permute.xlu0 8
      %1494 = vperm.xlu0 %1493, %v1322
      %v1495 = vpop.permute.xlu0 %1494
      %v1497 = vmul.f32 %v1367, %v1491
      %v1498 = vmul.f32 %v1368, %v1491
      %v1499 = vmul.f32 %v1369, %v1495
      %v1500 = vmul.f32 %v1370, %v1495
      %v1501 = vadd.f32 %v1485, %v1497
      %v1502 = vadd.f32 %v1486, %v1498
      %v1503 = vadd.f32 %v1487, %v1499
      %v1504 = vadd.f32 %v1488, %v1500
      %1505 = vrot.lane.b32.xlu0 %v1413, 1
      %v1506 = vpop.permute.xlu0 %1505
      %1507 = vrot.lane.b32.xlu0 %v1415, 1
      %v1508 = vpop.permute.xlu0 %1507
      %1509 = vrot.lane.b32.xlu0 %v1414, 1
      %v1510 = vpop.permute.xlu0 %1509
      %1511 = vrot.lane.b32.xlu0 %v1416, 1
      %v1512 = vpop.permute.xlu0 %1511
      %v1513 = vsel %vm1047, %v1506, %v1510
      %v1514 = vsel %vm1047, %v1508, %v1512
      %v1515 = vsel %vm1047, %v1510, %v1506
      %v1516 = vsel %vm1047, %v1512, %v1508
      %v1517 = vlaneseq
      %v1518 = vshrl.u32 %v1517, 7
      %v1519 = vsub.s32 3, %v1518
      %v1520 = vrot.slane %v713, %v1519
      %v1521 = vlaneseq
      %v1522 = vshrl.u32 %v1521, 7
      %v1523 = vsub.s32 3, %v1522
      %v1524 = vrot.slane %v714, %v1523
      %v1525 = vmul.f32 %v1515, %v1520
      %v1526 = vmul.f32 %v1513, %v1524
      %v1527 = vmul.f32 %v1516, %v1520
      %v1528 = vmul.f32 %v1514, %v1524
      %v1529 = vadd.f32 %v1457, %v1525
      %v1530 = vadd.f32 %v1458, %v1526
      %v1531 = vadd.f32 %v1459, %v1527
      %v1532 = vadd.f32 %v1460, %v1528
      %1533 = vrot.lane.b32.xlu0 %v1501, 127
      %v1534 = vpop.permute.xlu0 %1533
      %1535 = vrot.lane.b32.xlu0 %v1503, 127
      %v1536 = vpop.permute.xlu0 %1535
      %1537 = vrot.lane.b32.xlu0 %v1502, 127
      %v1538 = vpop.permute.xlu0 %1537
      %1539 = vrot.lane.b32.xlu0 %v1504, 127
      %v1540 = vpop.permute.xlu0 %1539
      %v1541 = vsel %vm1076, %v1534, %v1538
      %v1542 = vsel %vm1076, %v1536, %v1540
      %v1543 = vsel %vm1076, %v1538, %v1534
      %v1544 = vsel %vm1076, %v1540, %v1536
      %v1545 = vlaneseq
      %v1546 = vshrl.u32 %v1545, 7
      %v1547 = vsub.s32 5, %v1546
      %v1548 = vrot.slane %v713, %v1547
      %v1549 = vlaneseq
      %v1550 = vshrl.u32 %v1549, 7
      %v1551 = vsub.s32 5, %v1550
      %v1552 = vrot.slane %v714, %v1551
      %v1553 = vmul.f32 %v1541, %v1548
      %v1554 = vmul.f32 %v1543, %v1552
      %v1555 = vmul.f32 %v1542, %v1548
      %v1556 = vmul.f32 %v1544, %v1552
      %v1557 = vadd.f32 %v1529, %v1553
      %v1558 = vadd.f32 %v1530, %v1554
      %v1559 = vadd.f32 %v1531, %v1555
      %v1560 = vadd.f32 %v1532, %v1556
      %v1561 = vld [vmem:[%s9] sm:$0xff]
      %v1562 = vld [vmem:[%s9 + $0x8] sm:$0xff]
      %1564 = vset.pattern.permute.xlu0 0
      %1565 = vperm.xlu0 %1564, %v1561
      %v1566 = vpop.permute.xlu0 %1565
      %1569 = vset.pattern.permute.xlu0 0
      %1570 = vperm.xlu0 %1569, %v1562
      %v1571 = vpop.permute.xlu0 %1570
      %v1573 = vadd.f32 %v1557, %v1566
      %v1574 = vadd.f32 %v1558, %v1566
      %v1575 = vadd.f32 %v1559, %v1571
      %v1576 = vadd.f32 %v1560, %v1571
      %v1577 = vadd.f32 %v1573, %v1196
      %v1578 = vadd.f32 %v1574, %v1197
      %v1579 = vadd.f32 %v1575, %v1198
      %v1580 = vadd.f32 %v1576, %v1199
      %vm1581 = vcmp.ge.f32.partialorder %v1577, 0.0
      %vm1582 = vcmp.ge.f32.partialorder %v1578, 0.0
      %vm1583 = vcmp.ge.f32.partialorder %v1579, 0.0
      %vm1584 = vcmp.ge.f32.partialorder %v1580, 0.0
      %v1585 = vmul.f32 %v1577, 0.05
      %v1586 = vmul.f32 %v1578, 0.05
      %v1587 = vmul.f32 %v1579, 0.05
      %v1588 = vmul.f32 %v1580, 0.05
      %v1589 = vsel %vm1581, %v1577, %v1585
      %v1590 = vsel %vm1582, %v1578, %v1586
      %v1591 = vsel %vm1583, %v1579, %v1587
      %v1592 = vsel %vm1584, %v1580, %v1588
      %v1593 = vld [vmem:[%s10] sm:$0xff]
      %v1594 = vld [vmem:[%s10 + $0x8] sm:$0xf]
      %v1595 = vld [vmem:[%s11] sm:$0xff]
      %v1596 = vld [vmem:[%s11 + $0x8] sm:$0xf]
      %1598 = vset.pattern.permute.xlu0 0
      %1599 = vperm.xlu0 %1598, %v1595
      %v1600 = vpop.permute.xlu0 %1599
      %1603 = vset.pattern.permute.xlu0 0
      %1604 = vperm.xlu0 %1603, %v1596
      %v1605 = vpop.permute.xlu0 %1604
      %v1608 = vsel %vm735, %v1593, 0
      %v1611 = vsel %vm735, %v1594, 0
      %1613 = vmatprep.subr.mxu0 0.0
      %1614 = vmatpush1.msra.mxu0 0.0
      %1615 = vmatprep.subr.mxu0 0.0
      %1616 = vmatpush1.msra.mxu0 0.0
      %1617 = vmatprep.subr.mxu0 0.0
      %1618 = vmatpush1.msra.mxu0 0.0
      %1619 = vmatprep.subr.mxu0 0.0
      %1620 = vmatpush1.msra.mxu0 0.0
      %1621 = vmatprep.subr.mxu0 0.0
      %1622 = vmatpush1.msra.mxu0 0.0
      %1623 = vmatprep.subr.mxu0 0.0
      %1624 = vmatpush1.msra.mxu0 0.0
      %1625 = vmatprep.subr.mxu0 0.0
      %1626 = vmatpush1.msra.mxu0 0.0
      %1627 = vmatprep.subr.mxu0 0.0
      %1628 = vmatpush1.msra.mxu0 0.0
      %1629 = vmatprep.subr.mxu0 0.0
      %1630 = vmatpush1.msra.mxu0 0.0
      %1631 = vmatprep.subr.mxu0 0.0
      %1632 = vmatpush1.msra.mxu0 0.0
      %1633 = vmatprep.subr.mxu0 0.0
      %1634 = vmatpush1.msra.mxu0 0.0
      %1635 = vmatprep.subr.mxu0 0.0
      %1636 = vmatpush1.msra.mxu0 0.0
      %1637 = vmatprep.subr.mxu0 0.0
      %1638 = vmatpush1.msra.mxu0 0.0
      %1639 = vmatprep.subr.mxu0 0.0
      %1640 = vmatpush1.msra.mxu0 0.0
      %1641 = vmatprep.subr.mxu0 %v1592
      %1642 = vmatpush1.msra.mxu0 %v1591
      %1643 = vmatprep.subr.mxu0 %v1590
      %1644 = vmatpush1.msra.mxu0 %v1589
      %1645 = vmatprep.subr.mxu0 0.0
      %1646 = vmatpush2.msra.mxu0 0.0
      %1647 = vmatprep.subr.mxu0 0.0
      %1648 = vmatpush2.msra.mxu0 0.0
      %1649 = vmatprep.subr.mxu0 0.0
      %1650 = vmatpush2.msra.mxu0 0.0
      %1651 = vmatprep.subr.mxu0 0.0
      %1652 = vmatpush2.msra.mxu0 0.0
      %1653 = vmatprep.subr.mxu0 0.0
      %1654 = vmatpush2.msra.mxu0 0.0
      %1655 = vmatprep.subr.mxu0 0.0
      %1656 = vmatpush2.msra.mxu0 0.0
      %1657 = vmatprep.subr.mxu0 0.0
      %1658 = vmatpush2.msra.mxu0 0.0
      %1659 = vmatprep.subr.mxu0 0.0
      %1660 = vmatpush2.msra.mxu0 0.0
      %1661 = vmatprep.subr.mxu0 0.0
      %1662 = vmatpush2.msra.mxu0 0.0
      %1663 = vmatprep.subr.mxu0 0.0
      %1664 = vmatpush2.msra.mxu0 0.0
      %1665 = vmatprep.subr.mxu0 0.0
      %1666 = vmatpush2.msra.mxu0 0.0
      %1667 = vmatprep.subr.mxu0 0.0
      %1668 = vmatpush2.msra.mxu0 0.0
      %1669 = vmatprep.subr.mxu0 0.0
      %1670 = vmatpush2.msra.mxu0 0.0
      %1671 = vmatprep.subr.mxu0 0.0
      %1672 = vmatpush2.msra.mxu0 0.0
      %1673 = vmatprep.subr.mxu0 0.0
      %1674 = vmatpush2.msra.mxu0 0.0
      %1675 = vmatprep.subr.mxu0 0.0
      %1676 = vmatpush2.msra.mxu0 0.0
      %1677 = vmatprep.mubr.f32.mxu0 0.0
      %1678 = vmatmul.mubr.f32.gmra.mxu0 %v1608
      %v1679 = vpop.f32.mrf.mxu0
      %v1680 = vadd.f32 %v1600, %v1679
      %v1681 = vpop.f32.mrf.mxu0
      %v1682 = vadd.f32 %v1600, %v1681
      %1683 = vmatprep.mubr.f32.mxu0 0.0
      %1684 = vmatmul.mubr.f32.gmra.mxu0 %v1611
      %v1685 = vpop.f32.mrf.mxu0
      %v1686 = vadd.f32 %v1605, %v1685
      %v1687 = vpop.f32.mrf.mxu0
      %v1688 = vadd.f32 %v1605, %v1687
      %1689 = vdwg.mxu0
      %vm1690 = vcmp.ge.f32.partialorder %v1680, 0.0
      %vm1691 = vcmp.ge.f32.partialorder %v1682, 0.0
      %v1692 = vmul.f32 %v1680, 0.05
      %v1693 = vmul.f32 %v1682, 0.05
      %v1694 = vsel %vm1690, %v1680, %v1692
      %v1695 = vsel %vm1691, %v1682, %v1693
      %1696 = vst [vmem:[#allocation2 + $0x20] sm:$0xff] %v1694
      %1697 = vst [vmem:[#allocation2 + $0x28] sm:$0xff] %v1695
      %v1698 = vmax.f32 %v1686, 0.0
      %v1699 = vmax.f32 %v1688, 0.0
      %v1700 = vld [vmem:[%s12] sm:$0xff]
      %v1701 = vld [vmem:[%s12 + $0x8] sm:$0x1]
      %v1702 = vld [vmem:[%s13] sm:$0xff]
      %v1703 = vld [vmem:[%s13 + $0x8] sm:$0x1]
      %1705 = vset.pattern.permute.xlu0 0
      %1706 = vperm.xlu0 %1705, %v1702
      %v1707 = vpop.permute.xlu0 %1706
      %1710 = vset.pattern.permute.xlu0 0
      %1711 = vperm.xlu0 %1710, %v1703
      %v1712 = vpop.permute.xlu0 %1711
      %v1715 = vsel %vm843, %v1700, 0
      %v1718 = vsel %vm843, %v1701, 0
      %v1721 = vsel %vm850, %v1698, 0
      %v1724 = vsel %vm850, %v1699, 0
      %1726 = vmatprep.subr.mxu0 0.0
      %1727 = vmatpush1.msra.mxu0 0.0
      %1728 = vmatprep.subr.mxu0 0.0
      %1729 = vmatpush1.msra.mxu0 0.0
      %1730 = vmatprep.subr.mxu0 0.0
      %1731 = vmatpush1.msra.mxu0 0.0
      %1732 = vmatprep.subr.mxu0 0.0
      %1733 = vmatpush1.msra.mxu0 0.0
      %1734 = vmatprep.subr.mxu0 0.0
      %1735 = vmatpush1.msra.mxu0 0.0
      %1736 = vmatprep.subr.mxu0 0.0
      %1737 = vmatpush1.msra.mxu0 0.0
      %1738 = vmatprep.subr.mxu0 0.0
      %1739 = vmatpush1.msra.mxu0 0.0
      %1740 = vmatprep.subr.mxu0 0.0
      %1741 = vmatpush1.msra.mxu0 0.0
      %1742 = vmatprep.subr.mxu0 0.0
      %1743 = vmatpush1.msra.mxu0 0.0
      %1744 = vmatprep.subr.mxu0 0.0
      %1745 = vmatpush1.msra.mxu0 0.0
      %1746 = vmatprep.subr.mxu0 0.0
      %1747 = vmatpush1.msra.mxu0 0.0
      %1748 = vmatprep.subr.mxu0 0.0
      %1749 = vmatpush1.msra.mxu0 0.0
      %1750 = vmatprep.subr.mxu0 0.0
      %1751 = vmatpush1.msra.mxu0 0.0
      %1752 = vmatprep.subr.mxu0 0.0
      %1753 = vmatpush1.msra.mxu0 0.0
      %1754 = vmatprep.subr.mxu0 0.0
      %1755 = vmatpush1.msra.mxu0 0.0
      %1756 = vmatprep.subr.mxu0 %v1724
      %1757 = vmatpush1.msra.mxu0 %v1721
      %1758 = vmatprep.subr.mxu0 0.0
      %1759 = vmatpush2.msra.mxu0 0.0
      %1760 = vmatprep.subr.mxu0 0.0
      %1761 = vmatpush2.msra.mxu0 0.0
      %1762 = vmatprep.subr.mxu0 0.0
      %1763 = vmatpush2.msra.mxu0 0.0
      %1764 = vmatprep.subr.mxu0 0.0
      %1765 = vmatpush2.msra.mxu0 0.0
      %1766 = vmatprep.subr.mxu0 0.0
      %1767 = vmatpush2.msra.mxu0 0.0
      %1768 = vmatprep.subr.mxu0 0.0
      %1769 = vmatpush2.msra.mxu0 0.0
      %1770 = vmatprep.subr.mxu0 0.0
      %1771 = vmatpush2.msra.mxu0 0.0
      %1772 = vmatprep.subr.mxu0 0.0
      %1773 = vmatpush2.msra.mxu0 0.0
      %1774 = vmatprep.subr.mxu0 0.0
      %1775 = vmatpush2.msra.mxu0 0.0
      %1776 = vmatprep.subr.mxu0 0.0
      %1777 = vmatpush2.msra.mxu0 0.0
      %1778 = vmatprep.subr.mxu0 0.0
      %1779 = vmatpush2.msra.mxu0 0.0
      %1780 = vmatprep.subr.mxu0 0.0
      %1781 = vmatpush2.msra.mxu0 0.0
      %1782 = vmatprep.subr.mxu0 0.0
      %1783 = vmatpush2.msra.mxu0 0.0
      %1784 = vmatprep.subr.mxu0 0.0
      %1785 = vmatpush2.msra.mxu0 0.0
      %1786 = vmatprep.subr.mxu0 0.0
      %1787 = vmatpush2.msra.mxu0 0.0
      %1788 = vmatprep.subr.mxu0 0.0
      %1789 = vmatpush2.msra.mxu0 0.0
      %1790 = vmatprep.mubr.f32.mxu0 0.0
      %1791 = vmatmul.mubr.f32.gmra.mxu0 %v1715
      %v1792 = vpop.f32.mrf.mxu0
      %v1793 = vadd.f32 %v1707, %v1792
      %v1794 = vpop.f32.mrf.mxu0
      %v1795 = vadd.f32 %v1707, %v1794
      %1796 = vmatprep.mubr.f32.mxu0 0.0
      %1797 = vmatmul.mubr.f32.gmra.mxu0 %v1718
      %v1798 = vpop.f32.mrf.mxu0
      %v1799 = vadd.f32 %v1712, %v1798
      %v1800 = vpop.f32.mrf.mxu0
      %v1801 = vadd.f32 %v1712, %v1800
      %1802 = vdwg.mxu0
      %v1803 = vmul.f32 %v1793, %v713
      %v1804 = vmul.f32 %v1795, %v714
      %v1805 = vmul.f32 %v1799, %v715
      %v1806 = vmul.f32 %v1801, %v716
      %v1807 = vlaneseq
      %v1808 = vshrl.u32 %v1807, 7
      %v1809 = vsub.s32 4, %v1808
      %v1810 = vrot.slane %v1803, %v1809
      %v1811 = vlaneseq
      %v1812 = vshrl.u32 %v1811, 7
      %v1813 = vsub.s32 4, %v1812
      %v1814 = vrot.slane %v1804, %v1813
      %v1815 = vmul.f32 %v1589, %v1810
      %v1816 = vmul.f32 %v1590, %v1814
      %v1817 = vmul.f32 %v1591, %v1810
      %v1818 = vmul.f32 %v1592, %v1814
      %1819 = vrot.lane.b32.xlu0 %v1589, 17
      %v1820 = vpop.permute.xlu0 %1819
      %1821 = vrot.lane.b32.xlu0 %v1591, 17
      %v1822 = vpop.permute.xlu0 %1821
      %1823 = vrot.lane.b32.xlu0 %v1590, 17
      %v1824 = vpop.permute.xlu0 %1823
      %1825 = vrot.lane.b32.xlu0 %v1592, 17
      %v1826 = vpop.permute.xlu0 %1825
      %v1827 = vsel %vm960, %v1820, %v1824
      %v1828 = vsel %vm960, %v1822, %v1826
      %v1829 = vsel %vm960, %v1824, %v1820
      %v1830 = vsel %vm960, %v1826, %v1822
      %v1831 = vlaneseq
      %v1832 = vshrl.u32 %v1831, 7
      %v1833 = vsub.s32 0, %v1832
      %v1834 = vrot.slane %v1803, %v1833
      %v1835 = vlaneseq
      %v1836 = vshrl.u32 %v1835, 7
      %v1837 = vsub.s32 0, %v1836
      %v1838 = vrot.slane %v1804, %v1837
      %v1839 = vmul.f32 %v1829, %v1834
      %v1840 = vmul.f32 %v1827, %v1838
      %v1841 = vmul.f32 %v1830, %v1834
      %v1842 = vmul.f32 %v1828, %v1838
      %v1843 = vadd.f32 %v1815, %v1839
      %v1844 = vadd.f32 %v1816, %v1840
      %v1845 = vadd.f32 %v1817, %v1841
      %v1846 = vadd.f32 %v1818, %v1842
      %1847 = vrot.lane.b32.xlu0 %v1589, 16
      %v1848 = vpop.permute.xlu0 %1847
      %1849 = vrot.lane.b32.xlu0 %v1591, 16
      %v1850 = vpop.permute.xlu0 %1849
      %1851 = vrot.lane.b32.xlu0 %v1590, 16
      %v1852 = vpop.permute.xlu0 %1851
      %1853 = vrot.lane.b32.xlu0 %v1592, 16
      %v1854 = vpop.permute.xlu0 %1853
      %v1855 = vsel %vm989, %v1848, %v1852
      %v1856 = vsel %vm989, %v1850, %v1854
      %v1857 = vsel %vm989, %v1852, %v1848
      %v1858 = vsel %vm989, %v1854, %v1850
      %v1859 = vlaneseq
      %v1860 = vshrl.u32 %v1859, 7
      %v1861 = vsub.s32 1, %v1860
      %v1862 = vrot.slane %v1803, %v1861
      %v1863 = vlaneseq
      %v1864 = vshrl.u32 %v1863, 7
      %v1865 = vsub.s32 1, %v1864
      %v1866 = vrot.slane %v1804, %v1865
      %v1867 = vmul.f32 %v1857, %v1862
      %v1868 = vmul.f32 %v1855, %v1866
      %v1869 = vmul.f32 %v1858, %v1862
      %v1870 = vmul.f32 %v1856, %v1866
      %v1871 = vadd.f32 %v1843, %v1867
      %v1872 = vadd.f32 %v1844, %v1868
      %v1873 = vadd.f32 %v1845, %v1869
      %v1874 = vadd.f32 %v1846, %v1870
      %1875 = vrot.lane.b32.xlu0 %v1589, 15
      %v1876 = vpop.permute.xlu0 %1875
      %1877 = vrot.lane.b32.xlu0 %v1591, 15
      %v1878 = vpop.permute.xlu0 %1877
      %1879 = vrot.lane.b32.xlu0 %v1590, 15
      %v1880 = vpop.permute.xlu0 %1879
      %1881 = vrot.lane.b32.xlu0 %v1592, 15
      %v1882 = vpop.permute.xlu0 %1881
      %v1883 = vsel %vm1018, %v1876, %v1880
      %v1884 = vsel %vm1018, %v1878, %v1882
      %v1885 = vsel %vm1018, %v1880, %v1876
      %v1886 = vsel %vm1018, %v1882, %v1878
      %v1887 = vlaneseq
      %v1888 = vshrl.u32 %v1887, 7
      %v1889 = vsub.s32 2, %v1888
      %v1890 = vrot.slane %v1803, %v1889
      %v1891 = vlaneseq
      %v1892 = vshrl.u32 %v1891, 7
      %v1893 = vsub.s32 2, %v1892
      %v1894 = vrot.slane %v1804, %v1893
      %v1895 = vmul.f32 %v1885, %v1890
      %v1896 = vmul.f32 %v1883, %v1894
      %v1897 = vmul.f32 %v1886, %v1890
      %v1898 = vmul.f32 %v1884, %v1894
      %v1899 = vadd.f32 %v1871, %v1895
      %v1900 = vadd.f32 %v1872, %v1896
      %v1901 = vadd.f32 %v1873, %v1897
      %v1902 = vadd.f32 %v1874, %v1898
      %1903 = vrot.lane.b32.xlu0 %v1589, 1
      %v1904 = vpop.permute.xlu0 %1903
      %1905 = vrot.lane.b32.xlu0 %v1591, 1
      %v1906 = vpop.permute.xlu0 %1905
      %1907 = vrot.lane.b32.xlu0 %v1590, 1
      %v1908 = vpop.permute.xlu0 %1907
      %1909 = vrot.lane.b32.xlu0 %v1592, 1
      %v1910 = vpop.permute.xlu0 %1909
      %v1911 = vsel %vm1047, %v1904, %v1908
      %v1912 = vsel %vm1047, %v1906, %v1910
      %v1913 = vsel %vm1047, %v1908, %v1904
      %v1914 = vsel %vm1047, %v1910, %v1906
      %v1915 = vlaneseq
      %v1916 = vshrl.u32 %v1915, 7
      %v1917 = vsub.s32 3, %v1916
      %v1918 = vrot.slane %v1803, %v1917
      %v1919 = vlaneseq
      %v1920 = vshrl.u32 %v1919, 7
      %v1921 = vsub.s32 3, %v1920
      %v1922 = vrot.slane %v1804, %v1921
      %v1923 = vmul.f32 %v1913, %v1918
      %v1924 = vmul.f32 %v1911, %v1922
      %v1925 = vmul.f32 %v1914, %v1918
      %v1926 = vmul.f32 %v1912, %v1922
      %v1927 = vadd.f32 %v1899, %v1923
      %v1928 = vadd.f32 %v1900, %v1924
      %v1929 = vadd.f32 %v1901, %v1925
      %v1930 = vadd.f32 %v1902, %v1926
      %1931 = vrot.lane.b32.xlu0 %v1589, 127
      %v1932 = vpop.permute.xlu0 %1931
      %1933 = vrot.lane.b32.xlu0 %v1591, 127
      %v1934 = vpop.permute.xlu0 %1933
      %1935 = vrot.lane.b32.xlu0 %v1590, 127
      %v1936 = vpop.permute.xlu0 %1935
      %1937 = vrot.lane.b32.xlu0 %v1592, 127
      %v1938 = vpop.permute.xlu0 %1937
      %v1939 = vsel %vm1076, %v1932, %v1936
      %v1940 = vsel %vm1076, %v1934, %v1938
      %v1941 = vsel %vm1076, %v1936, %v1932
      %v1942 = vsel %vm1076, %v1938, %v1934
      %v1943 = vlaneseq
      %v1944 = vshrl.u32 %v1943, 7
      %v1945 = vsub.s32 5, %v1944
      %v1946 = vrot.slane %v1803, %v1945
      %v1947 = vlaneseq
      %v1948 = vshrl.u32 %v1947, 7
      %v1949 = vsub.s32 5, %v1948
      %v1950 = vrot.slane %v1804, %v1949
      %v1951 = vmul.f32 %v1939, %v1946
      %v1952 = vmul.f32 %v1941, %v1950
      %v1953 = vmul.f32 %v1940, %v1946
      %v1954 = vmul.f32 %v1942, %v1950
      %v1955 = vadd.f32 %v1927, %v1951
      %v1956 = vadd.f32 %v1928, %v1952
      %v1957 = vadd.f32 %v1929, %v1953
      %v1958 = vadd.f32 %v1930, %v1954
      %1959 = vrot.lane.b32.xlu0 %v1589, 113
      %v1960 = vpop.permute.xlu0 %1959
      %1961 = vrot.lane.b32.xlu0 %v1591, 113
      %v1962 = vpop.permute.xlu0 %1961
      %1963 = vrot.lane.b32.xlu0 %v1590, 113
      %v1964 = vpop.permute.xlu0 %1963
      %1965 = vrot.lane.b32.xlu0 %v1592, 113
      %v1966 = vpop.permute.xlu0 %1965
      %v1967 = vsel %vm1105, %v1960, %v1964
      %v1968 = vsel %vm1105, %v1962, %v1966
      %v1969 = vsel %vm1105, %v1964, %v1960
      %v1970 = vsel %vm1105, %v1966, %v1962
      %v1971 = vlaneseq
      %v1972 = vshrl.u32 %v1971, 7
      %v1973 = vsub.s32 6, %v1972
      %v1974 = vrot.slane %v1803, %v1973
      %v1975 = vlaneseq
      %v1976 = vshrl.u32 %v1975, 7
      %v1977 = vsub.s32 6, %v1976
      %v1978 = vrot.slane %v1804, %v1977
      %v1979 = vmul.f32 %v1967, %v1974
      %v1980 = vmul.f32 %v1969, %v1978
      %v1981 = vmul.f32 %v1968, %v1974
      %v1982 = vmul.f32 %v1970, %v1978
      %v1983 = vadd.f32 %v1955, %v1979
      %v1984 = vadd.f32 %v1956, %v1980
      %v1985 = vadd.f32 %v1957, %v1981
      %v1986 = vadd.f32 %v1958, %v1982
      %1987 = vrot.lane.b32.xlu0 %v1589, 112
      %v1988 = vpop.permute.xlu0 %1987
      %1989 = vrot.lane.b32.xlu0 %v1591, 112
      %v1990 = vpop.permute.xlu0 %1989
      %1991 = vrot.lane.b32.xlu0 %v1590, 112
      %v1992 = vpop.permute.xlu0 %1991
      %1993 = vrot.lane.b32.xlu0 %v1592, 112
      %v1994 = vpop.permute.xlu0 %1993
      %v1995 = vsel %vm1134, %v1988, %v1992
      %v1996 = vsel %vm1134, %v1990, %v1994
      %v1997 = vsel %vm1134, %v1992, %v1988
      %v1998 = vsel %vm1134, %v1994, %v1990
      %v1999 = vlaneseq
      %v2000 = vshrl.u32 %v1999, 7
      %v2001 = vsub.s32 7, %v2000
      %v2002 = vrot.slane %v1803, %v2001
      %v2003 = vlaneseq
      %v2004 = vshrl.u32 %v2003, 7
      %v2005 = vsub.s32 7, %v2004
      %v2006 = vrot.slane %v1804, %v2005
      %v2007 = vmul.f32 %v1995, %v2002
      %v2008 = vmul.f32 %v1997, %v2006
      %v2009 = vmul.f32 %v1996, %v2002
      %v2010 = vmul.f32 %v1998, %v2006
      %v2011 = vadd.f32 %v1983, %v2007
      %v2012 = vadd.f32 %v1984, %v2008
      %v2013 = vadd.f32 %v1985, %v2009
      %v2014 = vadd.f32 %v1986, %v2010
      %2015 = vrot.lane.b32.xlu0 %v1589, 111
      %v2016 = vpop.permute.xlu0 %2015
      %2017 = vrot.lane.b32.xlu0 %v1591, 111
      %v2018 = vpop.permute.xlu0 %2017
      %2019 = vrot.lane.b32.xlu0 %v1590, 111
      %v2020 = vpop.permute.xlu0 %2019
      %2021 = vrot.lane.b32.xlu0 %v1592, 111
      %v2022 = vpop.permute.xlu0 %2021
      %v2023 = vsel %vm1163, %v2016, %v2020
      %v2024 = vsel %vm1163, %v2018, %v2022
      %v2025 = vsel %vm1163, %v2020, %v2016
      %v2026 = vsel %vm1163, %v2022, %v2018
      %v2027 = vlaneseq
      %v2028 = vshrl.u32 %v2027, 7
      %v2029 = vsub.s32 0, %v2028
      %v2030 = vrot.slane %v1805, %v2029
      %v2031 = vlaneseq
      %v2032 = vshrl.u32 %v2031, 7
      %v2033 = vsub.s32 0, %v2032
      %v2034 = vrot.slane %v1806, %v2033
      %v2035 = vmul.f32 %v2023, %v2030
      %v2036 = vmul.f32 %v2025, %v2034
      %v2037 = vmul.f32 %v2024, %v2030
      %v2038 = vmul.f32 %v2026, %v2034
      %v2039 = vadd.f32 %v2011, %v2035
      %v2040 = vadd.f32 %v2012, %v2036
      %v2041 = vadd.f32 %v2013, %v2037
      %v2042 = vadd.f32 %v2014, %v2038
      %v2043 = vadd.f32 %v2039, %v1589
      %v2044 = vadd.f32 %v2040, %v1590
      %v2045 = vadd.f32 %v2041, %v1591
      %v2046 = vadd.f32 %v2042, %v1592
      %vm2047 = vcmp.ge.f32.partialorder %v2043, 0.0
      %vm2048 = vcmp.ge.f32.partialorder %v2044, 0.0
      %vm2049 = vcmp.ge.f32.partialorder %v2045, 0.0
      %vm2050 = vcmp.ge.f32.partialorder %v2046, 0.0
      %v2051 = vmul.f32 %v2043, 0.05
      %v2052 = vmul.f32 %v2044, 0.05
      %v2053 = vmul.f32 %v2045, 0.05
      %v2054 = vmul.f32 %v2046, 0.05
      %v2055 = vsel %vm2047, %v2043, %v2051
      %v2056 = vsel %vm2048, %v2044, %v2052
      %v2057 = vsel %vm2049, %v2045, %v2053
      %v2058 = vsel %vm2050, %v2046, %v2054
      %v2059 = vld [vmem:[%s14] sm:$0xff]
      %v2061 = vsel %vm735, %v2059, 0
      %2063 = vmatprep.subr.mxu0 0.0
      %2064 = vmatpush1.msra.mxu0 0.0
      %2065 = vmatprep.subr.mxu0 0.0
      %2066 = vmatpush1.msra.mxu0 0.0
      %2067 = vmatprep.subr.mxu0 0.0
      %2068 = vmatpush1.msra.mxu0 0.0
      %2069 = vmatprep.subr.mxu0 0.0
      %2070 = vmatpush1.msra.mxu0 0.0
      %2071 = vmatprep.subr.mxu0 0.0
      %2072 = vmatpush1.msra.mxu0 0.0
      %2073 = vmatprep.subr.mxu0 0.0
      %2074 = vmatpush1.msra.mxu0 0.0
      %2075 = vmatprep.subr.mxu0 0.0
      %2076 = vmatpush1.msra.mxu0 0.0
      %2077 = vmatprep.subr.mxu0 0.0
      %2078 = vmatpush1.msra.mxu0 0.0
      %2079 = vmatprep.subr.mxu0 0.0
      %2080 = vmatpush1.msra.mxu0 0.0
      %2081 = vmatprep.subr.mxu0 0.0
      %2082 = vmatpush1.msra.mxu0 0.0
      %2083 = vmatprep.subr.mxu0 0.0
      %2084 = vmatpush1.msra.mxu0 0.0
      %2085 = vmatprep.subr.mxu0 0.0
      %2086 = vmatpush1.msra.mxu0 0.0
      %2087 = vmatprep.subr.mxu0 0.0
      %2088 = vmatpush1.msra.mxu0 0.0
      %2089 = vmatprep.subr.mxu0 0.0
      %2090 = vmatpush1.msra.mxu0 0.0
      %2091 = vmatprep.subr.mxu0 %v2058
      %2092 = vmatpush1.msra.mxu0 %v2057
      %2093 = vmatprep.subr.mxu0 %v2056
      %2094 = vmatpush1.msra.mxu0 %v2055
      %2095 = vmatprep.subr.mxu0 0.0
      %2096 = vmatpush2.msra.mxu0 0.0
      %2097 = vmatprep.subr.mxu0 0.0
      %2098 = vmatpush2.msra.mxu0 0.0
      %2099 = vmatprep.subr.mxu0 0.0
      %2100 = vmatpush2.msra.mxu0 0.0
      %2101 = vmatprep.subr.mxu0 0.0
      %2102 = vmatpush2.msra.mxu0 0.0
      %2103 = vmatprep.subr.mxu0 0.0
      %2104 = vmatpush2.msra.mxu0 0.0
      %2105 = vmatprep.subr.mxu0 0.0
      %2106 = vmatpush2.msra.mxu0 0.0
      %2107 = vmatprep.subr.mxu0 0.0
      %2108 = vmatpush2.msra.mxu0 0.0
      %2109 = vmatprep.subr.mxu0 0.0
      %2110 = vmatpush2.msra.mxu0 0.0
      %2111 = vmatprep.subr.mxu0 0.0
      %2112 = vmatpush2.msra.mxu0 0.0
      %2113 = vmatprep.subr.mxu0 0.0
      %2114 = vmatpush2.msra.mxu0 0.0
      %2115 = vmatprep.subr.mxu0 0.0
      %2116 = vmatpush2.msra.mxu0 0.0
      %2117 = vmatprep.subr.mxu0 0.0
      %2118 = vmatpush2.msra.mxu0 0.0
      %2119 = vmatprep.subr.mxu0 0.0
      %2120 = vmatpush2.msra.mxu0 0.0
      %2121 = vmatprep.subr.mxu0 0.0
      %2122 = vmatpush2.msra.mxu0 0.0
      %2123 = vmatprep.subr.mxu0 0.0
      %2124 = vmatpush2.msra.mxu0 0.0
      %2125 = vmatprep.subr.mxu0 0.0
      %2126 = vmatpush2.msra.mxu0 0.0
      %2127 = vmatprep.mubr.f32.mxu0 0.0
      %2128 = vmatmul.mubr.f32.gmra.mxu0 %v2061
      %v2129 = vpop.f32.mrf.mxu0
      %v2130 = vadd.f32 0.0, %v2129
      %v2131 = vpop.f32.mrf.mxu0
      %v2132 = vadd.f32 0.0, %v2131
      %2133 = vdwg.mxu0
      %v2134 = vld [vmem:[%s15] sm:$0xff]
      %2135 = vrot.lane.b32.xlu0 %v2130, 16
      %v2136 = vpop.permute.xlu0 %2135
      %2137 = vrot.lane.b32.xlu0 %v2132, 16
      %v2138 = vpop.permute.xlu0 %2137
      %v2139 = vsel %vm989, %v2136, %v2138
      %v2140 = vsel %vm989, %v2138, %v2136
      %v2141 = vmul.f32 %v2140, %v1338
      %v2142 = vmul.f32 %v2139, %v1342
      %2143 = vrot.lane.b32.xlu0 %v2130, 112
      %v2144 = vpop.permute.xlu0 %2143
      %2145 = vrot.lane.b32.xlu0 %v2132, 112
      %v2146 = vpop.permute.xlu0 %2145
      %v2147 = vsel %vm1134, %v2144, %v2146
      %v2148 = vsel %vm1134, %v2146, %v2144
      %v2149 = vmul.f32 %v2147, %v1362
      %v2150 = vmul.f32 %v2148, %v1366
      %2152 = vset.pattern.permute.xlu0 0
      %2153 = vperm.xlu0 %2152, %v2134
      %v2154 = vpop.permute.xlu0 %2153
      %v2156 = vmul.f32 %v2141, %v2154
      %v2157 = vmul.f32 %v2142, %v2154
      %2158 = vset.pattern.permute.xlu0 3
      %2159 = vperm.xlu0 %2158, %v2134
      %v2160 = vpop.permute.xlu0 %2159
      %v2162 = vmul.f32 %v2130, %v2160
      %v2163 = vmul.f32 %v2132, %v2160
      %v2164 = vadd.f32 %v2156, %v2162
      %v2165 = vadd.f32 %v2157, %v2163
      %2166 = vset.pattern.permute.xlu0 6
      %2167 = vperm.xlu0 %2166, %v2134
      %v2168 = vpop.permute.xlu0 %2167
      %v2170 = vmul.f32 %v2149, %v2168
      %v2171 = vmul.f32 %v2150, %v2168
      %v2172 = vadd.f32 %v2164, %v2170
      %v2173 = vadd.f32 %v2165, %v2171
      %2174 = vset.pattern.permute.xlu0 1
      %2175 = vperm.xlu0 %2174, %v2134
      %v2176 = vpop.permute.xlu0 %2175
      %v2178 = vmul.f32 %v2141, %v2176
      %v2179 = vmul.f32 %v2142, %v2176
      %2180 = vset.pattern.permute.xlu0 4
      %2181 = vperm.xlu0 %2180, %v2134
      %v2182 = vpop.permute.xlu0 %2181
      %v2184 = vmul.f32 %v2130, %v2182
      %v2185 = vmul.f32 %v2132, %v2182
      %v2186 = vadd.f32 %v2178, %v2184
      %v2187 = vadd.f32 %v2179, %v2185
      %2188 = vset.pattern.permute.xlu0 7
      %2189 = vperm.xlu0 %2188, %v2134
      %v2190 = vpop.permute.xlu0 %2189
      %v2192 = vmul.f32 %v2149, %v2190
      %v2193 = vmul.f32 %v2150, %v2190
      %v2194 = vadd.f32 %v2186, %v2192
      %v2195 = vadd.f32 %v2187, %v2193
      %2196 = vset.pattern.permute.xlu0 2
      %2197 = vperm.xlu0 %2196, %v2134
      %v2198 = vpop.permute.xlu0 %2197
      %v2200 = vmul.f32 %v2141, %v2198
      %v2201 = vmul.f32 %v2142, %v2198
      %2202 = vset.pattern.permute.xlu0 5
      %2203 = vperm.xlu0 %2202, %v2134
      %v2204 = vpop.permute.xlu0 %2203
      %v2206 = vmul.f32 %v2130, %v2204
      %v2207 = vmul.f32 %v2132, %v2204
      %v2208 = vadd.f32 %v2200, %v2206
      %v2209 = vadd.f32 %v2201, %v2207
      %2210 = vset.pattern.permute.xlu0 8
      %2211 = vperm.xlu0 %2210, %v2134
      %v2212 = vpop.permute.xlu0 %2211
      %v2214 = vmul.f32 %v2149, %v2212
      %v2215 = vmul.f32 %v2150, %v2212
      %v2216 = vadd.f32 %v2208, %v2214
      %v2217 = vadd.f32 %v2209, %v2215
      %2218 = vrot.lane.b32.xlu0 %v2172, 1
      %v2219 = vpop.permute.xlu0 %2218
      %2220 = vrot.lane.b32.xlu0 %v2173, 1
      %v2221 = vpop.permute.xlu0 %2220
      %v2222 = vsel %vm1047, %v2219, %v2221
      %v2223 = vsel %vm1047, %v2221, %v2219
      %v2224 = vmul.f32 %v2223, %v1520
      %v2225 = vmul.f32 %v2222, %v1524
      %v2226 = vadd.f32 %v2194, %v2224
      %v2227 = vadd.f32 %v2195, %v2225
      %2228 = vrot.lane.b32.xlu0 %v2216, 127
      %v2229 = vpop.permute.xlu0 %2228
      %2230 = vrot.lane.b32.xlu0 %v2217, 127
      %v2231 = vpop.permute.xlu0 %2230
      %v2232 = vsel %vm1076, %v2229, %v2231
      %v2233 = vsel %vm1076, %v2231, %v2229
      %v2234 = vmul.f32 %v2232, %v1548
      %v2235 = vmul.f32 %v2233, %v1552
      %v2236 = vadd.f32 %v2226, %v2234
      %v2237 = vadd.f32 %v2227, %v2235
      %v2238 = vld [vmem:[%s16] sm:$0xff]
      %2240 = vset.pattern.permute.xlu0 0
      %2241 = vperm.xlu0 %2240, %v2238
      %v2242 = vpop.permute.xlu0 %2241
      %v2244 = vadd.f32 %v2236, %v2242
      %v2245 = vadd.f32 %v2237, %v2242
      %vm2246 = vcmp.ge.f32.partialorder %v2244, 0.0
      %vm2247 = vcmp.ge.f32.partialorder %v2245, 0.0
      %v2248 = vmul.f32 %v2244, 0.05
      %v2249 = vmul.f32 %v2245, 0.05
      %v2250 = vsel %vm2246, %v2244, %v2248
      %v2251 = vsel %vm2247, %v2245, %v2249
      %2252 = vst [vmem:[#allocation2 + $0x30] sm:$0xff] %v2250
      %2253 = vst [vmem:[#allocation2 + $0x38] sm:$0xff] %v2251
      %v2254 = vld [vmem:[%s17] sm:$0xff]
      %v2255 = vld [vmem:[%s17 + $0x8] sm:$0xff]
      %v2256 = vld [vmem:[#allocation2] sm:$0xff]
      %v2257 = vld [vmem:[#allocation2 + $0x8] sm:$0xff]
      %v2258 = vld [vmem:[#allocation2 + $0x10] sm:$0xff]
      %v2259 = vld [vmem:[#allocation2 + $0x18] sm:$0xff]
      %v2260 = vld [vmem:[#allocation2 + $0x20] sm:$0xff]
      %v2261 = vld [vmem:[#allocation2 + $0x28] sm:$0xff]
      %v2262 = vld [vmem:[#allocation2 + $0x30] sm:$0xff]
      %v2263 = vld [vmem:[#allocation2 + $0x38] sm:$0xff]
      %v2264 = vld [vmem:[%s18] sm:$0xff]
      %v2265 = vld [vmem:[%s18 + $0x8] sm:$0xff]
      %2267 = vset.pattern.permute.xlu0 0
      %2268 = vperm.xlu0 %2267, %v2264
      %v2269 = vpop.permute.xlu0 %2268
      %2272 = vset.pattern.permute.xlu0 0
      %2273 = vperm.xlu0 %2272, %v2265
      %v2274 = vpop.permute.xlu0 %2273
      %vm2276 = vcmask 261120
      %v2278 = vsel %vm2276, %v2254, 0
      %v2281 = vsel %vm2276, %v2255, 0
      %2283 = vmatprep.subr.mxu0 0.0
      %2284 = vmatpush1.msra.mxu0 0.0
      %2285 = vmatprep.subr.mxu0 0.0
      %2286 = vmatpush1.msra.mxu0 0.0
      %2287 = vmatprep.subr.mxu0 0.0
      %2288 = vmatpush1.msra.mxu0 0.0
      %2289 = vmatprep.subr.mxu0 0.0
      %2290 = vmatpush1.msra.mxu0 0.0
      %2291 = vmatprep.subr.mxu0 0.0
      %2292 = vmatpush1.msra.mxu0 0.0
      %2293 = vmatprep.subr.mxu0 0.0
      %2294 = vmatpush1.msra.mxu0 0.0
      %2295 = vmatprep.subr.mxu0 0.0
      %2296 = vmatpush1.msra.mxu0 0.0
      %2297 = vmatprep.subr.mxu0 0.0
      %2298 = vmatpush1.msra.mxu0 0.0
      %2299 = vmatprep.subr.mxu0 0.0
      %2300 = vmatpush1.msra.mxu0 0.0
      %2301 = vmatprep.subr.mxu0 0.0
      %2302 = vmatpush1.msra.mxu0 0.0
      %2303 = vmatprep.subr.mxu0 0.0
      %2304 = vmatpush1.msra.mxu0 0.0
      %2305 = vmatprep.subr.mxu0 0.0
      %2306 = vmatpush1.msra.mxu0 0.0
      %2307 = vmatprep.subr.mxu0 %v2263
      %2308 = vmatpush1.msra.mxu0 %v2262
      %2309 = vmatprep.subr.mxu0 %v2261
      %2310 = vmatpush1.msra.mxu0 %v2260
      %2311 = vmatprep.subr.mxu0 %v2259
      %2312 = vmatpush1.msra.mxu0 %v2258
      %2313 = vmatprep.subr.mxu0 %v2257
      %2314 = vmatpush1.msra.mxu0 %v2256
      %2315 = vmatprep.subr.mxu0 0.0
      %2316 = vmatpush2.msra.mxu0 0.0
      %2317 = vmatprep.subr.mxu0 0.0
      %2318 = vmatpush2.msra.mxu0 0.0
      %2319 = vmatprep.subr.mxu0 0.0
      %2320 = vmatpush2.msra.mxu0 0.0
      %2321 = vmatprep.subr.mxu0 0.0
      %2322 = vmatpush2.msra.mxu0 0.0
      %2323 = vmatprep.subr.mxu0 0.0
      %2324 = vmatpush2.msra.mxu0 0.0
      %2325 = vmatprep.subr.mxu0 0.0
      %2326 = vmatpush2.msra.mxu0 0.0
      %2327 = vmatprep.subr.mxu0 0.0
      %2328 = vmatpush2.msra.mxu0 0.0
      %2329 = vmatprep.subr.mxu0 0.0
      %2330 = vmatpush2.msra.mxu0 0.0
      %2331 = vmatprep.subr.mxu0 0.0
      %2332 = vmatpush2.msra.mxu0 0.0
      %2333 = vmatprep.subr.mxu0 0.0
      %2334 = vmatpush2.msra.mxu0 0.0
      %2335 = vmatprep.subr.mxu0 0.0
      %2336 = vmatpush2.msra.mxu0 0.0
      %2337 = vmatprep.subr.mxu0 0.0
      %2338 = vmatpush2.msra.mxu0 0.0
      %2339 = vmatprep.subr.mxu0 0.0
      %2340 = vmatpush2.msra.mxu0 0.0
      %2341 = vmatprep.subr.mxu0 0.0
      %2342 = vmatpush2.msra.mxu0 0.0
      %2343 = vmatprep.subr.mxu0 0.0
      %2344 = vmatpush2.msra.mxu0 0.0
      %2345 = vmatprep.subr.mxu0 0.0
      %2346 = vmatpush2.msra.mxu0 0.0
      %2347 = vmatprep.mubr.f32.mxu0 0.0
      %2348 = vmatmul.mubr.f32.gmra.mxu0 %v2278
      %v2349 = vpop.f32.mrf.mxu0
      %v2350 = vadd.f32 %v2269, %v2349
      %v2351 = vpop.f32.mrf.mxu0
      %v2352 = vadd.f32 %v2269, %v2351
      %2353 = vmatprep.mubr.f32.mxu0 0.0
      %2354 = vmatmul.mubr.f32.gmra.mxu0 %v2281
      %v2355 = vpop.f32.mrf.mxu0
      %v2356 = vadd.f32 %v2274, %v2355
      %v2357 = vpop.f32.mrf.mxu0
      %v2358 = vadd.f32 %v2274, %v2357
      %2359 = vdwg.mxu0
      %v2360 = vadd.f32 %v2350, %v2352
      %2361 = vadd.xlane.f32.xlu0 %v2360
      %v2362 = vpop.xlane.xlu0 %2361
      %v2363 = vadd.f32 %v2356, %v2358
      %2364 = vadd.xlane.f32.xlu0 %v2363
      %v2365 = vpop.xlane.xlu0 %2364
      %v2366 = vmul.f32 %v2362, 0.00390625
      %v2367 = vmul.f32 %v2365, 0.00390625
      %v2368 = vsub.f32 %v2350, %v2366
      %v2369 = vsub.f32 %v2352, %v2366
      %v2370 = vsub.f32 %v2356, %v2367
      %v2371 = vsub.f32 %v2358, %v2367
      %v2372 = vmul.f32 %v2368, %v2368
      %v2373 = vmul.f32 %v2369, %v2369
      %v2374 = vmul.f32 %v2370, %v2370
      %v2375 = vmul.f32 %v2371, %v2371
      %v2376 = vadd.f32 %v2372, %v2373
      %2377 = vadd.xlane.f32.xlu0 %v2376
      %v2378 = vpop.xlane.xlu0 %2377
      %v2379 = vadd.f32 %v2374, %v2375
      %2380 = vadd.xlane.f32.xlu0 %v2379
      %v2381 = vpop.xlane.xlu0 %2380
      %v2382 = vmul.f32 %v2378, 0.00390625
      %v2383 = vmul.f32 %v2381, 0.00390625
      %v2384 = vrsqrt.pop %v2382
      %v2385 = vmul.f32 %v2382, %v2384
      %vm2386 = vcmp.eq.f32.partialorder %v2382, inf
      %v2387 = vsel %vm2386, %v2382, %v2385
      %vm2388 = vcmp.eq.f32.partialorder %v2382, 0.0
      %v2389 = vand.u32 %v2382, 2147483648
      %v2390 = vsel %vm2388, %v2389, %v2387
      %v2391 = vrsqrt.pop %v2383
      %v2392 = vmul.f32 %v2383, %v2391
      %vm2393 = vcmp.eq.f32.partialorder %v2383, inf
      %v2394 = vsel %vm2393, %v2383, %v2392
      %vm2395 = vcmp.eq.f32.partialorder %v2383, 0.0
      %v2396 = vand.u32 %v2383, 2147483648
      %v2397 = vsel %vm2395, %v2396, %v2394
      %v2398 = vadd.f32 %v2390, %v2366
      %v2399 = vadd.f32 %v2397, %v2367
      %v2400 = vld [vmem:[%s19] sm:$0xff]
      %v2401 = vld [vmem:[%s19 + $0x8] sm:$0xff]
      %v2402 = vmul.f32 %v2400, %v2398
      %v2403 = vmul.f32 %v2401, %v2399
      %vm2404 = vcmask 7168
      %v2405 = vsel %vm2404, %v2402, 0.0
      %v2406 = vsel %vm2404, %v2403, 0.0
      %v2407 = vadd.f32 %v2405, %v2406
      %v2408 = vrot.slane %v2407, 4
      %v2409 = vadd.f32 %v2407, %v2408
      %v2410 = vrot.slane %v2409, 2
      %v2411 = vadd.f32 %v2409, %v2410
      %v2412 = vrot.slane %v2411, 1
      %v2413 = vadd.f32 %v2411, %v2412
      %v2414 = vld [vmem:[#allocation3] sm:$0x1]
      %v2415 = vadd.f32 %v2413, %v2414
      %v2416 = vmax.f32 %v2415, 0.0
      %v2417 = vld [vmem:[%s21] sm:$0xff]
      %v2418 = vld [vmem:[%s21 + $0x8] sm:$0xff]
      %v2419 = vlaneseq
      %v2420 = vshrl.u32 %v2419, 7
      %v2421 = vsub.s32 0, %v2420
      %v2422 = vrot.slane %v2416, %v2421
      %v2423 = vmul.f32 %v2417, %v2422
      %v2424 = vmul.f32 %v2418, %v2422
      %v2425 = vadd.f32 %v2423, 0.0
      %v2426 = vadd.f32 %v2424, 0.0
      %v2427 = vld [vmem:[%s22] sm:$0xff]
      %v2428 = vld [vmem:[%s22 + $0x8] sm:$0xff]
      %v2429 = vadd.f32 %v2425, %v2427
      %v2430 = vadd.f32 %v2426, %v2428
      %v2431 = vsub.f32 0.0, %v2429
      %v2432 = vsub.f32 0.0, %v2430
      %v2433 = vmul.f32 %v2431, 1.442695
      %v2434 = vpow.pop %v2433
      %v2435 = vmul.f32 %v2432, 1.442695
      %v2436 = vpow.pop %v2435
      %v2437 = vadd.f32 %v2434, 1.0
      %v2438 = vadd.f32 %v2436, 1.0
      %v2439 = vrcp.pop %v2437
      %v2440 = vmul.f32 1.0, %v2439
      %v2441 = vrcp.pop %v2438
      %v2442 = vmul.f32 1.0, %v2441
      %2444 = vset.pattern.permute.xlu0 0
      %2445 = vperm.xlu0 %2444, %v2440
      %v2446 = vpop.permute.xlu0 %2445
      %2449 = vset.pattern.permute.xlu0 0
      %2450 = vperm.xlu0 %2449, %v2442
      %v2451 = vpop.permute.xlu0 %2450
      %v2453 = vmul.f32 %v2350, %v2446
      %v2454 = vmul.f32 %v2352, %v2446
      %v2455 = vmul.f32 %v2356, %v2451
      %v2456 = vmul.f32 %v2358, %v2451
      %2457 = vst [vmem:[%s712] sm:$0xff] %v2453
      %2458 = vst [vmem:[%s712 + $0x8] sm:$0xff] %v2454
      %2459 = vst [vmem:[%s712 + $0x10] sm:$0xff] %v2455
      %2460 = vst [vmem:[%s712 + $0x18] sm:$0xff] %v2456
      %p2461 = scmp.lt.s32.totalorder %s36, 1
      %s2462 = scalar_select %p2461, %s36, 1
      %s2463 = smul.addr %s2462, 4
      %s2464 = smul.addr %s2463, 8
      %s2465 = scalar_lea.vmem %s23, %s2464
      // Predicated region
      $region113: #{rfdb3_forward.1} parent=111 // pred_check
        %p2466 = pneg %p542
      $region114: #{rfdb3_forward.1} parent=111 // pred_check_branch
        %2468 = sbr.rel (%p2466) target = $region116
      $region115: #{rfdb3_forward.1} parent=111 // pred_region
        _
      $region116: #{rfdb3_forward.1} parent=111 // pred_fallthru
        _
    $region112: #{rfdb3_forward.1} parent=5 // pred_fallthru
      _
    %p2469 = scmp.le.s32.totalorder 2, %s31
    // Predicated region
    $region117: #{rfdb3_forward.1} parent=5 // pred_check
      %p2470 = pneg %p2469
    $region118: #{rfdb3_forward.1} parent=5 // pred_check_branch
      %2472 = sbr.rel (%p2470) target = $region120
    $region119: #{rfdb3_forward.1} parent=5 // pred_region
      %s2473 = ssub.s32 %s31, 2
      // Predicated region
      $region121: #{rfdb3_forward.1} parent=119 // pred_check
        %p2474 = pneg %p548
      $region122: #{rfdb3_forward.1} parent=119 // pred_check_branch
        %2476 = sbr.rel (%p2474) target = $region124
      $region123: #{rfdb3_forward.1} parent=119 // pred_region
        %p2477 = scmp.lt.s32.totalorder %s37, 1
        %s2478 = scalar_select %p2477, %s37, 1
        %s2479 = smul.addr %s2478, 4
        %s2480 = smul.addr %s2479, 8
        %s2481 = scalar_lea.vmem %s23, %s2480
      $region124: #{rfdb3_forward.1} parent=119 // pred_fallthru
        _
    $region120: #{rfdb3_forward.1} parent=5 // pred_fallthru
      _
  $region6: #{rfdb3_forward.1} parent=0 // loop_footer
    %s35 = sadd.s32 1, %s31
  $region7: #{rfdb3_forward.1} parent=0 // loop_footer_branch
    %30 = sbr.rel target = $region3
  $region8: #{rfdb3_forward.1} parent=0 // loop_exit
    _

</llo_original>
